<compile_context>
chip_gen: v7x
topology: tpu7x:2x2x1
jax: 0.10.0
libtpu: 0.0.40
codegen_flags: <defaults>
</compile_context>

<pallas_src>
import math

import jax
import jax.numpy as jnp
from jax.experimental import pallas as pl
from jax.experimental.pallas import tpu as pltpu

MIN_NORM = 1e-15
EPS_F32 = 4e-3  # PoincareBall.eps[float32] in the reference implementation
VMEM_LIMIT_BYTES = 48 * 1024 * 1024  # leave headroom on v7x's 64 MiB VMEM


# ---------- Poincare-ball math helpers (work on jnp arrays; usable in & out of kernels) ----------

def _artanh(x):
    x = jnp.clip(x, -1.0 + 1e-15, 1.0 - 1e-15)
    return 0.5 * (jnp.log1p(x) - jnp.log1p(-x))


def _row_norm(x):
    return jnp.sqrt(jnp.sum(x * x, axis=-1, keepdims=True))


def _proj(x, c):
    norm = jnp.maximum(_row_norm(x), MIN_NORM)
    maxnorm = (1.0 - EPS_F32) / math.sqrt(c)
    return jnp.where(norm > maxnorm, x / norm * maxnorm, x)


def _expmap0_proj(u, c):
    """proj(expmap0(u, c), c) with a single row-norm reduction.

    ||expmap0(u)|| = tanh(sqrt_c * ||u||) / sqrt_c, so the proj clip reuses it.
    """
    sqrt_c = math.sqrt(c)
    u_norm = jnp.maximum(_row_norm(u), MIN_NORM)
    g = jnp.tanh(sqrt_c * u_norm)                     # = sqrt_c * ||expmap0(u)||
    y = g * u / (sqrt_c * u_norm)
    maxnorm = (1.0 - EPS_F32) / sqrt_c
    y_clipped = u / u_norm * maxnorm                  # same direction, clipped radius
    return jnp.where(g / sqrt_c > maxnorm, y_clipped, y)


def _logmap0(p, c):
    sqrt_c = math.sqrt(c)
    p_norm = jnp.maximum(_row_norm(p), MIN_NORM)
    return (1.0 / sqrt_c) * _artanh(sqrt_c * p_norm) / p_norm * p


def _proj_logmap0(p, c):
    """logmap0(proj(p, c), c) with a single row-norm reduction."""
    sqrt_c = math.sqrt(c)
    maxnorm = (1.0 - EPS_F32) / sqrt_c
    norm = jnp.maximum(_row_norm(p), MIN_NORM)
    cond = norm > maxnorm
    p_proj = jnp.where(cond, p / norm * maxnorm, p)
    p_norm = jnp.where(cond, maxnorm, norm)
    return _artanh(sqrt_c * p_norm) / (sqrt_c * p_norm) * p_proj


def _mobius_add(x, y, c):
    x2 = jnp.sum(x * x, axis=-1, keepdims=True)
    y2 = jnp.sum(y * y, axis=-1, keepdims=True)
    xy = jnp.sum(x * y, axis=-1, keepdims=True)
    num = (1.0 + 2.0 * c * xy + c * y2) * x + (1.0 - c * x2) * y
    denom = 1.0 + 2.0 * c * xy + (c ** 2) * x2 * y2
    return num / jnp.maximum(denom, MIN_NORM)


def _mobius_matvec_t(x, wt, c):
    """mobius_matvec with pre-transposed weight wt = W.T (F_in, F_out).

    Single squared-sum reduction over mx (reused for both the norm and the zero-row guard).
    """
    sqrt_c = math.sqrt(c)
    x_norm = jnp.maximum(_row_norm(x), MIN_NORM)
    mx = jnp.dot(x, wt, preferred_element_type=jnp.float32)      # MXU matmul, no in-kernel transpose
    mx_sq = jnp.sum(mx * mx, axis=-1, keepdims=True)
    mx_norm = jnp.maximum(jnp.sqrt(mx_sq), MIN_NORM)
    res_c = jnp.tanh(mx_norm / x_norm * _artanh(sqrt_c * x_norm)) * mx / (mx_norm * sqrt_c)
    return jnp.where(mx_sq == 0.0, 0.0, res_c)                   # all-zero row guard


# ---------- Stage 1: HypLinear + logmap0 (tiled over node rows) ----------

def make_linear_tangent_kernel(c_in):
    def kernel(x_ref, wt_ref, hb_ref, xt_ref):
        x = x_ref[...]            # (TILE_M, F_in)  f32
        wt = wt_ref[...]          # (F_in, F_out)   f32, resident
        hb = hb_ref[...]          # (1, F_out)      f32, pre-computed hyperbolic bias

        res = _mobius_matvec_t(x, wt, c_in)
        res = _proj(res, c_in)
        res = _mobius_add(res, hb, c_in)          # bias already exp-mapped + projected
        xt = _proj_logmap0(res, c_in)             # fused proj + logmap0 (one reduction)
        xt_ref[...] = xt.astype(xt_ref.dtype)     # bf16 tangent for the aggregation matmul

    return kernel


# ---------- Stage 2: HypAgg (adj @ x_tangent, K-accumulated) + HypAct ----------

def make_agg_act_kernel(c_in, c_out, tile_k):
    def kernel(xt_ref, adj_ref, out_ref, acc_ref):
        k = pl.program_id(1)

        @pl.when(k == 0)
        def _():
            acc_ref[...] = jnp.zeros_like(acc_ref)

        k_off = pl.multiple_of(k * tile_k, tile_k)
        xt_blk = xt_ref[pl.ds(k_off, tile_k), :]          # resident bf16 x_tangent slice
        acc_ref[...] += jnp.dot(adj_ref[...], xt_blk,     # bf16 x bf16 -> f32 accumulate
                                preferred_element_type=jnp.float32)

        @pl.when(k == pl.num_programs(1) - 1)
        def _():
            support_t = acc_ref[...]                      # (TILE_M, F_out) f32
            h = _expmap0_proj(support_t, c_in)            # HypAgg tail
            xt = jnp.maximum(_logmap0(h, c_in), 0.0)      # HypAct: relu(logmap0); proj_tan0 = id
            out_ref[...] = _expmap0_proj(xt, c_out).astype(out_ref.dtype)

    return kernel


# ---------- Wrapper ----------

def _round_up(a, m):
    return ((a + m - 1) // m) * m


def hyperbolic_graph_convolution(x, adj, weight, bias, c_in=1.0, c_out=1.0,
                                 tile_m=256, tile_k=256):
    """Returns (h, adj) like the PyTorch module's forward (dropout = identity / eval mode)."""
    c_in = float(c_in)
    c_out = float(c_out)
    n, f_in = x.shape
    f_out = weight.shape[0]

    # Pad the node dimension to a tile multiple. Padded adj rows/cols are zero, so
    # padded nodes never influence real rows; padded output rows are sliced away.
    n_pad = _round_up(n, max(tile_m, tile_k))
    tile_m = min(tile_m, n_pad)
    tile_k = min(tile_k, n_pad)

    x_p = jnp.zeros((n_pad, f_in), jnp.float32).at[:n, :].set(x.astype(jnp.float32))
    adj_p = jnp.zeros((n_pad, n_pad), jnp.float32).at[:n, :n].set(adj.astype(jnp.float32))

    # Node-independent pre-compute in plain XLA (hoisted out of the gridded kernels):
    wt = jnp.transpose(weight.astype(jnp.float32))                 # (F_in, F_out)
    hyp_bias = _expmap0_proj(bias.astype(jnp.float32), c_in)       # proj(expmap0(b, c_in), c_in)

    # --- Stage 1: HypLinear + logmap0 -> x_tangent (bf16) ---
    xt = pl.pallas_call(
        make_linear_tangent_kernel(c_in),
        out_shape=jax.ShapeDtypeStruct((n_pad, f_out), jnp.bfloat16),
        grid_spec=pltpu.PrefetchScalarGridSpec(
            num_scalar_prefetch=0,
            grid=(n_pad // tile_m,),
            in_specs=[
                pl.BlockSpec((tile_m, f_in), lambda i: (i, 0)),    # streamed node rows
                pl.BlockSpec((f_in, f_out), lambda i: (0, 0)),     # resident W^T
                pl.BlockSpec((1, f_out), lambda i: (0, 0)),        # resident hyperbolic bias
            ],
            out_specs=pl.BlockSpec((tile_m, f_out), lambda i: (i, 0)),
        ),
        compiler_params=pltpu.CompilerParams(
            dimension_semantics=("parallel",),
            vmem_limit_bytes=VMEM_LIMIT_BYTES,
        ),
    )(x_p, wt, hyp_bias)

    # --- Stage 2: HypAgg (adj @ x_tangent accumulated over K) + HypAct ---
    adj_bf16 = adj_p.astype(jnp.bfloat16)   # adj dominates HBM traffic; f32 accumulation on MXU
    h_pad = pl.pallas_call(
        make_agg_act_kernel(c_in, c_out, tile_k),
        out_shape=jax.ShapeDtypeStruct((n_pad, f_out), jnp.float32),
        grid_spec=pltpu.PrefetchScalarGridSpec(
            num_scalar_prefetch=0,
            grid=(n_pad // tile_m, n_pad // tile_k),
            in_specs=[
                pl.BlockSpec((n_pad, f_out), lambda i, k: (0, 0)),      # x_tangent: fully resident
                pl.BlockSpec((tile_m, tile_k), lambda i, k: (i, k)),    # adj: streamed bf16 tiles
            ],
            out_specs=pl.BlockSpec((tile_m, f_out), lambda i, k: (i, 0)),
            scratch_shapes=[pltpu.VMEM((tile_m, f_out), jnp.float32)],  # f32 accumulator
        ),
        compiler_params=pltpu.CompilerParams(
            dimension_semantics=("parallel", "arbitrary"),
            vmem_limit_bytes=VMEM_LIMIT_BYTES,
        ),
    )(xt, adj_bf16)

    return h_pad[:n], adj


# ---------- Example ----------

if __name__ == "__main__":
    N, F_IN, F_OUT = 512, 32, 32
    C_IN, C_OUT = 1.0, 1.0

    key = jax.random.PRNGKey(0)
    k1, k2, k3, k4 = jax.random.split(key, 4)

    # Hyperbolic input points: exp-map small tangent vectors onto the Poincare ball (glue).
    u = 0.1 * jax.random.normal(k1, (N, F_IN), dtype=jnp.float32)
    un = jnp.maximum(jnp.sqrt(jnp.sum(u * u, axis=-1, keepdims=True)), MIN_NORM)
    x = jnp.tanh(math.sqrt(C_IN) * un) * u / (math.sqrt(C_IN) * un)

    # Row-normalized dense adjacency with self-loops (torch.spmm replaced by dense matmul).
    a = (jax.random.uniform(k2, (N, N)) < 0.05).astype(jnp.float32) + jnp.eye(N, dtype=jnp.float32)
    adj = a / jnp.sum(a, axis=-1, keepdims=True)

    # HypLinear params: xavier_uniform(gain=sqrt(2)) weight of shape (out_features, in_features).
    limit = math.sqrt(2.0) * math.sqrt(6.0 / (F_IN + F_OUT))
    weight = jax.random.uniform(k3, (F_OUT, F_IN), minval=-limit, maxval=limit, dtype=jnp.float32)
    # Reference inits bias to 0; use a small deterministic bias so the mobius_add path is exercised.
    bias = 0.01 * jax.random.normal(k4, (1, F_OUT), dtype=jnp.float32)

    h, adj_out = hyperbolic_graph_convolution(x, adj, weight, bias, C_IN, C_OUT)
    jax.block_until_ready(h)
    assert h.shape == (N, F_OUT) and bool(jnp.all(jnp.isfinite(h)))
    print("KERNEL_OK")
</pallas_src>

<mosaic_0001>
module attributes {stable_mosaic.version = 11 : i64} {
  func.func @kernel(%arg0: i32, %arg1: memref<256x32xf32, #tpu.memory_space<vmem>>, %arg2: memref<32x32xf32, #tpu.memory_space<vmem>>, %arg3: memref<1x32xf32, #tpu.memory_space<vmem>>, %arg4: memref<256x32xbf16, #tpu.memory_space<vmem>>) attributes {dimension_semantics = [#tpu.dimension_semantics<parallel>], iteration_bounds = array<i64: 2>, scalar_prefetch = 0 : i64, scratch_operands = 0 : i64, tpu.core_type = #tpu.core_type<tc>, window_params = [{transform_indices = @transform_0, window_bounds = array<i64: 256, 32>}, {pipeline_mode = #tpu.pipeline_mode<synchronous>, transform_indices = @transform_1, window_bounds = array<i64: 32, 32>}, {pipeline_mode = #tpu.pipeline_mode<synchronous>, transform_indices = @transform_2, window_bounds = array<i64: 1, 32>}, {transform_indices = @transform_3, window_bounds = array<i64: 256, 32>}]} {
    %c0 = arith.constant 0 : index
    %c0_0 = arith.constant 0 : index
    %0 = vector.load %arg1[%c0, %c0_0] : memref<256x32xf32, #tpu.memory_space<vmem>>, vector<256x32xf32>
    %c0_1 = arith.constant 0 : index
    %c0_2 = arith.constant 0 : index
    %1 = vector.load %arg2[%c0_1, %c0_2] : memref<32x32xf32, #tpu.memory_space<vmem>>, vector<32x32xf32>
    %c0_3 = arith.constant 0 : index
    %c0_4 = arith.constant 0 : index
    %2 = vector.load %arg3[%c0_3, %c0_4] : memref<1x32xf32, #tpu.memory_space<vmem>>, vector<1x32xf32>
    %3 = arith.mulf %0, %0 : vector<256x32xf32>
    %cst = arith.constant dense<0.000000e+00> : vector<256xf32>
    %4 = vector.multi_reduction <add>, %3, %cst [1] : vector<256x32xf32> to vector<256xf32>
    %5 = vector.shape_cast %4 : vector<256xf32> to vector<256x1xf32>
    %6 = math.sqrt %5 : vector<256x1xf32>
    %cst_5 = arith.constant 1.000000e-15 : f32
    %7 = vector.broadcast %cst_5 : f32 to vector<256x1xf32>
    %8 = arith.maximumf %6, %7 : vector<256x1xf32>
    %cst_6 = arith.constant dense<0.000000e+00> : vector<256x32xf32>
    %9 = tpu.matmul %0, %1, %cst_6 {dimension_numbers = #tpu.dot_dimension_numbers<[1], [0], [0], [1], [0, 0, 1, 1], [], []>} : vector<256x32xf32>, vector<32x32xf32>, vector<256x32xf32> -> vector<256x32xf32>
    %10 = arith.mulf %9, %9 : vector<256x32xf32>
    %cst_7 = arith.constant dense<0.000000e+00> : vector<256xf32>
    %11 = vector.multi_reduction <add>, %10, %cst_7 [1] : vector<256x32xf32> to vector<256xf32>
    %12 = vector.shape_cast %11 : vector<256xf32> to vector<256x1xf32>
    %13 = math.sqrt %12 : vector<256x1xf32>
    %cst_8 = arith.constant 1.000000e-15 : f32
    %14 = vector.broadcast %cst_8 : f32 to vector<256x1xf32>
    %15 = arith.maximumf %13, %14 : vector<256x1xf32>
    %16 = arith.divf %15, %8 : vector<256x1xf32>
    %cst_9 = arith.constant 1.000000e+00 : f32
    %17 = vector.broadcast %cst_9 : f32 to vector<256x1xf32>
    %18 = arith.mulf %17, %8 : vector<256x1xf32>
    %cst_10 = arith.constant -1.000000e+00 : f32
    %cst_11 = arith.constant 1.000000e+00 : f32
    %19 = vector.broadcast %cst_10 : f32 to vector<256x1xf32>
    %20 = arith.maximumf %19, %18 : vector<256x1xf32>
    %21 = vector.broadcast %cst_11 : f32 to vector<256x1xf32>
    %22 = arith.minimumf %21, %20 : vector<256x1xf32>
    %23 = math.log1p %22 : vector<256x1xf32>
    %cst_12 = arith.constant 0.000000e+00 : f32
    %24 = vector.broadcast %cst_12 : f32 to vector<256x1xf32>
    %25 = arith.subf %24, %22 : vector<256x1xf32>
    %26 = math.log1p %25 : vector<256x1xf32>
    %27 = arith.subf %23, %26 : vector<256x1xf32>
    %cst_13 = arith.constant 5.000000e-01 : f32
    %28 = vector.broadcast %cst_13 : f32 to vector<256x1xf32>
    %29 = arith.mulf %28, %27 : vector<256x1xf32>
    %30 = arith.mulf %16, %29 : vector<256x1xf32>
    %31 = math.tanh %30 : vector<256x1xf32>
    %32 = vector.broadcast %31 : vector<256x1xf32> to vector<256x32xf32>
    %33 = arith.mulf %32, %9 : vector<256x32xf32>
    %cst_14 = arith.constant 1.000000e+00 : f32
    %34 = vector.broadcast %cst_14 : f32 to vector<256x1xf32>
    %35 = arith.mulf %15, %34 : vector<256x1xf32>
    %36 = vector.broadcast %35 : vector<256x1xf32> to vector<256x32xf32>
    %37 = arith.divf %33, %36 : vector<256x32xf32>
    %cst_15 = arith.constant 0.000000e+00 : f32
    %38 = vector.broadcast %cst_15 : f32 to vector<256x1xf32>
    %39 = arith.cmpf oeq, %12, %38 : vector<256x1xf32>
    %cst_16 = arith.constant 0.000000e+00 : f32
    %40 = vector.shape_cast %39 : vector<256x1xi1> to vector<256x1xi1>
    %41 = vector.broadcast %40 : vector<256x1xi1> to vector<256x32xi1>
    %42 = vector.broadcast %cst_16 : f32 to vector<256x32xf32>
    %43 = arith.select %41, %42, %37 : vector<256x32xi1>, vector<256x32xf32>
    %44 = arith.mulf %43, %43 : vector<256x32xf32>
    %cst_17 = arith.constant dense<0.000000e+00> : vector<256xf32>
    %45 = vector.multi_reduction <add>, %44, %cst_17 [1] : vector<256x32xf32> to vector<256xf32>
    %46 = vector.shape_cast %45 : vector<256xf32> to vector<256x1xf32>
    %47 = math.sqrt %46 : vector<256x1xf32>
    %cst_18 = arith.constant 1.000000e-15 : f32
    %48 = vector.broadcast %cst_18 : f32 to vector<256x1xf32>
    %49 = arith.maximumf %47, %48 : vector<256x1xf32>
    %cst_19 = arith.constant 0.995999991 : f32
    %50 = vector.broadcast %cst_19 : f32 to vector<256x1xf32>
    %51 = arith.cmpf ogt, %49, %50 : vector<256x1xf32>
    %52 = vector.broadcast %49 : vector<256x1xf32> to vector<256x32xf32>
    %53 = arith.divf %43, %52 : vector<256x32xf32>
    %cst_20 = arith.constant 0.995999991 : f32
    %54 = vector.broadcast %cst_20 : f32 to vector<256x32xf32>
    %55 = arith.mulf %53, %54 : vector<256x32xf32>
    %56 = vector.shape_cast %51 : vector<256x1xi1> to vector<256x1xi1>
    %57 = vector.broadcast %56 : vector<256x1xi1> to vector<256x32xi1>
    %58 = arith.select %57, %55, %43 : vector<256x32xi1>, vector<256x32xf32>
    %59 = arith.mulf %58, %58 : vector<256x32xf32>
    %cst_21 = arith.constant dense<0.000000e+00> : vector<256xf32>
    %60 = vector.multi_reduction <add>, %59, %cst_21 [1] : vector<256x32xf32> to vector<256xf32>
    %61 = vector.shape_cast %60 : vector<256xf32> to vector<256x1xf32>
    %62 = arith.mulf %2, %2 : vector<1x32xf32>
    %cst_22 = arith.constant dense<0.000000e+00> : vector<1xf32>
    %63 = vector.multi_reduction <add>, %62, %cst_22 [1] : vector<1x32xf32> to vector<1xf32>
    %64 = vector.shape_cast %63 : vector<1xf32> to vector<1x1xf32>
    %65 = vector.broadcast %2 : vector<1x32xf32> to vector<256x32xf32>
    %66 = arith.mulf %58, %65 : vector<256x32xf32>
    %cst_23 = arith.constant dense<0.000000e+00> : vector<256xf32>
    %67 = vector.multi_reduction <add>, %66, %cst_23 [1] : vector<256x32xf32> to vector<256xf32>
    %68 = vector.shape_cast %67 : vector<256xf32> to vector<256x1xf32>
    %cst_24 = arith.constant 2.000000e+00 : f32
    %69 = vector.broadcast %cst_24 : f32 to vector<256x1xf32>
    %70 = arith.mulf %69, %68 : vector<256x1xf32>
    %cst_25 = arith.constant 1.000000e+00 : f32
    %71 = vector.broadcast %cst_25 : f32 to vector<256x1xf32>
    %72 = arith.addf %71, %70 : vector<256x1xf32>
    %cst_26 = arith.constant 1.000000e+00 : f32
    %73 = vector.broadcast %cst_26 : f32 to vector<1x1xf32>
    %74 = arith.mulf %73, %64 : vector<1x1xf32>
    %75 = vector.broadcast %74 : vector<1x1xf32> to vector<256x1xf32>
    %76 = arith.addf %72, %75 : vector<256x1xf32>
    %77 = vector.broadcast %76 : vector<256x1xf32> to vector<256x32xf32>
    %78 = arith.mulf %77, %58 : vector<256x32xf32>
    %cst_27 = arith.constant 1.000000e+00 : f32
    %79 = vector.broadcast %cst_27 : f32 to vector<256x1xf32>
    %80 = arith.mulf %79, %61 : vector<256x1xf32>
    %cst_28 = arith.constant 1.000000e+00 : f32
    %81 = vector.broadcast %cst_28 : f32 to vector<256x1xf32>
    %82 = arith.subf %81, %80 : vector<256x1xf32>
    %83 = vector.broadcast %82 : vector<256x1xf32> to vector<256x32xf32>
    %84 = vector.broadcast %2 : vector<1x32xf32> to vector<256x32xf32>
    %85 = arith.mulf %83, %84 : vector<256x32xf32>
    %86 = arith.addf %78, %85 : vector<256x32xf32>
    %cst_29 = arith.constant 2.000000e+00 : f32
    %87 = vector.broadcast %cst_29 : f32 to vector<256x1xf32>
    %88 = arith.mulf %87, %68 : vector<256x1xf32>
    %cst_30 = arith.constant 1.000000e+00 : f32
    %89 = vector.broadcast %cst_30 : f32 to vector<256x1xf32>
    %90 = arith.addf %89, %88 : vector<256x1xf32>
    %cst_31 = arith.constant 1.000000e+00 : f32
    %91 = vector.broadcast %cst_31 : f32 to vector<256x1xf32>
    %92 = arith.mulf %91, %61 : vector<256x1xf32>
    %93 = vector.broadcast %64 : vector<1x1xf32> to vector<256x1xf32>
    %94 = arith.mulf %92, %93 : vector<256x1xf32>
    %95 = arith.addf %90, %94 : vector<256x1xf32>
    %cst_32 = arith.constant 1.000000e-15 : f32
    %96 = vector.broadcast %cst_32 : f32 to vector<256x1xf32>
    %97 = arith.maximumf %95, %96 : vector<256x1xf32>
    %98 = vector.broadcast %97 : vector<256x1xf32> to vector<256x32xf32>
    %99 = arith.divf %86, %98 : vector<256x32xf32>
    %100 = arith.mulf %99, %99 : vector<256x32xf32>
    %cst_33 = arith.constant dense<0.000000e+00> : vector<256xf32>
    %101 = vector.multi_reduction <add>, %100, %cst_33 [1] : vector<256x32xf32> to vector<256xf32>
    %102 = vector.shape_cast %101 : vector<256xf32> to vector<256x1xf32>
    %103 = math.sqrt %102 : vector<256x1xf32>
    %cst_34 = arith.constant 1.000000e-15 : f32
    %104 = vector.broadcast %cst_34 : f32 to vector<256x1xf32>
    %105 = arith.maximumf %103, %104 : vector<256x1xf32>
    %cst_35 = arith.constant 0.995999991 : f32
    %106 = vector.broadcast %cst_35 : f32 to vector<256x1xf32>
    %107 = arith.cmpf ogt, %105, %106 : vector<256x1xf32>
    %108 = vector.broadcast %105 : vector<256x1xf32> to vector<256x32xf32>
    %109 = arith.divf %99, %108 : vector<256x32xf32>
    %cst_36 = arith.constant 0.995999991 : f32
    %110 = vector.broadcast %cst_36 : f32 to vector<256x32xf32>
    %111 = arith.mulf %109, %110 : vector<256x32xf32>
    %112 = vector.shape_cast %107 : vector<256x1xi1> to vector<256x1xi1>
    %113 = vector.broadcast %112 : vector<256x1xi1> to vector<256x32xi1>
    %114 = arith.select %113, %111, %99 : vector<256x32xi1>, vector<256x32xf32>
    %cst_37 = arith.constant 0.995999991 : f32
    %115 = vector.broadcast %cst_37 : f32 to vector<256x1xf32>
    %116 = arith.select %107, %115, %105 : vector<256x1xi1>, vector<256x1xf32>
    %cst_38 = arith.constant 1.000000e+00 : f32
    %117 = vector.broadcast %cst_38 : f32 to vector<256x1xf32>
    %118 = arith.mulf %117, %116 : vector<256x1xf32>
    %cst_39 = arith.constant -1.000000e+00 : f32
    %cst_40 = arith.constant 1.000000e+00 : f32
    %119 = vector.broadcast %cst_39 : f32 to vector<256x1xf32>
    %120 = arith.maximumf %119, %118 : vector<256x1xf32>
    %121 = vector.broadcast %cst_40 : f32 to vector<256x1xf32>
    %122 = arith.minimumf %121, %120 : vector<256x1xf32>
    %123 = math.log1p %122 : vector<256x1xf32>
    %cst_41 = arith.constant 0.000000e+00 : f32
    %124 = vector.broadcast %cst_41 : f32 to vector<256x1xf32>
    %125 = arith.subf %124, %122 : vector<256x1xf32>
    %126 = math.log1p %125 : vector<256x1xf32>
    %127 = arith.subf %123, %126 : vector<256x1xf32>
    %cst_42 = arith.constant 5.000000e-01 : f32
    %128 = vector.broadcast %cst_42 : f32 to vector<256x1xf32>
    %129 = arith.mulf %128, %127 : vector<256x1xf32>
    %cst_43 = arith.constant 1.000000e+00 : f32
    %130 = vector.broadcast %cst_43 : f32 to vector<256x1xf32>
    %131 = arith.mulf %130, %116 : vector<256x1xf32>
    %132 = arith.divf %129, %131 : vector<256x1xf32>
    %133 = vector.broadcast %132 : vector<256x1xf32> to vector<256x32xf32>
    %134 = arith.mulf %133, %114 : vector<256x32xf32>
    %135 = arith.truncf %134 : vector<256x32xf32> to vector<256x32xbf16>
    %c0_44 = arith.constant 0 : index
    %c0_45 = arith.constant 0 : index
    %136 = vector.load %arg4[%c0_44, %c0_45] : memref<256x32xbf16, #tpu.memory_space<vmem>>, vector<256x32xbf16>
    tpu.vector_store %arg4[%c0_44, %c0_45], %135 {strides = array<i32>} : memref<256x32xbf16, #tpu.memory_space<vmem>>, vector<256x32xbf16>,
    return
  }
  func.func @transform_0(%arg0: i32) -> (i32, i32) {
    %c0_i32 = arith.constant 0 : i32
    %c0_i32_0 = arith.constant 0 : i32
    return %arg0, %c0_i32 : i32, i32
  }
  func.func @transform_1(%arg0: i32) -> (i32, i32) {
    %c0_i32 = arith.constant 0 : i32
    %c0_i32_0 = arith.constant 0 : i32
    %c0_i32_1 = arith.constant 0 : i32
    return %c0_i32, %c0_i32_0 : i32, i32
  }
  func.func @transform_2(%arg0: i32) -> (i32, i32) {
    %c0_i32 = arith.constant 0 : i32
    %c0_i32_0 = arith.constant 0 : i32
    %c0_i32_1 = arith.constant 0 : i32
    return %c0_i32, %c0_i32_0 : i32, i32
  }
  func.func @transform_3(%arg0: i32) -> (i32, i32) {
    %c0_i32 = arith.constant 0 : i32
    %c0_i32_0 = arith.constant 0 : i32
    return %arg0, %c0_i32 : i32, i32
  }
}

</mosaic_0001>

<llo_original>
// kernel: tpu_custom_call.1
$region0: #{tpu_custom_call.1}
  #allocation0 [shape = 'u32[]', space=smem, size = 0x4, offset = 0x4, fixed_abs, tag = 'smem constant byte address 0x4 - core index']
  #allocation1 [shape = 'u32[144,128]{1,0:T(1,128)}', space=vmem, size = 0x12000, scoped, tag = 'internal scratch']
  %s0 = inlined_call_operand.vmem [shape: f32[512,32], index: 0, kind: input, shape index: {}]
  %s1 = inlined_call_operand.vmem [shape: f32[32,32], index: 1, kind: input, shape index: {}]
  %s2 = inlined_call_operand.vmem [shape: f32[1,32], index: 2, kind: input, shape index: {}]
  %s3 = inlined_call_operand.vmem [shape: bf16[512,32], index: 3, kind: output, shape index: {}]
  %s4 = sld [smem:[#allocation0]]
  $region45: #{tpu_custom_call.1} parent=0
    _
  %s6 = ssub.s32 1, %s4
  %s7 = scalar_select 0, %s6, %s4
  loop: start=0, step=1, limit=4
  $region2: #{tpu_custom_call.1} parent=0 // loop_pre_header
    _
  $region3: #{tpu_custom_call.1} parent=0 // loop_header
    %s9 = sphi 0, %s13
    %p10 = scmp.ge.s32.totalorder %s9, 4
    %s19 = sphi 0, %s21
    %s22 = sphi 0, %s19
    %s23 = sphi 0, %s22
    %s39 = sphi 0, %s23
    %s43 = sphi 0, %s43
    %s45 = sphi 0, %s43
    %s46 = sphi 0, %s45
    %s60 = sphi 0, %s46
    %s64 = sphi 0, %s64
    %s66 = sphi 0, %s64
    %s67 = sphi 0, %s66
    %s81 = sphi 0, %s67
    %s87 = sphi 0, %s89
    %s90 = sphi 0, %s87
    %s91 = sphi 0, %s90
    %s107 = sphi 0, %s91
  $region4: #{tpu_custom_call.1} parent=0 // loop_header_branch
    %12 = sbr.rel (%p10) target = $region8
  $region5: #{tpu_custom_call.1} parent=0 // loop_body
    %s14 = ssub.s32 %s9, 1
    %s15 = ssub.s32 %s9, 2
    %s16 = sadd.s32 %s9, 1
    %s17 = ssub.s32 %s9, %s16
    %p18 = scmp.eq.s32.totalorder %s17, 0
    %s20 = sadd.s32 %s19, 1
    %s21 = scalar_select %p18, %s19, %s20
    %p24 = pneg %p18
    %p25 = scmp.eq.s32.totalorder %s9, 1
    %p26 = por %p24, %p25
    %p27 = scmp.ne.s32.totalorder %s19, %s22
    %p28 = scmp.eq.s32.totalorder %s9, 0
    %p29 = por %p27, %p28
    %p30 = scmp.ne.s32.totalorder %s19, %s22
    %p31 = scmp.eq.s32.totalorder %s14, 1
    %p32 = por %p30, %p31
    %p33 = scmp.ne.s32.totalorder %s22, %s23
    %p34 = scmp.eq.s32.totalorder %s14, 0
    %p35 = por %p33, %p34
    %p36 = scmp.ne.s32.totalorder %s22, %s23
    %p37 = scmp.eq.s32.totalorder %s15, 1
    %p38 = por %p36, %p37
    %p40 = scmp.ne.s32.totalorder %s23, %s39
    %p41 = scmp.eq.s32.totalorder %s15, 0
    %p42 = por %p40, %p41
    %s44 = sadd.s32 %s43, 1
    %p47 = scmp.eq.s32.totalorder %s9, 1
    %p48 = scmp.ne.s32.totalorder %s43, %s45
    %p49 = scmp.eq.s32.totalorder %s9, 0
    %p50 = por %p48, %p49
    %p51 = scmp.ne.s32.totalorder %s43, %s45
    %p52 = scmp.eq.s32.totalorder %s14, 1
    %p53 = por %p51, %p52
    %p54 = scmp.ne.s32.totalorder %s45, %s46
    %p55 = scmp.eq.s32.totalorder %s14, 0
    %p56 = por %p54, %p55
    %p57 = scmp.ne.s32.totalorder %s45, %s46
    %p58 = scmp.eq.s32.totalorder %s15, 1
    %p59 = por %p57, %p58
    %p61 = scmp.ne.s32.totalorder %s46, %s60
    %p62 = scmp.eq.s32.totalorder %s15, 0
    %p63 = por %p61, %p62
    %s65 = sadd.s32 %s64, 1
    %p68 = scmp.eq.s32.totalorder %s9, 1
    %p69 = scmp.ne.s32.totalorder %s64, %s66
    %p70 = scmp.eq.s32.totalorder %s9, 0
    %p71 = por %p69, %p70
    %p72 = scmp.ne.s32.totalorder %s64, %s66
    %p73 = scmp.eq.s32.totalorder %s14, 1
    %p74 = por %p72, %p73
    %p75 = scmp.ne.s32.totalorder %s66, %s67
    %p76 = scmp.eq.s32.totalorder %s14, 0
    %p77 = por %p75, %p76
    %p78 = scmp.ne.s32.totalorder %s66, %s67
    %p79 = scmp.eq.s32.totalorder %s15, 1
    %p80 = por %p78, %p79
    %p82 = scmp.ne.s32.totalorder %s67, %s81
    %p83 = scmp.eq.s32.totalorder %s15, 0
    %p84 = por %p82, %p83
    %s85 = ssub.s32 %s9, %s16
    %p86 = scmp.eq.s32.totalorder %s85, 0
    %s88 = sadd.s32 %s87, 1
    %s89 = scalar_select %p86, %s87, %s88
    %p92 = pneg %p86
    %p93 = scmp.eq.s32.totalorder %s9, 1
    %p94 = por %p92, %p93
    %p95 = scmp.ne.s32.totalorder %s87, %s90
    %p96 = scmp.eq.s32.totalorder %s9, 0
    %p97 = por %p95, %p96
    %p98 = scmp.ne.s32.totalorder %s87, %s90
    %p99 = scmp.eq.s32.totalorder %s14, 1
    %p100 = por %p98, %p99
    %p101 = scmp.ne.s32.totalorder %s90, %s91
    %p102 = scmp.eq.s32.totalorder %s14, 0
    %p103 = por %p101, %p102
    %p104 = scmp.ne.s32.totalorder %s90, %s91
    %p105 = scmp.eq.s32.totalorder %s15, 1
    %p106 = por %p104, %p105
    %p108 = scmp.ne.s32.totalorder %s91, %s107
    %p109 = scmp.eq.s32.totalorder %s15, 0
    %p110 = por %p108, %p109
    %p111 = scmp.le.s32.totalorder 1, %s9
    %p112 = scmp.lt.s32.totalorder %s9, 3
    %p113 = pnand %p111, %p112
    %p114 = pneg %p113
    // Predicated region
    $region9: #{tpu_custom_call.1} parent=5 // pred_check
      _
    $region10: #{tpu_custom_call.1} parent=5 // pred_check_branch
      %116 = sbr.rel (%p113) target = $region12
    $region11: #{tpu_custom_call.1} parent=5 // pred_region
      %s117 = ssub.s32 %s9, 1
      // Predicated region
      $region13: #{tpu_custom_call.1} parent=11 // pred_check
        %p118 = pneg %p56
      $region14: #{tpu_custom_call.1} parent=11 // pred_check_branch
        %120 = sbr.rel (%p118) target = $region16
      $region15: #{tpu_custom_call.1} parent=11 // pred_region
        _
      $region16: #{tpu_custom_call.1} parent=11 // pred_fallthru
        _
      // Predicated region
      $region17: #{tpu_custom_call.1} parent=11 // pred_check
        %p121 = pneg %p77
      $region18: #{tpu_custom_call.1} parent=11 // pred_check_branch
        %123 = sbr.rel (%p121) target = $region20
      $region19: #{tpu_custom_call.1} parent=11 // pred_region
        _
      $region20: #{tpu_custom_call.1} parent=11 // pred_fallthru
        _
    $region12: #{tpu_custom_call.1} parent=5 // pred_fallthru
      _
    %p124 = scmp.lt.s32.totalorder %s9, 2
    // Predicated region
    $region21: #{tpu_custom_call.1} parent=5 // pred_check
      %p125 = pneg %p124
    $region22: #{tpu_custom_call.1} parent=5 // pred_check_branch
      %127 = sbr.rel (%p125) target = $region24
    $region23: #{tpu_custom_call.1} parent=5 // pred_region
      // Predicated region
      $region25: #{tpu_custom_call.1} parent=23 // pred_check
        %p128 = pneg %p29
      $region26: #{tpu_custom_call.1} parent=23 // pred_check_branch
        %130 = sbr.rel (%p128) target = $region28
      $region27: #{tpu_custom_call.1} parent=23 // pred_region
        %s131 = smul.u32 32, %s9
        %p132 = scmp.lt.s32.totalorder %s131, 63
        %s133 = scalar_select %p132, %s131, 63
        %s134 = smul.addr %s133, 8
        %s135 = scalar_lea.vmem %s0, %s134
        %s136 = smul.u32 32, %s9
      $region28: #{tpu_custom_call.1} parent=23 // pred_fallthru
        _
    $region24: #{tpu_custom_call.1} parent=5 // pred_fallthru
      _
    %p137 = scmp.le.s32.totalorder 1, %s9
    %p138 = scmp.lt.s32.totalorder %s9, 3
    %p139 = pnand %p137, %p138
    %p140 = pneg %p139
    // Predicated region
    $region29: #{tpu_custom_call.1} parent=5 // pred_check
      _
    $region30: #{tpu_custom_call.1} parent=5 // pred_check_branch
      %142 = sbr.rel (%p139) target = $region32
    $region31: #{tpu_custom_call.1} parent=5 // pred_region
      %s143 = ssub.s32 %s9, 1
      %s144 = smul.u32 32, %s14
      %p145 = scmp.lt.s32.totalorder %s144, 63
      %s146 = scalar_select %p145, %s144, 63
      %s147 = smul.addr %s146, 8
      %s148 = scalar_lea.vmem %s0, %s147
      %p149 = pneg %p35
      %p150 = pneg %p32
      %p151 = pneg %p56
      %p152 = pneg %p53
      %p153 = pneg %p77
      %p154 = pneg %p74
      %p155 = pneg %p103
      %p156 = pneg %p100
      %s157 = smul.u32 32, %s14
      %p158 = scmp.lt.s32.totalorder %s157, 63
      %s159 = scalar_select %p158, %s157, 63
      %s160 = smul.addr %s159, 4
      %s161 = scalar_lea.vmem %s3, %s160
      %s162 = smul.u32 32, %s14
      %p163 = scmp.lt.s32.totalorder %s162, 63
      %s164 = scalar_select %p163, %s162, 63
      %s165 = smul.addr %s164, 8
      %s166 = scalar_lea.vmem %s0, %s165
      %s167 = smul.u32 32, %s14
      %s168 = smul.u32 32, %s14
      %p169 = scmp.lt.s32.totalorder %s168, 63
      %s170 = scalar_select %p169, %s168, 63
      %s171 = smul.addr %s170, 4
      %s172 = scalar_lea.vmem %s3, %s171
      %s173 = smul.u32 32, %s14
      %v174 = vld [vmem:[%s166] sm:$0xff]
      %v175 = vld [vmem:[%s166 + $0x8] sm:$0xff]
      %v176 = vld [vmem:[%s166 + $0x10] sm:$0xff]
      %v177 = vld [vmem:[%s166 + $0x18] sm:$0xff]
      %v178 = vld [vmem:[%s166 + $0x20] sm:$0xff]
      %v179 = vld [vmem:[%s166 + $0x28] sm:$0xff]
      %v180 = vld [vmem:[%s166 + $0x30] sm:$0xff]
      %v181 = vld [vmem:[%s166 + $0x38] sm:$0xff]
      %v182 = vld [vmem:[%s166 + $0x40] sm:$0xff]
      %v183 = vld [vmem:[%s166 + $0x48] sm:$0xff]
      %v184 = vld [vmem:[%s166 + $0x50] sm:$0xff]
      %v185 = vld [vmem:[%s166 + $0x58] sm:$0xff]
      %v186 = vld [vmem:[%s166 + $0x60] sm:$0xff]
      %v187 = vld [vmem:[%s166 + $0x68] sm:$0xff]
      %v188 = vld [vmem:[%s166 + $0x70] sm:$0xff]
      %v189 = vld [vmem:[%s166 + $0x78] sm:$0xff]
      %v190 = vld [vmem:[%s166 + $0x80] sm:$0xff]
      %v191 = vld [vmem:[%s166 + $0x88] sm:$0xff]
      %v192 = vld [vmem:[%s166 + $0x90] sm:$0xff]
      %v193 = vld [vmem:[%s166 + $0x98] sm:$0xff]
      %v194 = vld [vmem:[%s166 + $0xa0] sm:$0xff]
      %v195 = vld [vmem:[%s166 + $0xa8] sm:$0xff]
      %v196 = vld [vmem:[%s166 + $0xb0] sm:$0xff]
      %v197 = vld [vmem:[%s166 + $0xb8] sm:$0xff]
      %v198 = vld [vmem:[%s166 + $0xc0] sm:$0xff]
      %v199 = vld [vmem:[%s166 + $0xc8] sm:$0xff]
      %v200 = vld [vmem:[%s166 + $0xd0] sm:$0xff]
      %v201 = vld [vmem:[%s166 + $0xd8] sm:$0xff]
      %v202 = vld [vmem:[%s166 + $0xe0] sm:$0xff]
      %v203 = vld [vmem:[%s166 + $0xe8] sm:$0xff]
      %v204 = vld [vmem:[%s166 + $0xf0] sm:$0xff]
      %v205 = vld [vmem:[%s166 + $0xf8] sm:$0xff]
      %v206 = vld [vmem:[%s1] sm:$0xff]
      %v207 = vld [vmem:[%s1 + $0x8] sm:$0xff]
      %v208 = vld [vmem:[%s1 + $0x10] sm:$0xff]
      %v209 = vld [vmem:[%s1 + $0x18] sm:$0xff]
      %v210 = vld [vmem:[%s2] sm:$0x1]
      %v211 = vmul.f32 %v174, %v174
      %v212 = vmul.f32 %v175, %v175
      %v213 = vmul.f32 %v176, %v176
      %v214 = vmul.f32 %v177, %v177
      %v215 = vmul.f32 %v178, %v178
      %v216 = vmul.f32 %v179, %v179
      %v217 = vmul.f32 %v180, %v180
      %v218 = vmul.f32 %v181, %v181
      %v219 = vmul.f32 %v182, %v182
      %v220 = vmul.f32 %v183, %v183
      %v221 = vmul.f32 %v184, %v184
      %v222 = vmul.f32 %v185, %v185
      %v223 = vmul.f32 %v186, %v186
      %v224 = vmul.f32 %v187, %v187
      %v225 = vmul.f32 %v188, %v188
      %v226 = vmul.f32 %v189, %v189
      %v227 = vmul.f32 %v190, %v190
      %v228 = vmul.f32 %v191, %v191
      %v229 = vmul.f32 %v192, %v192
      %v230 = vmul.f32 %v193, %v193
      %v231 = vmul.f32 %v194, %v194
      %v232 = vmul.f32 %v195, %v195
      %v233 = vmul.f32 %v196, %v196
      %v234 = vmul.f32 %v197, %v197
      %v235 = vmul.f32 %v198, %v198
      %v236 = vmul.f32 %v199, %v199
      %v237 = vmul.f32 %v200, %v200
      %v238 = vmul.f32 %v201, %v201
      %v239 = vmul.f32 %v202, %v202
      %v240 = vmul.f32 %v203, %v203
      %v241 = vmul.f32 %v204, %v204
      %v242 = vmul.f32 %v205, %v205
      %vm243 = vcmask 261120
      %v244 = vsel %vm243, %v211, 0.0
      %245 = vadd.xlane.f32.xlu0 %v244
      %v246 = vpop.xlane.xlu0 %245
      %v247 = vsel %vm243, %v212, 0.0
      %248 = vadd.xlane.f32.xlu0 %v247
      %v249 = vpop.xlane.xlu0 %248
      %v250 = vsel %vm243, %v213, 0.0
      %251 = vadd.xlane.f32.xlu0 %v250
      %v252 = vpop.xlane.xlu0 %251
      %v253 = vsel %vm243, %v214, 0.0
      %254 = vadd.xlane.f32.xlu0 %v253
      %v255 = vpop.xlane.xlu0 %254
      %v256 = vsel %vm243, %v215, 0.0
      %257 = vadd.xlane.f32.xlu0 %v256
      %v258 = vpop.xlane.xlu0 %257
      %v259 = vsel %vm243, %v216, 0.0
      %260 = vadd.xlane.f32.xlu0 %v259
      %v261 = vpop.xlane.xlu0 %260
      %v262 = vsel %vm243, %v217, 0.0
      %263 = vadd.xlane.f32.xlu0 %v262
      %v264 = vpop.xlane.xlu0 %263
      %v265 = vsel %vm243, %v218, 0.0
      %266 = vadd.xlane.f32.xlu0 %v265
      %v267 = vpop.xlane.xlu0 %266
      %v268 = vsel %vm243, %v219, 0.0
      %269 = vadd.xlane.f32.xlu0 %v268
      %v270 = vpop.xlane.xlu0 %269
      %v271 = vsel %vm243, %v220, 0.0
      %272 = vadd.xlane.f32.xlu0 %v271
      %v273 = vpop.xlane.xlu0 %272
      %v274 = vsel %vm243, %v221, 0.0
      %275 = vadd.xlane.f32.xlu0 %v274
      %v276 = vpop.xlane.xlu0 %275
      %v277 = vsel %vm243, %v222, 0.0
      %278 = vadd.xlane.f32.xlu0 %v277
      %v279 = vpop.xlane.xlu0 %278
      %v280 = vsel %vm243, %v223, 0.0
      %281 = vadd.xlane.f32.xlu0 %v280
      %v282 = vpop.xlane.xlu0 %281
      %v283 = vsel %vm243, %v224, 0.0
      %284 = vadd.xlane.f32.xlu0 %v283
      %v285 = vpop.xlane.xlu0 %284
      %v286 = vsel %vm243, %v225, 0.0
      %287 = vadd.xlane.f32.xlu0 %v286
      %v288 = vpop.xlane.xlu0 %287
      %v289 = vsel %vm243, %v226, 0.0
      %290 = vadd.xlane.f32.xlu0 %v289
      %v291 = vpop.xlane.xlu0 %290
      %v292 = vsel %vm243, %v227, 0.0
      %293 = vadd.xlane.f32.xlu0 %v292
      %v294 = vpop.xlane.xlu0 %293
      %v295 = vsel %vm243, %v228, 0.0
      %296 = vadd.xlane.f32.xlu0 %v295
      %v297 = vpop.xlane.xlu0 %296
      %v298 = vsel %vm243, %v229, 0.0
      %299 = vadd.xlane.f32.xlu0 %v298
      %v300 = vpop.xlane.xlu0 %299
      %v301 = vsel %vm243, %v230, 0.0
      %302 = vadd.xlane.f32.xlu0 %v301
      %v303 = vpop.xlane.xlu0 %302
      %v304 = vsel %vm243, %v231, 0.0
      %305 = vadd.xlane.f32.xlu0 %v304
      %v306 = vpop.xlane.xlu0 %305
      %v307 = vsel %vm243, %v232, 0.0
      %308 = vadd.xlane.f32.xlu0 %v307
      %v309 = vpop.xlane.xlu0 %308
      %v310 = vsel %vm243, %v233, 0.0
      %311 = vadd.xlane.f32.xlu0 %v310
      %v312 = vpop.xlane.xlu0 %311
      %v313 = vsel %vm243, %v234, 0.0
      %314 = vadd.xlane.f32.xlu0 %v313
      %v315 = vpop.xlane.xlu0 %314
      %v316 = vsel %vm243, %v235, 0.0
      %317 = vadd.xlane.f32.xlu0 %v316
      %v318 = vpop.xlane.xlu0 %317
      %v319 = vsel %vm243, %v236, 0.0
      %320 = vadd.xlane.f32.xlu0 %v319
      %v321 = vpop.xlane.xlu0 %320
      %v322 = vsel %vm243, %v237, 0.0
      %323 = vadd.xlane.f32.xlu0 %v322
      %v324 = vpop.xlane.xlu0 %323
      %v325 = vsel %vm243, %v238, 0.0
      %326 = vadd.xlane.f32.xlu0 %v325
      %v327 = vpop.xlane.xlu0 %326
      %v328 = vsel %vm243, %v239, 0.0
      %329 = vadd.xlane.f32.xlu0 %v328
      %v330 = vpop.xlane.xlu0 %329
      %v331 = vsel %vm243, %v240, 0.0
      %332 = vadd.xlane.f32.xlu0 %v331
      %v333 = vpop.xlane.xlu0 %332
      %v334 = vsel %vm243, %v241, 0.0
      %335 = vadd.xlane.f32.xlu0 %v334
      %v336 = vpop.xlane.xlu0 %335
      %v337 = vsel %vm243, %v242, 0.0
      %338 = vadd.xlane.f32.xlu0 %v337
      %v339 = vpop.xlane.xlu0 %338
      %v340 = vrsqrt.pop %v246
      %v341 = vmul.f32 %v246, %v340
      %vm342 = vcmp.eq.f32.partialorder %v246, inf
      %v343 = vsel %vm342, %v246, %v341
      %vm344 = vcmp.eq.f32.partialorder %v246, 0.0
      %v345 = vand.u32 %v246, 2147483648
      %v346 = vsel %vm344, %v345, %v343
      %v347 = vrsqrt.pop %v249
      %v348 = vmul.f32 %v249, %v347
      %vm349 = vcmp.eq.f32.partialorder %v249, inf
      %v350 = vsel %vm349, %v249, %v348
      %vm351 = vcmp.eq.f32.partialorder %v249, 0.0
      %v352 = vand.u32 %v249, 2147483648
      %v353 = vsel %vm351, %v352, %v350
      %v354 = vrsqrt.pop %v252
      %v355 = vmul.f32 %v252, %v354
      %vm356 = vcmp.eq.f32.partialorder %v252, inf
      %v357 = vsel %vm356, %v252, %v355
      %vm358 = vcmp.eq.f32.partialorder %v252, 0.0
      %v359 = vand.u32 %v252, 2147483648
      %v360 = vsel %vm358, %v359, %v357
      %v361 = vrsqrt.pop %v255
      %v362 = vmul.f32 %v255, %v361
      %vm363 = vcmp.eq.f32.partialorder %v255, inf
      %v364 = vsel %vm363, %v255, %v362
      %vm365 = vcmp.eq.f32.partialorder %v255, 0.0
      %v366 = vand.u32 %v255, 2147483648
      %v367 = vsel %vm365, %v366, %v364
      %v368 = vrsqrt.pop %v258
      %v369 = vmul.f32 %v258, %v368
      %vm370 = vcmp.eq.f32.partialorder %v258, inf
      %v371 = vsel %vm370, %v258, %v369
      %vm372 = vcmp.eq.f32.partialorder %v258, 0.0
      %v373 = vand.u32 %v258, 2147483648
      %v374 = vsel %vm372, %v373, %v371
      %v375 = vrsqrt.pop %v261
      %v376 = vmul.f32 %v261, %v375
      %vm377 = vcmp.eq.f32.partialorder %v261, inf
      %v378 = vsel %vm377, %v261, %v376
      %vm379 = vcmp.eq.f32.partialorder %v261, 0.0
      %v380 = vand.u32 %v261, 2147483648
      %v381 = vsel %vm379, %v380, %v378
      %v382 = vrsqrt.pop %v264
      %v383 = vmul.f32 %v264, %v382
      %vm384 = vcmp.eq.f32.partialorder %v264, inf
      %v385 = vsel %vm384, %v264, %v383
      %vm386 = vcmp.eq.f32.partialorder %v264, 0.0
      %v387 = vand.u32 %v264, 2147483648
      %v388 = vsel %vm386, %v387, %v385
      %v389 = vrsqrt.pop %v267
      %v390 = vmul.f32 %v267, %v389
      %vm391 = vcmp.eq.f32.partialorder %v267, inf
      %v392 = vsel %vm391, %v267, %v390
      %vm393 = vcmp.eq.f32.partialorder %v267, 0.0
      %v394 = vand.u32 %v267, 2147483648
      %v395 = vsel %vm393, %v394, %v392
      %v396 = vrsqrt.pop %v270
      %v397 = vmul.f32 %v270, %v396
      %vm398 = vcmp.eq.f32.partialorder %v270, inf
      %v399 = vsel %vm398, %v270, %v397
      %vm400 = vcmp.eq.f32.partialorder %v270, 0.0
      %v401 = vand.u32 %v270, 2147483648
      %v402 = vsel %vm400, %v401, %v399
      %v403 = vrsqrt.pop %v273
      %v404 = vmul.f32 %v273, %v403
      %vm405 = vcmp.eq.f32.partialorder %v273, inf
      %v406 = vsel %vm405, %v273, %v404
      %vm407 = vcmp.eq.f32.partialorder %v273, 0.0
      %v408 = vand.u32 %v273, 2147483648
      %v409 = vsel %vm407, %v408, %v406
      %v410 = vrsqrt.pop %v276
      %v411 = vmul.f32 %v276, %v410
      %vm412 = vcmp.eq.f32.partialorder %v276, inf
      %v413 = vsel %vm412, %v276, %v411
      %vm414 = vcmp.eq.f32.partialorder %v276, 0.0
      %v415 = vand.u32 %v276, 2147483648
      %v416 = vsel %vm414, %v415, %v413
      %v417 = vrsqrt.pop %v279
      %v418 = vmul.f32 %v279, %v417
      %vm419 = vcmp.eq.f32.partialorder %v279, inf
      %v420 = vsel %vm419, %v279, %v418
      %vm421 = vcmp.eq.f32.partialorder %v279, 0.0
      %v422 = vand.u32 %v279, 2147483648
      %v423 = vsel %vm421, %v422, %v420
      %v424 = vrsqrt.pop %v282
      %v425 = vmul.f32 %v282, %v424
      %vm426 = vcmp.eq.f32.partialorder %v282, inf
      %v427 = vsel %vm426, %v282, %v425
      %vm428 = vcmp.eq.f32.partialorder %v282, 0.0
      %v429 = vand.u32 %v282, 2147483648
      %v430 = vsel %vm428, %v429, %v427
      %v431 = vrsqrt.pop %v285
      %v432 = vmul.f32 %v285, %v431
      %vm433 = vcmp.eq.f32.partialorder %v285, inf
      %v434 = vsel %vm433, %v285, %v432
      %vm435 = vcmp.eq.f32.partialorder %v285, 0.0
      %v436 = vand.u32 %v285, 2147483648
      %v437 = vsel %vm435, %v436, %v434
      %v438 = vrsqrt.pop %v288
      %v439 = vmul.f32 %v288, %v438
      %vm440 = vcmp.eq.f32.partialorder %v288, inf
      %v441 = vsel %vm440, %v288, %v439
      %vm442 = vcmp.eq.f32.partialorder %v288, 0.0
      %v443 = vand.u32 %v288, 2147483648
      %v444 = vsel %vm442, %v443, %v441
      %v445 = vrsqrt.pop %v291
      %v446 = vmul.f32 %v291, %v445
      %vm447 = vcmp.eq.f32.partialorder %v291, inf
      %v448 = vsel %vm447, %v291, %v446
      %vm449 = vcmp.eq.f32.partialorder %v291, 0.0
      %v450 = vand.u32 %v291, 2147483648
      %v451 = vsel %vm449, %v450, %v448
      %v452 = vrsqrt.pop %v294
      %v453 = vmul.f32 %v294, %v452
      %vm454 = vcmp.eq.f32.partialorder %v294, inf
      %v455 = vsel %vm454, %v294, %v453
      %vm456 = vcmp.eq.f32.partialorder %v294, 0.0
      %v457 = vand.u32 %v294, 2147483648
      %v458 = vsel %vm456, %v457, %v455
      %v459 = vrsqrt.pop %v297
      %v460 = vmul.f32 %v297, %v459
      %vm461 = vcmp.eq.f32.partialorder %v297, inf
      %v462 = vsel %vm461, %v297, %v460
      %vm463 = vcmp.eq.f32.partialorder %v297, 0.0
      %v464 = vand.u32 %v297, 2147483648
      %v465 = vsel %vm463, %v464, %v462
      %v466 = vrsqrt.pop %v300
      %v467 = vmul.f32 %v300, %v466
      %vm468 = vcmp.eq.f32.partialorder %v300, inf
      %v469 = vsel %vm468, %v300, %v467
      %vm470 = vcmp.eq.f32.partialorder %v300, 0.0
      %v471 = vand.u32 %v300, 2147483648
      %v472 = vsel %vm470, %v471, %v469
      %v473 = vrsqrt.pop %v303
      %v474 = vmul.f32 %v303, %v473
      %vm475 = vcmp.eq.f32.partialorder %v303, inf
      %v476 = vsel %vm475, %v303, %v474
      %vm477 = vcmp.eq.f32.partialorder %v303, 0.0
      %v478 = vand.u32 %v303, 2147483648
      %v479 = vsel %vm477, %v478, %v476
      %v480 = vrsqrt.pop %v306
      %v481 = vmul.f32 %v306, %v480
      %vm482 = vcmp.eq.f32.partialorder %v306, inf
      %v483 = vsel %vm482, %v306, %v481
      %vm484 = vcmp.eq.f32.partialorder %v306, 0.0
      %v485 = vand.u32 %v306, 2147483648
      %v486 = vsel %vm484, %v485, %v483
      %v487 = vrsqrt.pop %v309
      %v488 = vmul.f32 %v309, %v487
      %vm489 = vcmp.eq.f32.partialorder %v309, inf
      %v490 = vsel %vm489, %v309, %v488
      %vm491 = vcmp.eq.f32.partialorder %v309, 0.0
      %v492 = vand.u32 %v309, 2147483648
      %v493 = vsel %vm491, %v492, %v490
      %v494 = vrsqrt.pop %v312
      %v495 = vmul.f32 %v312, %v494
      %vm496 = vcmp.eq.f32.partialorder %v312, inf
      %v497 = vsel %vm496, %v312, %v495
      %vm498 = vcmp.eq.f32.partialorder %v312, 0.0
      %v499 = vand.u32 %v312, 2147483648
      %v500 = vsel %vm498, %v499, %v497
      %v501 = vrsqrt.pop %v315
      %v502 = vmul.f32 %v315, %v501
      %vm503 = vcmp.eq.f32.partialorder %v315, inf
      %v504 = vsel %vm503, %v315, %v502
      %vm505 = vcmp.eq.f32.partialorder %v315, 0.0
      %v506 = vand.u32 %v315, 2147483648
      %v507 = vsel %vm505, %v506, %v504
      %v508 = vrsqrt.pop %v318
      %v509 = vmul.f32 %v318, %v508
      %vm510 = vcmp.eq.f32.partialorder %v318, inf
      %v511 = vsel %vm510, %v318, %v509
      %vm512 = vcmp.eq.f32.partialorder %v318, 0.0
      %v513 = vand.u32 %v318, 2147483648
      %v514 = vsel %vm512, %v513, %v511
      %v515 = vrsqrt.pop %v321
      %v516 = vmul.f32 %v321, %v515
      %vm517 = vcmp.eq.f32.partialorder %v321, inf
      %v518 = vsel %vm517, %v321, %v516
      %vm519 = vcmp.eq.f32.partialorder %v321, 0.0
      %v520 = vand.u32 %v321, 2147483648
      %v521 = vsel %vm519, %v520, %v518
      %v522 = vrsqrt.pop %v324
      %v523 = vmul.f32 %v324, %v522
      %vm524 = vcmp.eq.f32.partialorder %v324, inf
      %v525 = vsel %vm524, %v324, %v523
      %vm526 = vcmp.eq.f32.partialorder %v324, 0.0
      %v527 = vand.u32 %v324, 2147483648
      %v528 = vsel %vm526, %v527, %v525
      %v529 = vrsqrt.pop %v327
      %v530 = vmul.f32 %v327, %v529
      %vm531 = vcmp.eq.f32.partialorder %v327, inf
      %v532 = vsel %vm531, %v327, %v530
      %vm533 = vcmp.eq.f32.partialorder %v327, 0.0
      %v534 = vand.u32 %v327, 2147483648
      %v535 = vsel %vm533, %v534, %v532
      %v536 = vrsqrt.pop %v330
      %v537 = vmul.f32 %v330, %v536
      %vm538 = vcmp.eq.f32.partialorder %v330, inf
      %v539 = vsel %vm538, %v330, %v537
      %vm540 = vcmp.eq.f32.partialorder %v330, 0.0
      %v541 = vand.u32 %v330, 2147483648
      %v542 = vsel %vm540, %v541, %v539
      %v543 = vrsqrt.pop %v333
      %v544 = vmul.f32 %v333, %v543
      %vm545 = vcmp.eq.f32.partialorder %v333, inf
      %v546 = vsel %vm545, %v333, %v544
      %vm547 = vcmp.eq.f32.partialorder %v333, 0.0
      %v548 = vand.u32 %v333, 2147483648
      %v549 = vsel %vm547, %v548, %v546
      %v550 = vrsqrt.pop %v336
      %v551 = vmul.f32 %v336, %v550
      %vm552 = vcmp.eq.f32.partialorder %v336, inf
      %v553 = vsel %vm552, %v336, %v551
      %vm554 = vcmp.eq.f32.partialorder %v336, 0.0
      %v555 = vand.u32 %v336, 2147483648
      %v556 = vsel %vm554, %v555, %v553
      %v557 = vrsqrt.pop %v339
      %v558 = vmul.f32 %v339, %v557
      %vm559 = vcmp.eq.f32.partialorder %v339, inf
      %v560 = vsel %vm559, %v339, %v558
      %vm561 = vcmp.eq.f32.partialorder %v339, 0.0
      %v562 = vand.u32 %v339, 2147483648
      %v563 = vsel %vm561, %v562, %v560
      %v564 = vmax.f32 %v346, 1e-15
      %v565 = vmax.f32 %v353, 1e-15
      %v566 = vmax.f32 %v360, 1e-15
      %v567 = vmax.f32 %v367, 1e-15
      %v568 = vmax.f32 %v374, 1e-15
      %v569 = vmax.f32 %v381, 1e-15
      %v570 = vmax.f32 %v388, 1e-15
      %v571 = vmax.f32 %v395, 1e-15
      %v572 = vmax.f32 %v402, 1e-15
      %v573 = vmax.f32 %v409, 1e-15
      %v574 = vmax.f32 %v416, 1e-15
      %v575 = vmax.f32 %v423, 1e-15
      %v576 = vmax.f32 %v430, 1e-15
      %v577 = vmax.f32 %v437, 1e-15
      %v578 = vmax.f32 %v444, 1e-15
      %v579 = vmax.f32 %v451, 1e-15
      %v580 = vmax.f32 %v458, 1e-15
      %v581 = vmax.f32 %v465, 1e-15
      %v582 = vmax.f32 %v472, 1e-15
      %v583 = vmax.f32 %v479, 1e-15
      %v584 = vmax.f32 %v486, 1e-15
      %v585 = vmax.f32 %v493, 1e-15
      %v586 = vmax.f32 %v500, 1e-15
      %v587 = vmax.f32 %v507, 1e-15
      %v588 = vmax.f32 %v514, 1e-15
      %v589 = vmax.f32 %v521, 1e-15
      %v590 = vmax.f32 %v528, 1e-15
      %v591 = vmax.f32 %v535, 1e-15
      %v592 = vmax.f32 %v542, 1e-15
      %v593 = vmax.f32 %v549, 1e-15
      %v594 = vmax.f32 %v556, 1e-15
      %v595 = vmax.f32 %v563, 1e-15
      %v597 = vsel %vm243, %v174, 0
      %v600 = vsel %vm243, %v175, 0
      %v603 = vsel %vm243, %v176, 0
      %v606 = vsel %vm243, %v177, 0
      %v609 = vsel %vm243, %v178, 0
      %v612 = vsel %vm243, %v179, 0
      %v615 = vsel %vm243, %v180, 0
      %v618 = vsel %vm243, %v181, 0
      %v621 = vsel %vm243, %v182, 0
      %v624 = vsel %vm243, %v183, 0
      %v627 = vsel %vm243, %v184, 0
      %v630 = vsel %vm243, %v185, 0
      %v633 = vsel %vm243, %v186, 0
      %v636 = vsel %vm243, %v187, 0
      %v639 = vsel %vm243, %v188, 0
      %v642 = vsel %vm243, %v189, 0
      %v645 = vsel %vm243, %v190, 0
      %v648 = vsel %vm243, %v191, 0
      %v651 = vsel %vm243, %v192, 0
      %v654 = vsel %vm243, %v193, 0
      %v657 = vsel %vm243, %v194, 0
      %v660 = vsel %vm243, %v195, 0
      %v663 = vsel %vm243, %v196, 0
      %v666 = vsel %vm243, %v197, 0
      %v669 = vsel %vm243, %v198, 0
      %v672 = vsel %vm243, %v199, 0
      %v675 = vsel %vm243, %v200, 0
      %v678 = vsel %vm243, %v201, 0
      %v681 = vsel %vm243, %v202, 0
      %v684 = vsel %vm243, %v203, 0
      %v687 = vsel %vm243, %v204, 0
      %v690 = vsel %vm243, %v205, 0
      %692 = vmatprep.subr.mxu0 0.0
      %693 = vmatpush1.msra.mxu0 %v206
      %694 = vmatprep.subr.mxu0 0.0
      %695 = vmatpush1.msra.mxu0 %v207
      %696 = vmatprep.subr.mxu0 0.0
      %697 = vmatpush1.msra.mxu0 %v208
      %698 = vmatprep.subr.mxu0 0.0
      %699 = vmatpush1.msra.mxu0 %v209
      %700 = vmatprep.subr.mxu0 0.0
      %701 = vmatpush1.msra.mxu0 0.0
      %702 = vmatprep.subr.mxu0 0.0
      %703 = vmatpush1.msra.mxu0 0.0
      %704 = vmatprep.subr.mxu0 0.0
      %705 = vmatpush1.msra.mxu0 0.0
      %706 = vmatprep.subr.mxu0 0.0
      %707 = vmatpush1.msra.mxu0 0.0
      %708 = vmatprep.subr.mxu0 0.0
      %709 = vmatpush1.msra.mxu0 0.0
      %710 = vmatprep.subr.mxu0 0.0
      %711 = vmatpush1.msra.mxu0 0.0
      %712 = vmatprep.subr.mxu0 0.0
      %713 = vmatpush1.msra.mxu0 0.0
      %714 = vmatprep.subr.mxu0 0.0
      %715 = vmatpush1.msra.mxu0 0.0
      %716 = vmatprep.subr.mxu0 0.0
      %717 = vmatpush1.msra.mxu0 0.0
      %718 = vmatprep.subr.mxu0 0.0
      %719 = vmatpush1.msra.mxu0 0.0
      %720 = vmatprep.subr.mxu0 0.0
      %721 = vmatpush1.msra.mxu0 0.0
      %722 = vmatprep.subr.mxu0 0.0
      %723 = vmatpush1.msra.mxu0 0.0
      %724 = vmatprep.subr.mxu0 0.0
      %725 = vmatpush1.msra.mxu0 0.0
      %726 = vmatprep.subr.mxu0 0.0
      %727 = vmatpush1.msra.mxu0 0.0
      %728 = vmatprep.subr.mxu0 0.0
      %729 = vmatpush1.msra.mxu0 0.0
      %730 = vmatprep.subr.mxu0 0.0
      %731 = vmatpush1.msra.mxu0 0.0
      %732 = vmatprep.subr.mxu0 0.0
      %733 = vmatpush1.msra.mxu0 0.0
      %734 = vmatprep.subr.mxu0 0.0
      %735 = vmatpush1.msra.mxu0 0.0
      %736 = vmatprep.subr.mxu0 0.0
      %737 = vmatpush1.msra.mxu0 0.0
      %738 = vmatprep.subr.mxu0 0.0
      %739 = vmatpush1.msra.mxu0 0.0
      %740 = vmatprep.subr.mxu0 0.0
      %741 = vmatpush1.msra.mxu0 0.0
      %742 = vmatprep.subr.mxu0 0.0
      %743 = vmatpush1.msra.mxu0 0.0
      %744 = vmatprep.subr.mxu0 0.0
      %745 = vmatpush1.msra.mxu0 0.0
      %746 = vmatprep.subr.mxu0 0.0
      %747 = vmatpush1.msra.mxu0 0.0
      %748 = vmatprep.subr.mxu0 0.0
      %749 = vmatpush1.msra.mxu0 0.0
      %750 = vmatprep.subr.mxu0 0.0
      %751 = vmatpush1.msra.mxu0 0.0
      %752 = vmatprep.subr.mxu0 0.0
      %753 = vmatpush1.msra.mxu0 0.0
      %754 = vmatprep.subr.mxu0 0.0
      %755 = vmatpush1.msra.mxu0 0.0
      %756 = vmatprep.mubr.f32.mxu0 0.0
      %757 = vmatmul.mubr.f32.gmra.mrb[0].mxu0 %v597
      %v758 = vpop.f32.mrb[0].mxu0
      %v759 = vadd.f32 0.0, %v758
      %v760 = vpop.f32.mrb[0].mxu0
      %761 = vmatprep.mubr.f32.mxu0 0.0
      %762 = vmatmul.mubr.f32.gmra.mrb[0].mxu0 %v600
      %v763 = vpop.f32.mrb[0].mxu0
      %v764 = vadd.f32 0.0, %v763
      %v765 = vpop.f32.mrb[0].mxu0
      %766 = vmatprep.mubr.f32.mxu0 0.0
      %767 = vmatmul.mubr.f32.gmra.mrb[0].mxu0 %v603
      %v768 = vpop.f32.mrb[0].mxu0
      %v769 = vadd.f32 0.0, %v768
      %v770 = vpop.f32.mrb[0].mxu0
      %771 = vmatprep.mubr.f32.mxu0 0.0
      %772 = vmatmul.mubr.f32.gmra.mrb[0].mxu0 %v606
      %v773 = vpop.f32.mrb[0].mxu0
      %v774 = vadd.f32 0.0, %v773
      %v775 = vpop.f32.mrb[0].mxu0
      %776 = vmatprep.mubr.f32.mxu0 0.0
      %777 = vmatmul.mubr.f32.gmra.mrb[0].mxu0 %v609
      %v778 = vpop.f32.mrb[0].mxu0
      %v779 = vadd.f32 0.0, %v778
      %v780 = vpop.f32.mrb[0].mxu0
      %781 = vmatprep.mubr.f32.mxu0 0.0
      %782 = vmatmul.mubr.f32.gmra.mrb[0].mxu0 %v612
      %v783 = vpop.f32.mrb[0].mxu0
      %v784 = vadd.f32 0.0, %v783
      %v785 = vpop.f32.mrb[0].mxu0
      %786 = vmatprep.mubr.f32.mxu0 0.0
      %787 = vmatmul.mubr.f32.gmra.mrb[0].mxu0 %v615
      %v788 = vpop.f32.mrb[0].mxu0
      %v789 = vadd.f32 0.0, %v788
      %v790 = vpop.f32.mrb[0].mxu0
      %791 = vmatprep.mubr.f32.mxu0 0.0
      %792 = vmatmul.mubr.f32.gmra.mrb[0].mxu0 %v618
      %v793 = vpop.f32.mrb[0].mxu0
      %v794 = vadd.f32 0.0, %v793
      %v795 = vpop.f32.mrb[0].mxu0
      %796 = vmatprep.mubr.f32.mxu0 0.0
      %797 = vmatmul.mubr.f32.gmra.mrb[0].mxu0 %v621
      %v798 = vpop.f32.mrb[0].mxu0
      %v799 = vadd.f32 0.0, %v798
      %v800 = vpop.f32.mrb[0].mxu0
      %801 = vmatprep.mubr.f32.mxu0 0.0
      %802 = vmatmul.mubr.f32.gmra.mrb[0].mxu0 %v624
      %v803 = vpop.f32.mrb[0].mxu0
      %v804 = vadd.f32 0.0, %v803
      %v805 = vpop.f32.mrb[0].mxu0
      %806 = vmatprep.mubr.f32.mxu0 0.0
      %807 = vmatmul.mubr.f32.gmra.mrb[0].mxu0 %v627
      %v808 = vpop.f32.mrb[0].mxu0
      %v809 = vadd.f32 0.0, %v808
      %v810 = vpop.f32.mrb[0].mxu0
      %811 = vmatprep.mubr.f32.mxu0 0.0
      %812 = vmatmul.mubr.f32.gmra.mrb[0].mxu0 %v630
      %v813 = vpop.f32.mrb[0].mxu0
      %v814 = vadd.f32 0.0, %v813
      %v815 = vpop.f32.mrb[0].mxu0
      %816 = vmatprep.mubr.f32.mxu0 0.0
      %817 = vmatmul.mubr.f32.gmra.mrb[0].mxu0 %v633
      %v818 = vpop.f32.mrb[0].mxu0
      %v819 = vadd.f32 0.0, %v818
      %v820 = vpop.f32.mrb[0].mxu0
      %821 = vmatprep.mubr.f32.mxu0 0.0
      %822 = vmatmul.mubr.f32.gmra.mrb[0].mxu0 %v636
      %v823 = vpop.f32.mrb[0].mxu0
      %v824 = vadd.f32 0.0, %v823
      %v825 = vpop.f32.mrb[0].mxu0
      %826 = vmatprep.mubr.f32.mxu0 0.0
      %827 = vmatmul.mubr.f32.gmra.mrb[0].mxu0 %v639
      %v828 = vpop.f32.mrb[0].mxu0
      %v829 = vadd.f32 0.0, %v828
      %v830 = vpop.f32.mrb[0].mxu0
      %831 = vmatprep.mubr.f32.mxu0 0.0
      %832 = vmatmul.mubr.f32.gmra.mrb[0].mxu0 %v642
      %v833 = vpop.f32.mrb[0].mxu0
      %v834 = vadd.f32 0.0, %v833
      %v835 = vpop.f32.mrb[0].mxu0
      %836 = vmatprep.mubr.f32.mxu0 0.0
      %837 = vmatmul.mubr.f32.gmra.mrb[0].mxu0 %v645
      %v838 = vpop.f32.mrb[0].mxu0
      %v839 = vadd.f32 0.0, %v838
      %v840 = vpop.f32.mrb[0].mxu0
      %841 = vmatprep.mubr.f32.mxu0 0.0
      %842 = vmatmul.mubr.f32.gmra.mrb[0].mxu0 %v648
      %v843 = vpop.f32.mrb[0].mxu0
      %v844 = vadd.f32 0.0, %v843
      %v845 = vpop.f32.mrb[0].mxu0
      %846 = vmatprep.mubr.f32.mxu0 0.0
      %847 = vmatmul.mubr.f32.gmra.mrb[0].mxu0 %v651
      %v848 = vpop.f32.mrb[0].mxu0
      %v849 = vadd.f32 0.0, %v848
      %v850 = vpop.f32.mrb[0].mxu0
      %851 = vmatprep.mubr.f32.mxu0 0.0
      %852 = vmatmul.mubr.f32.gmra.mrb[0].mxu0 %v654
      %v853 = vpop.f32.mrb[0].mxu0
      %v854 = vadd.f32 0.0, %v853
      %v855 = vpop.f32.mrb[0].mxu0
      %856 = vmatprep.mubr.f32.mxu0 0.0
      %857 = vmatmul.mubr.f32.gmra.mrb[0].mxu0 %v657
      %v858 = vpop.f32.mrb[0].mxu0
      %v859 = vadd.f32 0.0, %v858
      %v860 = vpop.f32.mrb[0].mxu0
      %861 = vmatprep.mubr.f32.mxu0 0.0
      %862 = vmatmul.mubr.f32.gmra.mrb[0].mxu0 %v660
      %v863 = vpop.f32.mrb[0].mxu0
      %v864 = vadd.f32 0.0, %v863
      %v865 = vpop.f32.mrb[0].mxu0
      %866 = vmatprep.mubr.f32.mxu0 0.0
      %867 = vmatmul.mubr.f32.gmra.mrb[0].mxu0 %v663
      %v868 = vpop.f32.mrb[0].mxu0
      %v869 = vadd.f32 0.0, %v868
      %v870 = vpop.f32.mrb[0].mxu0
      %871 = vmatprep.mubr.f32.mxu0 0.0
      %872 = vmatmul.mubr.f32.gmra.mrb[0].mxu0 %v666
      %v873 = vpop.f32.mrb[0].mxu0
      %v874 = vadd.f32 0.0, %v873
      %v875 = vpop.f32.mrb[0].mxu0
      %876 = vmatprep.mubr.f32.mxu0 0.0
      %877 = vmatmul.mubr.f32.gmra.mrb[0].mxu0 %v669
      %v878 = vpop.f32.mrb[0].mxu0
      %v879 = vadd.f32 0.0, %v878
      %v880 = vpop.f32.mrb[0].mxu0
      %881 = vmatprep.mubr.f32.mxu0 0.0
      %882 = vmatmul.mubr.f32.gmra.mrb[0].mxu0 %v672
      %v883 = vpop.f32.mrb[0].mxu0
      %v884 = vadd.f32 0.0, %v883
      %v885 = vpop.f32.mrb[0].mxu0
      %886 = vmatprep.mubr.f32.mxu0 0.0
      %887 = vmatmul.mubr.f32.gmra.mrb[0].mxu0 %v675
      %v888 = vpop.f32.mrb[0].mxu0
      %v889 = vadd.f32 0.0, %v888
      %v890 = vpop.f32.mrb[0].mxu0
      %891 = vmatprep.mubr.f32.mxu0 0.0
      %892 = vmatmul.mubr.f32.gmra.mrb[0].mxu0 %v678
      %v893 = vpop.f32.mrb[0].mxu0
      %v894 = vadd.f32 0.0, %v893
      %v895 = vpop.f32.mrb[0].mxu0
      %896 = vmatprep.mubr.f32.mxu0 0.0
      %897 = vmatmul.mubr.f32.gmra.mrb[0].mxu0 %v681
      %v898 = vpop.f32.mrb[0].mxu0
      %v899 = vadd.f32 0.0, %v898
      %v900 = vpop.f32.mrb[0].mxu0
      %901 = vmatprep.mubr.f32.mxu0 0.0
      %902 = vmatmul.mubr.f32.gmra.mrb[0].mxu0 %v684
      %v903 = vpop.f32.mrb[0].mxu0
      %v904 = vadd.f32 0.0, %v903
      %v905 = vpop.f32.mrb[0].mxu0
      %906 = vmatprep.mubr.f32.mxu0 0.0
      %907 = vmatmul.mubr.f32.gmra.mrb[0].mxu0 %v687
      %v908 = vpop.f32.mrb[0].mxu0
      %v909 = vadd.f32 0.0, %v908
      %v910 = vpop.f32.mrb[0].mxu0
      %911 = vmatprep.mubr.f32.mxu0 0.0
      %912 = vmatmul.mubr.f32.gmra.mrb[0].mxu0 %v690
      %v913 = vpop.f32.mrb[0].mxu0
      %v914 = vadd.f32 0.0, %v913
      %v915 = vpop.f32.mrb[0].mxu0
      %916 = vdwg.mxu0
      %v917 = vmul.f32 %v759, %v759
      %v918 = vmul.f32 %v764, %v764
      %v919 = vmul.f32 %v769, %v769
      %v920 = vmul.f32 %v774, %v774
      %v921 = vmul.f32 %v779, %v779
      %v922 = vmul.f32 %v784, %v784
      %v923 = vmul.f32 %v789, %v789
      %v924 = vmul.f32 %v794, %v794
      %v925 = vmul.f32 %v799, %v799
      %v926 = vmul.f32 %v804, %v804
      %v927 = vmul.f32 %v809, %v809
      %v928 = vmul.f32 %v814, %v814
      %v929 = vmul.f32 %v819, %v819
      %v930 = vmul.f32 %v824, %v824
      %v931 = vmul.f32 %v829, %v829
      %v932 = vmul.f32 %v834, %v834
      %v933 = vmul.f32 %v839, %v839
      %v934 = vmul.f32 %v844, %v844
      %v935 = vmul.f32 %v849, %v849
      %v936 = vmul.f32 %v854, %v854
      %v937 = vmul.f32 %v859, %v859
      %v938 = vmul.f32 %v864, %v864
      %v939 = vmul.f32 %v869, %v869
      %v940 = vmul.f32 %v874, %v874
      %v941 = vmul.f32 %v879, %v879
      %v942 = vmul.f32 %v884, %v884
      %v943 = vmul.f32 %v889, %v889
      %v944 = vmul.f32 %v894, %v894
      %v945 = vmul.f32 %v899, %v899
      %v946 = vmul.f32 %v904, %v904
      %v947 = vmul.f32 %v909, %v909
      %v948 = vmul.f32 %v914, %v914
      %v949 = vsel %vm243, %v917, 0.0
      %950 = vadd.xlane.f32.xlu0 %v949
      %v951 = vpop.xlane.xlu0 %950
      %v952 = vsel %vm243, %v918, 0.0
      %953 = vadd.xlane.f32.xlu0 %v952
      %v954 = vpop.xlane.xlu0 %953
      %v955 = vsel %vm243, %v919, 0.0
      %956 = vadd.xlane.f32.xlu0 %v955
      %v957 = vpop.xlane.xlu0 %956
      %v958 = vsel %vm243, %v920, 0.0
      %959 = vadd.xlane.f32.xlu0 %v958
      %v960 = vpop.xlane.xlu0 %959
      %v961 = vsel %vm243, %v921, 0.0
      %962 = vadd.xlane.f32.xlu0 %v961
      %v963 = vpop.xlane.xlu0 %962
      %v964 = vsel %vm243, %v922, 0.0
      %965 = vadd.xlane.f32.xlu0 %v964
      %v966 = vpop.xlane.xlu0 %965
      %v967 = vsel %vm243, %v923, 0.0
      %968 = vadd.xlane.f32.xlu0 %v967
      %v969 = vpop.xlane.xlu0 %968
      %v970 = vsel %vm243, %v924, 0.0
      %971 = vadd.xlane.f32.xlu0 %v970
      %v972 = vpop.xlane.xlu0 %971
      %v973 = vsel %vm243, %v925, 0.0
      %974 = vadd.xlane.f32.xlu0 %v973
      %v975 = vpop.xlane.xlu0 %974
      %v976 = vsel %vm243, %v926, 0.0
      %977 = vadd.xlane.f32.xlu0 %v976
      %v978 = vpop.xlane.xlu0 %977
      %v979 = vsel %vm243, %v927, 0.0
      %980 = vadd.xlane.f32.xlu0 %v979
      %v981 = vpop.xlane.xlu0 %980
      %v982 = vsel %vm243, %v928, 0.0
      %983 = vadd.xlane.f32.xlu0 %v982
      %v984 = vpop.xlane.xlu0 %983
      %v985 = vsel %vm243, %v929, 0.0
      %986 = vadd.xlane.f32.xlu0 %v985
      %v987 = vpop.xlane.xlu0 %986
      %v988 = vsel %vm243, %v930, 0.0
      %989 = vadd.xlane.f32.xlu0 %v988
      %v990 = vpop.xlane.xlu0 %989
      %v991 = vsel %vm243, %v931, 0.0
      %992 = vadd.xlane.f32.xlu0 %v991
      %v993 = vpop.xlane.xlu0 %992
      %v994 = vsel %vm243, %v932, 0.0
      %995 = vadd.xlane.f32.xlu0 %v994
      %v996 = vpop.xlane.xlu0 %995
      %v997 = vsel %vm243, %v933, 0.0
      %998 = vadd.xlane.f32.xlu0 %v997
      %v999 = vpop.xlane.xlu0 %998
      %v1000 = vsel %vm243, %v934, 0.0
      %1001 = vadd.xlane.f32.xlu0 %v1000
      %v1002 = vpop.xlane.xlu0 %1001
      %v1003 = vsel %vm243, %v935, 0.0
      %1004 = vadd.xlane.f32.xlu0 %v1003
      %v1005 = vpop.xlane.xlu0 %1004
      %v1006 = vsel %vm243, %v936, 0.0
      %1007 = vadd.xlane.f32.xlu0 %v1006
      %v1008 = vpop.xlane.xlu0 %1007
      %v1009 = vsel %vm243, %v937, 0.0
      %1010 = vadd.xlane.f32.xlu0 %v1009
      %v1011 = vpop.xlane.xlu0 %1010
      %v1012 = vsel %vm243, %v938, 0.0
      %1013 = vadd.xlane.f32.xlu0 %v1012
      %v1014 = vpop.xlane.xlu0 %1013
      %v1015 = vsel %vm243, %v939, 0.0
      %1016 = vadd.xlane.f32.xlu0 %v1015
      %v1017 = vpop.xlane.xlu0 %1016
      %v1018 = vsel %vm243, %v940, 0.0
      %1019 = vadd.xlane.f32.xlu0 %v1018
      %v1020 = vpop.xlane.xlu0 %1019
      %v1021 = vsel %vm243, %v941, 0.0
      %1022 = vadd.xlane.f32.xlu0 %v1021
      %v1023 = vpop.xlane.xlu0 %1022
      %v1024 = vsel %vm243, %v942, 0.0
      %1025 = vadd.xlane.f32.xlu0 %v1024
      %v1026 = vpop.xlane.xlu0 %1025
      %v1027 = vsel %vm243, %v943, 0.0
      %1028 = vadd.xlane.f32.xlu0 %v1027
      %v1029 = vpop.xlane.xlu0 %1028
      %v1030 = vsel %vm243, %v944, 0.0
      %1031 = vadd.xlane.f32.xlu0 %v1030
      %v1032 = vpop.xlane.xlu0 %1031
      %v1033 = vsel %vm243, %v945, 0.0
      %1034 = vadd.xlane.f32.xlu0 %v1033
      %v1035 = vpop.xlane.xlu0 %1034
      %v1036 = vsel %vm243, %v946, 0.0
      %1037 = vadd.xlane.f32.xlu0 %v1036
      %v1038 = vpop.xlane.xlu0 %1037
      %v1039 = vsel %vm243, %v947, 0.0
      %1040 = vadd.xlane.f32.xlu0 %v1039
      %v1041 = vpop.xlane.xlu0 %1040
      %v1042 = vsel %vm243, %v948, 0.0
      %1043 = vadd.xlane.f32.xlu0 %v1042
      %v1044 = vpop.xlane.xlu0 %1043
      %v1045 = vrsqrt.pop %v951
      %v1046 = vmul.f32 %v951, %v1045
      %vm1047 = vcmp.eq.f32.partialorder %v951, inf
      %v1048 = vsel %vm1047, %v951, %v1046
      %vm1049 = vcmp.eq.f32.partialorder %v951, 0.0
      %v1050 = vand.u32 %v951, 2147483648
      %v1051 = vsel %vm1049, %v1050, %v1048
      %v1052 = vrsqrt.pop %v954
      %v1053 = vmul.f32 %v954, %v1052
      %vm1054 = vcmp.eq.f32.partialorder %v954, inf
      %v1055 = vsel %vm1054, %v954, %v1053
      %vm1056 = vcmp.eq.f32.partialorder %v954, 0.0
      %v1057 = vand.u32 %v954, 2147483648
      %v1058 = vsel %vm1056, %v1057, %v1055
      %v1059 = vrsqrt.pop %v957
      %v1060 = vmul.f32 %v957, %v1059
      %vm1061 = vcmp.eq.f32.partialorder %v957, inf
      %v1062 = vsel %vm1061, %v957, %v1060
      %vm1063 = vcmp.eq.f32.partialorder %v957, 0.0
      %v1064 = vand.u32 %v957, 2147483648
      %v1065 = vsel %vm1063, %v1064, %v1062
      %v1066 = vrsqrt.pop %v960
      %v1067 = vmul.f32 %v960, %v1066
      %vm1068 = vcmp.eq.f32.partialorder %v960, inf
      %v1069 = vsel %vm1068, %v960, %v1067
      %vm1070 = vcmp.eq.f32.partialorder %v960, 0.0
      %v1071 = vand.u32 %v960, 2147483648
      %v1072 = vsel %vm1070, %v1071, %v1069
      %v1073 = vrsqrt.pop %v963
      %v1074 = vmul.f32 %v963, %v1073
      %vm1075 = vcmp.eq.f32.partialorder %v963, inf
      %v1076 = vsel %vm1075, %v963, %v1074
      %vm1077 = vcmp.eq.f32.partialorder %v963, 0.0
      %v1078 = vand.u32 %v963, 2147483648
      %v1079 = vsel %vm1077, %v1078, %v1076
      %v1080 = vrsqrt.pop %v966
      %v1081 = vmul.f32 %v966, %v1080
      %vm1082 = vcmp.eq.f32.partialorder %v966, inf
      %v1083 = vsel %vm1082, %v966, %v1081
      %vm1084 = vcmp.eq.f32.partialorder %v966, 0.0
      %v1085 = vand.u32 %v966, 2147483648
      %v1086 = vsel %vm1084, %v1085, %v1083
      %v1087 = vrsqrt.pop %v969
      %v1088 = vmul.f32 %v969, %v1087
      %vm1089 = vcmp.eq.f32.partialorder %v969, inf
      %v1090 = vsel %vm1089, %v969, %v1088
      %vm1091 = vcmp.eq.f32.partialorder %v969, 0.0
      %v1092 = vand.u32 %v969, 2147483648
      %v1093 = vsel %vm1091, %v1092, %v1090
      %v1094 = vrsqrt.pop %v972
      %v1095 = vmul.f32 %v972, %v1094
      %vm1096 = vcmp.eq.f32.partialorder %v972, inf
      %v1097 = vsel %vm1096, %v972, %v1095
      %vm1098 = vcmp.eq.f32.partialorder %v972, 0.0
      %v1099 = vand.u32 %v972, 2147483648
      %v1100 = vsel %vm1098, %v1099, %v1097
      %v1101 = vrsqrt.pop %v975
      %v1102 = vmul.f32 %v975, %v1101
      %vm1103 = vcmp.eq.f32.partialorder %v975, inf
      %v1104 = vsel %vm1103, %v975, %v1102
      %vm1105 = vcmp.eq.f32.partialorder %v975, 0.0
      %v1106 = vand.u32 %v975, 2147483648
      %v1107 = vsel %vm1105, %v1106, %v1104
      %v1108 = vrsqrt.pop %v978
      %v1109 = vmul.f32 %v978, %v1108
      %vm1110 = vcmp.eq.f32.partialorder %v978, inf
      %v1111 = vsel %vm1110, %v978, %v1109
      %vm1112 = vcmp.eq.f32.partialorder %v978, 0.0
      %v1113 = vand.u32 %v978, 2147483648
      %v1114 = vsel %vm1112, %v1113, %v1111
      %v1115 = vrsqrt.pop %v981
      %v1116 = vmul.f32 %v981, %v1115
      %vm1117 = vcmp.eq.f32.partialorder %v981, inf
      %v1118 = vsel %vm1117, %v981, %v1116
      %vm1119 = vcmp.eq.f32.partialorder %v981, 0.0
      %v1120 = vand.u32 %v981, 2147483648
      %v1121 = vsel %vm1119, %v1120, %v1118
      %v1122 = vrsqrt.pop %v984
      %v1123 = vmul.f32 %v984, %v1122
      %vm1124 = vcmp.eq.f32.partialorder %v984, inf
      %v1125 = vsel %vm1124, %v984, %v1123
      %vm1126 = vcmp.eq.f32.partialorder %v984, 0.0
      %v1127 = vand.u32 %v984, 2147483648
      %v1128 = vsel %vm1126, %v1127, %v1125
      %v1129 = vrsqrt.pop %v987
      %v1130 = vmul.f32 %v987, %v1129
      %vm1131 = vcmp.eq.f32.partialorder %v987, inf
      %v1132 = vsel %vm1131, %v987, %v1130
      %vm1133 = vcmp.eq.f32.partialorder %v987, 0.0
      %v1134 = vand.u32 %v987, 2147483648
      %v1135 = vsel %vm1133, %v1134, %v1132
      %v1136 = vrsqrt.pop %v990
      %v1137 = vmul.f32 %v990, %v1136
      %vm1138 = vcmp.eq.f32.partialorder %v990, inf
      %v1139 = vsel %vm1138, %v990, %v1137
      %vm1140 = vcmp.eq.f32.partialorder %v990, 0.0
      %v1141 = vand.u32 %v990, 2147483648
      %v1142 = vsel %vm1140, %v1141, %v1139
      %v1143 = vrsqrt.pop %v993
      %v1144 = vmul.f32 %v993, %v1143
      %vm1145 = vcmp.eq.f32.partialorder %v993, inf
      %v1146 = vsel %vm1145, %v993, %v1144
      %vm1147 = vcmp.eq.f32.partialorder %v993, 0.0
      %v1148 = vand.u32 %v993, 2147483648
      %v1149 = vsel %vm1147, %v1148, %v1146
      %v1150 = vrsqrt.pop %v996
      %v1151 = vmul.f32 %v996, %v1150
      %vm1152 = vcmp.eq.f32.partialorder %v996, inf
      %v1153 = vsel %vm1152, %v996, %v1151
      %vm1154 = vcmp.eq.f32.partialorder %v996, 0.0
      %v1155 = vand.u32 %v996, 2147483648
      %v1156 = vsel %vm1154, %v1155, %v1153
      %v1157 = vrsqrt.pop %v999
      %v1158 = vmul.f32 %v999, %v1157
      %vm1159 = vcmp.eq.f32.partialorder %v999, inf
      %v1160 = vsel %vm1159, %v999, %v1158
      %vm1161 = vcmp.eq.f32.partialorder %v999, 0.0
      %v1162 = vand.u32 %v999, 2147483648
      %v1163 = vsel %vm1161, %v1162, %v1160
      %v1164 = vrsqrt.pop %v1002
      %v1165 = vmul.f32 %v1002, %v1164
      %vm1166 = vcmp.eq.f32.partialorder %v1002, inf
      %v1167 = vsel %vm1166, %v1002, %v1165
      %vm1168 = vcmp.eq.f32.partialorder %v1002, 0.0
      %v1169 = vand.u32 %v1002, 2147483648
      %v1170 = vsel %vm1168, %v1169, %v1167
      %v1171 = vrsqrt.pop %v1005
      %v1172 = vmul.f32 %v1005, %v1171
      %vm1173 = vcmp.eq.f32.partialorder %v1005, inf
      %v1174 = vsel %vm1173, %v1005, %v1172
      %vm1175 = vcmp.eq.f32.partialorder %v1005, 0.0
      %v1176 = vand.u32 %v1005, 2147483648
      %v1177 = vsel %vm1175, %v1176, %v1174
      %v1178 = vrsqrt.pop %v1008
      %v1179 = vmul.f32 %v1008, %v1178
      %vm1180 = vcmp.eq.f32.partialorder %v1008, inf
      %v1181 = vsel %vm1180, %v1008, %v1179
      %vm1182 = vcmp.eq.f32.partialorder %v1008, 0.0
      %v1183 = vand.u32 %v1008, 2147483648
      %v1184 = vsel %vm1182, %v1183, %v1181
      %v1185 = vrsqrt.pop %v1011
      %v1186 = vmul.f32 %v1011, %v1185
      %vm1187 = vcmp.eq.f32.partialorder %v1011, inf
      %v1188 = vsel %vm1187, %v1011, %v1186
      %vm1189 = vcmp.eq.f32.partialorder %v1011, 0.0
      %v1190 = vand.u32 %v1011, 2147483648
      %v1191 = vsel %vm1189, %v1190, %v1188
      %v1192 = vrsqrt.pop %v1014
      %v1193 = vmul.f32 %v1014, %v1192
      %vm1194 = vcmp.eq.f32.partialorder %v1014, inf
      %v1195 = vsel %vm1194, %v1014, %v1193
      %vm1196 = vcmp.eq.f32.partialorder %v1014, 0.0
      %v1197 = vand.u32 %v1014, 2147483648
      %v1198 = vsel %vm1196, %v1197, %v1195
      %v1199 = vrsqrt.pop %v1017
      %v1200 = vmul.f32 %v1017, %v1199
      %vm1201 = vcmp.eq.f32.partialorder %v1017, inf
      %v1202 = vsel %vm1201, %v1017, %v1200
      %vm1203 = vcmp.eq.f32.partialorder %v1017, 0.0
      %v1204 = vand.u32 %v1017, 2147483648
      %v1205 = vsel %vm1203, %v1204, %v1202
      %v1206 = vrsqrt.pop %v1020
      %v1207 = vmul.f32 %v1020, %v1206
      %vm1208 = vcmp.eq.f32.partialorder %v1020, inf
      %v1209 = vsel %vm1208, %v1020, %v1207
      %vm1210 = vcmp.eq.f32.partialorder %v1020, 0.0
      %v1211 = vand.u32 %v1020, 2147483648
      %v1212 = vsel %vm1210, %v1211, %v1209
      %v1213 = vrsqrt.pop %v1023
      %v1214 = vmul.f32 %v1023, %v1213
      %vm1215 = vcmp.eq.f32.partialorder %v1023, inf
      %v1216 = vsel %vm1215, %v1023, %v1214
      %vm1217 = vcmp.eq.f32.partialorder %v1023, 0.0
      %v1218 = vand.u32 %v1023, 2147483648
      %v1219 = vsel %vm1217, %v1218, %v1216
      %v1220 = vrsqrt.pop %v1026
      %v1221 = vmul.f32 %v1026, %v1220
      %vm1222 = vcmp.eq.f32.partialorder %v1026, inf
      %v1223 = vsel %vm1222, %v1026, %v1221
      %vm1224 = vcmp.eq.f32.partialorder %v1026, 0.0
      %v1225 = vand.u32 %v1026, 2147483648
      %v1226 = vsel %vm1224, %v1225, %v1223
      %v1227 = vrsqrt.pop %v1029
      %v1228 = vmul.f32 %v1029, %v1227
      %vm1229 = vcmp.eq.f32.partialorder %v1029, inf
      %v1230 = vsel %vm1229, %v1029, %v1228
      %vm1231 = vcmp.eq.f32.partialorder %v1029, 0.0
      %v1232 = vand.u32 %v1029, 2147483648
      %v1233 = vsel %vm1231, %v1232, %v1230
      %v1234 = vrsqrt.pop %v1032
      %v1235 = vmul.f32 %v1032, %v1234
      %vm1236 = vcmp.eq.f32.partialorder %v1032, inf
      %v1237 = vsel %vm1236, %v1032, %v1235
      %vm1238 = vcmp.eq.f32.partialorder %v1032, 0.0
      %v1239 = vand.u32 %v1032, 2147483648
      %v1240 = vsel %vm1238, %v1239, %v1237
      %v1241 = vrsqrt.pop %v1035
      %v1242 = vmul.f32 %v1035, %v1241
      %vm1243 = vcmp.eq.f32.partialorder %v1035, inf
      %v1244 = vsel %vm1243, %v1035, %v1242
      %vm1245 = vcmp.eq.f32.partialorder %v1035, 0.0
      %v1246 = vand.u32 %v1035, 2147483648
      %v1247 = vsel %vm1245, %v1246, %v1244
      %v1248 = vrsqrt.pop %v1038
      %v1249 = vmul.f32 %v1038, %v1248
      %vm1250 = vcmp.eq.f32.partialorder %v1038, inf
      %v1251 = vsel %vm1250, %v1038, %v1249
      %vm1252 = vcmp.eq.f32.partialorder %v1038, 0.0
      %v1253 = vand.u32 %v1038, 2147483648
      %v1254 = vsel %vm1252, %v1253, %v1251
      %v1255 = vrsqrt.pop %v1041
      %v1256 = vmul.f32 %v1041, %v1255
      %vm1257 = vcmp.eq.f32.partialorder %v1041, inf
      %v1258 = vsel %vm1257, %v1041, %v1256
      %vm1259 = vcmp.eq.f32.partialorder %v1041, 0.0
      %v1260 = vand.u32 %v1041, 2147483648
      %v1261 = vsel %vm1259, %v1260, %v1258
      %v1262 = vrsqrt.pop %v1044
      %v1263 = vmul.f32 %v1044, %v1262
      %vm1264 = vcmp.eq.f32.partialorder %v1044, inf
      %v1265 = vsel %vm1264, %v1044, %v1263
      %vm1266 = vcmp.eq.f32.partialorder %v1044, 0.0
      %v1267 = vand.u32 %v1044, 2147483648
      %v1268 = vsel %vm1266, %v1267, %v1265
      %v1269 = vmax.f32 %v1051, 1e-15
      %v1270 = vmax.f32 %v1058, 1e-15
      %v1271 = vmax.f32 %v1065, 1e-15
      %v1272 = vmax.f32 %v1072, 1e-15
      %v1273 = vmax.f32 %v1079, 1e-15
      %v1274 = vmax.f32 %v1086, 1e-15
      %v1275 = vmax.f32 %v1093, 1e-15
      %v1276 = vmax.f32 %v1100, 1e-15
      %v1277 = vmax.f32 %v1107, 1e-15
      %v1278 = vmax.f32 %v1114, 1e-15
      %v1279 = vmax.f32 %v1121, 1e-15
      %v1280 = vmax.f32 %v1128, 1e-15
      %v1281 = vmax.f32 %v1135, 1e-15
      %v1282 = vmax.f32 %v1142, 1e-15
      %v1283 = vmax.f32 %v1149, 1e-15
      %v1284 = vmax.f32 %v1156, 1e-15
      %v1285 = vmax.f32 %v1163, 1e-15
      %v1286 = vmax.f32 %v1170, 1e-15
      %v1287 = vmax.f32 %v1177, 1e-15
      %v1288 = vmax.f32 %v1184, 1e-15
      %v1289 = vmax.f32 %v1191, 1e-15
      %v1290 = vmax.f32 %v1198, 1e-15
      %v1291 = vmax.f32 %v1205, 1e-15
      %v1292 = vmax.f32 %v1212, 1e-15
      %v1293 = vmax.f32 %v1219, 1e-15
      %v1294 = vmax.f32 %v1226, 1e-15
      %v1295 = vmax.f32 %v1233, 1e-15
      %v1296 = vmax.f32 %v1240, 1e-15
      %v1297 = vmax.f32 %v1247, 1e-15
      %v1298 = vmax.f32 %v1254, 1e-15
      %v1299 = vmax.f32 %v1261, 1e-15
      %v1300 = vmax.f32 %v1268, 1e-15
      %v1301 = vrcp.pop %v564
      %v1302 = vmul.f32 %v1269, %v1301
      %v1303 = vrcp.pop %v565
      %v1304 = vmul.f32 %v1270, %v1303
      %v1305 = vrcp.pop %v566
      %v1306 = vmul.f32 %v1271, %v1305
      %v1307 = vrcp.pop %v567
      %v1308 = vmul.f32 %v1272, %v1307
      %v1309 = vrcp.pop %v568
      %v1310 = vmul.f32 %v1273, %v1309
      %v1311 = vrcp.pop %v569
      %v1312 = vmul.f32 %v1274, %v1311
      %v1313 = vrcp.pop %v570
      %v1314 = vmul.f32 %v1275, %v1313
      %v1315 = vrcp.pop %v571
      %v1316 = vmul.f32 %v1276, %v1315
      %v1317 = vrcp.pop %v572
      %v1318 = vmul.f32 %v1277, %v1317
      %v1319 = vrcp.pop %v573
      %v1320 = vmul.f32 %v1278, %v1319
      %v1321 = vrcp.pop %v574
      %v1322 = vmul.f32 %v1279, %v1321
      %v1323 = vrcp.pop %v575
      %v1324 = vmul.f32 %v1280, %v1323
      %v1325 = vrcp.pop %v576
      %v1326 = vmul.f32 %v1281, %v1325
      %v1327 = vrcp.pop %v577
      %v1328 = vmul.f32 %v1282, %v1327
      %v1329 = vrcp.pop %v578
      %v1330 = vmul.f32 %v1283, %v1329
      %v1331 = vrcp.pop %v579
      %v1332 = vmul.f32 %v1284, %v1331
      %v1333 = vrcp.pop %v580
      %v1334 = vmul.f32 %v1285, %v1333
      %v1335 = vrcp.pop %v581
      %v1336 = vmul.f32 %v1286, %v1335
      %v1337 = vrcp.pop %v582
      %v1338 = vmul.f32 %v1287, %v1337
      %v1339 = vrcp.pop %v583
      %v1340 = vmul.f32 %v1288, %v1339
      %v1341 = vrcp.pop %v584
      %v1342 = vmul.f32 %v1289, %v1341
      %v1343 = vrcp.pop %v585
      %v1344 = vmul.f32 %v1290, %v1343
      %v1345 = vrcp.pop %v586
      %v1346 = vmul.f32 %v1291, %v1345
      %v1347 = vrcp.pop %v587
      %v1348 = vmul.f32 %v1292, %v1347
      %v1349 = vrcp.pop %v588
      %v1350 = vmul.f32 %v1293, %v1349
      %v1351 = vrcp.pop %v589
      %v1352 = vmul.f32 %v1294, %v1351
      %v1353 = vrcp.pop %v590
      %v1354 = vmul.f32 %v1295, %v1353
      %v1355 = vrcp.pop %v591
      %v1356 = vmul.f32 %v1296, %v1355
      %v1357 = vrcp.pop %v592
      %v1358 = vmul.f32 %v1297, %v1357
      %v1359 = vrcp.pop %v593
      %v1360 = vmul.f32 %v1298, %v1359
      %v1361 = vrcp.pop %v594
      %v1362 = vmul.f32 %v1299, %v1361
      %v1363 = vrcp.pop %v595
      %v1364 = vmul.f32 %v1300, %v1363
      %v1365 = vmax.f32 %v564, -1.0
      %v1366 = vmax.f32 %v565, -1.0
      %v1367 = vmax.f32 %v566, -1.0
      %v1368 = vmax.f32 %v567, -1.0
      %v1369 = vmax.f32 %v568, -1.0
      %v1370 = vmax.f32 %v569, -1.0
      %v1371 = vmax.f32 %v570, -1.0
      %v1372 = vmax.f32 %v571, -1.0
      %v1373 = vmax.f32 %v572, -1.0
      %v1374 = vmax.f32 %v573, -1.0
      %v1375 = vmax.f32 %v574, -1.0
      %v1376 = vmax.f32 %v575, -1.0
      %v1377 = vmax.f32 %v576, -1.0
      %v1378 = vmax.f32 %v577, -1.0
      %v1379 = vmax.f32 %v578, -1.0
      %v1380 = vmax.f32 %v579, -1.0
      %v1381 = vmax.f32 %v580, -1.0
      %v1382 = vmax.f32 %v581, -1.0
      %v1383 = vmax.f32 %v582, -1.0
      %v1384 = vmax.f32 %v583, -1.0
      %v1385 = vmax.f32 %v584, -1.0
      %v1386 = vmax.f32 %v585, -1.0
      %v1387 = vmax.f32 %v586, -1.0
      %v1388 = vmax.f32 %v587, -1.0
      %v1389 = vmax.f32 %v588, -1.0
      %v1390 = vmax.f32 %v589, -1.0
      %v1391 = vmax.f32 %v590, -1.0
      %v1392 = vmax.f32 %v591, -1.0
      %v1393 = vmax.f32 %v592, -1.0
      %v1394 = vmax.f32 %v593, -1.0
      %v1395 = vmax.f32 %v594, -1.0
      %v1396 = vmax.f32 %v595, -1.0
      %v1397 = vmin.f32 %v1365, 1.0
      %v1398 = vmin.f32 %v1366, 1.0
      %v1399 = vmin.f32 %v1367, 1.0
      %v1400 = vmin.f32 %v1368, 1.0
      %v1401 = vmin.f32 %v1369, 1.0
      %v1402 = vmin.f32 %v1370, 1.0
      %v1403 = vmin.f32 %v1371, 1.0
      %v1404 = vmin.f32 %v1372, 1.0
      %v1405 = vmin.f32 %v1373, 1.0
      %v1406 = vmin.f32 %v1374, 1.0
      %v1407 = vmin.f32 %v1375, 1.0
      %v1408 = vmin.f32 %v1376, 1.0
      %v1409 = vmin.f32 %v1377, 1.0
      %v1410 = vmin.f32 %v1378, 1.0
      %v1411 = vmin.f32 %v1379, 1.0
      %v1412 = vmin.f32 %v1380, 1.0
      %v1413 = vmin.f32 %v1381, 1.0
      %v1414 = vmin.f32 %v1382, 1.0
      %v1415 = vmin.f32 %v1383, 1.0
      %v1416 = vmin.f32 %v1384, 1.0
      %v1417 = vmin.f32 %v1385, 1.0
      %v1418 = vmin.f32 %v1386, 1.0
      %v1419 = vmin.f32 %v1387, 1.0
      %v1420 = vmin.f32 %v1388, 1.0
      %v1421 = vmin.f32 %v1389, 1.0
      %v1422 = vmin.f32 %v1390, 1.0
      %v1423 = vmin.f32 %v1391, 1.0
      %v1424 = vmin.f32 %v1392, 1.0
      %v1425 = vmin.f32 %v1393, 1.0
      %v1426 = vmin.f32 %v1394, 1.0
      %v1427 = vmin.f32 %v1395, 1.0
      %v1428 = vmin.f32 %v1396, 1.0
      %v1429 = vadd.f32 %v1397, 1.0
      %v1430 = vlog2.pop %v1429
      %v1431 = vmul.f32 %v1430, 0.6931472
      %v1432 = vmul.f32 -0.5, %v1397
      %v1433 = vadd.f32 %v1432, 1.0
      %v1434 = vmul.f32 %v1433, %v1397
      %v1435 = vand.u32 2147483647, %v1397
      %vm1436 = vcmp.lt.f32.partialorder %v1435, 0.0004427343
      %v1437 = vsel %vm1436, %v1434, %v1431
      %v1438 = vadd.f32 %v1398, 1.0
      %v1439 = vlog2.pop %v1438
      %v1440 = vmul.f32 %v1439, 0.6931472
      %v1441 = vmul.f32 -0.5, %v1398
      %v1442 = vadd.f32 %v1441, 1.0
      %v1443 = vmul.f32 %v1442, %v1398
      %v1444 = vand.u32 2147483647, %v1398
      %vm1445 = vcmp.lt.f32.partialorder %v1444, 0.0004427343
      %v1446 = vsel %vm1445, %v1443, %v1440
      %v1447 = vadd.f32 %v1399, 1.0
      %v1448 = vlog2.pop %v1447
      %v1449 = vmul.f32 %v1448, 0.6931472
      %v1450 = vmul.f32 -0.5, %v1399
      %v1451 = vadd.f32 %v1450, 1.0
      %v1452 = vmul.f32 %v1451, %v1399
      %v1453 = vand.u32 2147483647, %v1399
      %vm1454 = vcmp.lt.f32.partialorder %v1453, 0.0004427343
      %v1455 = vsel %vm1454, %v1452, %v1449
      %v1456 = vadd.f32 %v1400, 1.0
      %v1457 = vlog2.pop %v1456
      %v1458 = vmul.f32 %v1457, 0.6931472
      %v1459 = vmul.f32 -0.5, %v1400
      %v1460 = vadd.f32 %v1459, 1.0
      %v1461 = vmul.f32 %v1460, %v1400
      %v1462 = vand.u32 2147483647, %v1400
      %vm1463 = vcmp.lt.f32.partialorder %v1462, 0.0004427343
      %v1464 = vsel %vm1463, %v1461, %v1458
      %v1465 = vadd.f32 %v1401, 1.0
      %v1466 = vlog2.pop %v1465
      %v1467 = vmul.f32 %v1466, 0.6931472
      %v1468 = vmul.f32 -0.5, %v1401
      %v1469 = vadd.f32 %v1468, 1.0
      %v1470 = vmul.f32 %v1469, %v1401
      %v1471 = vand.u32 2147483647, %v1401
      %vm1472 = vcmp.lt.f32.partialorder %v1471, 0.0004427343
      %v1473 = vsel %vm1472, %v1470, %v1467
      %v1474 = vadd.f32 %v1402, 1.0
      %v1475 = vlog2.pop %v1474
      %v1476 = vmul.f32 %v1475, 0.6931472
      %v1477 = vmul.f32 -0.5, %v1402
      %v1478 = vadd.f32 %v1477, 1.0
      %v1479 = vmul.f32 %v1478, %v1402
      %v1480 = vand.u32 2147483647, %v1402
      %vm1481 = vcmp.lt.f32.partialorder %v1480, 0.0004427343
      %v1482 = vsel %vm1481, %v1479, %v1476
      %v1483 = vadd.f32 %v1403, 1.0
      %v1484 = vlog2.pop %v1483
      %v1485 = vmul.f32 %v1484, 0.6931472
      %v1486 = vmul.f32 -0.5, %v1403
      %v1487 = vadd.f32 %v1486, 1.0
      %v1488 = vmul.f32 %v1487, %v1403
      %v1489 = vand.u32 2147483647, %v1403
      %vm1490 = vcmp.lt.f32.partialorder %v1489, 0.0004427343
      %v1491 = vsel %vm1490, %v1488, %v1485
      %v1492 = vadd.f32 %v1404, 1.0
      %v1493 = vlog2.pop %v1492
      %v1494 = vmul.f32 %v1493, 0.6931472
      %v1495 = vmul.f32 -0.5, %v1404
      %v1496 = vadd.f32 %v1495, 1.0
      %v1497 = vmul.f32 %v1496, %v1404
      %v1498 = vand.u32 2147483647, %v1404
      %vm1499 = vcmp.lt.f32.partialorder %v1498, 0.0004427343
      %v1500 = vsel %vm1499, %v1497, %v1494
      %v1501 = vadd.f32 %v1405, 1.0
      %v1502 = vlog2.pop %v1501
      %v1503 = vmul.f32 %v1502, 0.6931472
      %v1504 = vmul.f32 -0.5, %v1405
      %v1505 = vadd.f32 %v1504, 1.0
      %v1506 = vmul.f32 %v1505, %v1405
      %v1507 = vand.u32 2147483647, %v1405
      %vm1508 = vcmp.lt.f32.partialorder %v1507, 0.0004427343
      %v1509 = vsel %vm1508, %v1506, %v1503
      %v1510 = vadd.f32 %v1406, 1.0
      %v1511 = vlog2.pop %v1510
      %v1512 = vmul.f32 %v1511, 0.6931472
      %v1513 = vmul.f32 -0.5, %v1406
      %v1514 = vadd.f32 %v1513, 1.0
      %v1515 = vmul.f32 %v1514, %v1406
      %v1516 = vand.u32 2147483647, %v1406
      %vm1517 = vcmp.lt.f32.partialorder %v1516, 0.0004427343
      %v1518 = vsel %vm1517, %v1515, %v1512
      %v1519 = vadd.f32 %v1407, 1.0
      %v1520 = vlog2.pop %v1519
      %v1521 = vmul.f32 %v1520, 0.6931472
      %v1522 = vmul.f32 -0.5, %v1407
      %v1523 = vadd.f32 %v1522, 1.0
      %v1524 = vmul.f32 %v1523, %v1407
      %v1525 = vand.u32 2147483647, %v1407
      %vm1526 = vcmp.lt.f32.partialorder %v1525, 0.0004427343
      %v1527 = vsel %vm1526, %v1524, %v1521
      %v1528 = vadd.f32 %v1408, 1.0
      %v1529 = vlog2.pop %v1528
      %v1530 = vmul.f32 %v1529, 0.6931472
      %v1531 = vmul.f32 -0.5, %v1408
      %v1532 = vadd.f32 %v1531, 1.0
      %v1533 = vmul.f32 %v1532, %v1408
      %v1534 = vand.u32 2147483647, %v1408
      %vm1535 = vcmp.lt.f32.partialorder %v1534, 0.0004427343
      %v1536 = vsel %vm1535, %v1533, %v1530
      %v1537 = vadd.f32 %v1409, 1.0
      %v1538 = vlog2.pop %v1537
      %v1539 = vmul.f32 %v1538, 0.6931472
      %v1540 = vmul.f32 -0.5, %v1409
      %v1541 = vadd.f32 %v1540, 1.0
      %v1542 = vmul.f32 %v1541, %v1409
      %v1543 = vand.u32 2147483647, %v1409
      %vm1544 = vcmp.lt.f32.partialorder %v1543, 0.0004427343
      %v1545 = vsel %vm1544, %v1542, %v1539
      %v1546 = vadd.f32 %v1410, 1.0
      %v1547 = vlog2.pop %v1546
      %v1548 = vmul.f32 %v1547, 0.6931472
      %v1549 = vmul.f32 -0.5, %v1410
      %v1550 = vadd.f32 %v1549, 1.0
      %v1551 = vmul.f32 %v1550, %v1410
      %v1552 = vand.u32 2147483647, %v1410
      %vm1553 = vcmp.lt.f32.partialorder %v1552, 0.0004427343
      %v1554 = vsel %vm1553, %v1551, %v1548
      %v1555 = vadd.f32 %v1411, 1.0
      %v1556 = vlog2.pop %v1555
      %v1557 = vmul.f32 %v1556, 0.6931472
      %v1558 = vmul.f32 -0.5, %v1411
      %v1559 = vadd.f32 %v1558, 1.0
      %v1560 = vmul.f32 %v1559, %v1411
      %v1561 = vand.u32 2147483647, %v1411
      %vm1562 = vcmp.lt.f32.partialorder %v1561, 0.0004427343
      %v1563 = vsel %vm1562, %v1560, %v1557
      %v1564 = vadd.f32 %v1412, 1.0
      %v1565 = vlog2.pop %v1564
      %v1566 = vmul.f32 %v1565, 0.6931472
      %v1567 = vmul.f32 -0.5, %v1412
      %v1568 = vadd.f32 %v1567, 1.0
      %v1569 = vmul.f32 %v1568, %v1412
      %v1570 = vand.u32 2147483647, %v1412
      %vm1571 = vcmp.lt.f32.partialorder %v1570, 0.0004427343
      %v1572 = vsel %vm1571, %v1569, %v1566
      %v1573 = vadd.f32 %v1413, 1.0
      %v1574 = vlog2.pop %v1573
      %v1575 = vmul.f32 %v1574, 0.6931472
      %v1576 = vmul.f32 -0.5, %v1413
      %v1577 = vadd.f32 %v1576, 1.0
      %v1578 = vmul.f32 %v1577, %v1413
      %v1579 = vand.u32 2147483647, %v1413
      %vm1580 = vcmp.lt.f32.partialorder %v1579, 0.0004427343
      %v1581 = vsel %vm1580, %v1578, %v1575
      %v1582 = vadd.f32 %v1414, 1.0
      %v1583 = vlog2.pop %v1582
      %v1584 = vmul.f32 %v1583, 0.6931472
      %v1585 = vmul.f32 -0.5, %v1414
      %v1586 = vadd.f32 %v1585, 1.0
      %v1587 = vmul.f32 %v1586, %v1414
      %v1588 = vand.u32 2147483647, %v1414
      %vm1589 = vcmp.lt.f32.partialorder %v1588, 0.0004427343
      %v1590 = vsel %vm1589, %v1587, %v1584
      %v1591 = vadd.f32 %v1415, 1.0
      %v1592 = vlog2.pop %v1591
      %v1593 = vmul.f32 %v1592, 0.6931472
      %v1594 = vmul.f32 -0.5, %v1415
      %v1595 = vadd.f32 %v1594, 1.0
      %v1596 = vmul.f32 %v1595, %v1415
      %v1597 = vand.u32 2147483647, %v1415
      %vm1598 = vcmp.lt.f32.partialorder %v1597, 0.0004427343
      %v1599 = vsel %vm1598, %v1596, %v1593
      %v1600 = vadd.f32 %v1416, 1.0
      %v1601 = vlog2.pop %v1600
      %v1602 = vmul.f32 %v1601, 0.6931472
      %v1603 = vmul.f32 -0.5, %v1416
      %v1604 = vadd.f32 %v1603, 1.0
      %v1605 = vmul.f32 %v1604, %v1416
      %v1606 = vand.u32 2147483647, %v1416
      %vm1607 = vcmp.lt.f32.partialorder %v1606, 0.0004427343
      %v1608 = vsel %vm1607, %v1605, %v1602
      %v1609 = vadd.f32 %v1417, 1.0
      %v1610 = vlog2.pop %v1609
      %v1611 = vmul.f32 %v1610, 0.6931472
      %v1612 = vmul.f32 -0.5, %v1417
      %v1613 = vadd.f32 %v1612, 1.0
      %v1614 = vmul.f32 %v1613, %v1417
      %v1615 = vand.u32 2147483647, %v1417
      %vm1616 = vcmp.lt.f32.partialorder %v1615, 0.0004427343
      %v1617 = vsel %vm1616, %v1614, %v1611
      %v1618 = vadd.f32 %v1418, 1.0
      %v1619 = vlog2.pop %v1618
      %v1620 = vmul.f32 %v1619, 0.6931472
      %v1621 = vmul.f32 -0.5, %v1418
      %v1622 = vadd.f32 %v1621, 1.0
      %v1623 = vmul.f32 %v1622, %v1418
      %v1624 = vand.u32 2147483647, %v1418
      %vm1625 = vcmp.lt.f32.partialorder %v1624, 0.0004427343
      %v1626 = vsel %vm1625, %v1623, %v1620
      %v1627 = vadd.f32 %v1419, 1.0
      %v1628 = vlog2.pop %v1627
      %v1629 = vmul.f32 %v1628, 0.6931472
      %v1630 = vmul.f32 -0.5, %v1419
      %v1631 = vadd.f32 %v1630, 1.0
      %v1632 = vmul.f32 %v1631, %v1419
      %v1633 = vand.u32 2147483647, %v1419
      %vm1634 = vcmp.lt.f32.partialorder %v1633, 0.0004427343
      %v1635 = vsel %vm1634, %v1632, %v1629
      %v1636 = vadd.f32 %v1420, 1.0
      %v1637 = vlog2.pop %v1636
      %v1638 = vmul.f32 %v1637, 0.6931472
      %v1639 = vmul.f32 -0.5, %v1420
      %v1640 = vadd.f32 %v1639, 1.0
      %v1641 = vmul.f32 %v1640, %v1420
      %v1642 = vand.u32 2147483647, %v1420
      %vm1643 = vcmp.lt.f32.partialorder %v1642, 0.0004427343
      %v1644 = vsel %vm1643, %v1641, %v1638
      %v1645 = vadd.f32 %v1421, 1.0
      %v1646 = vlog2.pop %v1645
      %v1647 = vmul.f32 %v1646, 0.6931472
      %v1648 = vmul.f32 -0.5, %v1421
      %v1649 = vadd.f32 %v1648, 1.0
      %v1650 = vmul.f32 %v1649, %v1421
      %v1651 = vand.u32 2147483647, %v1421
      %vm1652 = vcmp.lt.f32.partialorder %v1651, 0.0004427343
      %v1653 = vsel %vm1652, %v1650, %v1647
      %v1654 = vadd.f32 %v1422, 1.0
      %v1655 = vlog2.pop %v1654
      %v1656 = vmul.f32 %v1655, 0.6931472
      %v1657 = vmul.f32 -0.5, %v1422
      %v1658 = vadd.f32 %v1657, 1.0
      %v1659 = vmul.f32 %v1658, %v1422
      %v1660 = vand.u32 2147483647, %v1422
      %vm1661 = vcmp.lt.f32.partialorder %v1660, 0.0004427343
      %v1662 = vsel %vm1661, %v1659, %v1656
      %v1663 = vadd.f32 %v1423, 1.0
      %v1664 = vlog2.pop %v1663
      %v1665 = vmul.f32 %v1664, 0.6931472
      %v1666 = vmul.f32 -0.5, %v1423
      %v1667 = vadd.f32 %v1666, 1.0
      %v1668 = vmul.f32 %v1667, %v1423
      %v1669 = vand.u32 2147483647, %v1423
      %vm1670 = vcmp.lt.f32.partialorder %v1669, 0.0004427343
      %v1671 = vsel %vm1670, %v1668, %v1665
      %v1672 = vadd.f32 %v1424, 1.0
      %v1673 = vlog2.pop %v1672
      %v1674 = vmul.f32 %v1673, 0.6931472
      %v1675 = vmul.f32 -0.5, %v1424
      %v1676 = vadd.f32 %v1675, 1.0
      %v1677 = vmul.f32 %v1676, %v1424
      %v1678 = vand.u32 2147483647, %v1424
      %vm1679 = vcmp.lt.f32.partialorder %v1678, 0.0004427343
      %v1680 = vsel %vm1679, %v1677, %v1674
      %v1681 = vadd.f32 %v1425, 1.0
      %v1682 = vlog2.pop %v1681
      %v1683 = vmul.f32 %v1682, 0.6931472
      %v1684 = vmul.f32 -0.5, %v1425
      %v1685 = vadd.f32 %v1684, 1.0
      %v1686 = vmul.f32 %v1685, %v1425
      %v1687 = vand.u32 2147483647, %v1425
      %vm1688 = vcmp.lt.f32.partialorder %v1687, 0.0004427343
      %v1689 = vsel %vm1688, %v1686, %v1683
      %v1690 = vadd.f32 %v1426, 1.0
      %v1691 = vlog2.pop %v1690
      %v1692 = vmul.f32 %v1691, 0.6931472
      %v1693 = vmul.f32 -0.5, %v1426
      %v1694 = vadd.f32 %v1693, 1.0
      %v1695 = vmul.f32 %v1694, %v1426
      %v1696 = vand.u32 2147483647, %v1426
      %vm1697 = vcmp.lt.f32.partialorder %v1696, 0.0004427343
      %v1698 = vsel %vm1697, %v1695, %v1692
      %v1699 = vadd.f32 %v1427, 1.0
      %v1700 = vlog2.pop %v1699
      %v1701 = vmul.f32 %v1700, 0.6931472
      %v1702 = vmul.f32 -0.5, %v1427
      %v1703 = vadd.f32 %v1702, 1.0
      %v1704 = vmul.f32 %v1703, %v1427
      %v1705 = vand.u32 2147483647, %v1427
      %vm1706 = vcmp.lt.f32.partialorder %v1705, 0.0004427343
      %v1707 = vsel %vm1706, %v1704, %v1701
      %v1708 = vadd.f32 %v1428, 1.0
      %v1709 = vlog2.pop %v1708
      %v1710 = vmul.f32 %v1709, 0.6931472
      %v1711 = vmul.f32 -0.5, %v1428
      %v1712 = vadd.f32 %v1711, 1.0
      %v1713 = vmul.f32 %v1712, %v1428
      %v1714 = vand.u32 2147483647, %v1428
      %vm1715 = vcmp.lt.f32.partialorder %v1714, 0.0004427343
      %v1716 = vsel %vm1715, %v1713, %v1710
      %v1717 = vsub.f32 0.0, %v1397
      %v1718 = vsub.f32 0.0, %v1398
      %v1719 = vsub.f32 0.0, %v1399
      %v1720 = vsub.f32 0.0, %v1400
      %v1721 = vsub.f32 0.0, %v1401
      %v1722 = vsub.f32 0.0, %v1402
      %v1723 = vsub.f32 0.0, %v1403
      %v1724 = vsub.f32 0.0, %v1404
      %v1725 = vsub.f32 0.0, %v1405
      %v1726 = vsub.f32 0.0, %v1406
      %v1727 = vsub.f32 0.0, %v1407
      %v1728 = vsub.f32 0.0, %v1408
      %v1729 = vsub.f32 0.0, %v1409
      %v1730 = vsub.f32 0.0, %v1410
      %v1731 = vsub.f32 0.0, %v1411
      %v1732 = vsub.f32 0.0, %v1412
      %v1733 = vsub.f32 0.0, %v1413
      %v1734 = vsub.f32 0.0, %v1414
      %v1735 = vsub.f32 0.0, %v1415
      %v1736 = vsub.f32 0.0, %v1416
      %v1737 = vsub.f32 0.0, %v1417
      %v1738 = vsub.f32 0.0, %v1418
      %v1739 = vsub.f32 0.0, %v1419
      %v1740 = vsub.f32 0.0, %v1420
      %v1741 = vsub.f32 0.0, %v1421
      %v1742 = vsub.f32 0.0, %v1422
      %v1743 = vsub.f32 0.0, %v1423
      %v1744 = vsub.f32 0.0, %v1424
      %v1745 = vsub.f32 0.0, %v1425
      %v1746 = vsub.f32 0.0, %v1426
      %v1747 = vsub.f32 0.0, %v1427
      %v1748 = vsub.f32 0.0, %v1428
      %v1749 = vadd.f32 %v1717, 1.0
      %v1750 = vlog2.pop %v1749
      %v1751 = vmul.f32 %v1750, 0.6931472
      %v1752 = vmul.f32 -0.5, %v1717
      %v1753 = vadd.f32 %v1752, 1.0
      %v1754 = vmul.f32 %v1753, %v1717
      %v1755 = vand.u32 2147483647, %v1717
      %vm1756 = vcmp.lt.f32.partialorder %v1755, 0.0004427343
      %v1757 = vsel %vm1756, %v1754, %v1751
      %v1758 = vadd.f32 %v1718, 1.0
      %v1759 = vlog2.pop %v1758
      %v1760 = vmul.f32 %v1759, 0.6931472
      %v1761 = vmul.f32 -0.5, %v1718
      %v1762 = vadd.f32 %v1761, 1.0
      %v1763 = vmul.f32 %v1762, %v1718
      %v1764 = vand.u32 2147483647, %v1718
      %vm1765 = vcmp.lt.f32.partialorder %v1764, 0.0004427343
      %v1766 = vsel %vm1765, %v1763, %v1760
      %v1767 = vadd.f32 %v1719, 1.0
      %v1768 = vlog2.pop %v1767
      %v1769 = vmul.f32 %v1768, 0.6931472
      %v1770 = vmul.f32 -0.5, %v1719
      %v1771 = vadd.f32 %v1770, 1.0
      %v1772 = vmul.f32 %v1771, %v1719
      %v1773 = vand.u32 2147483647, %v1719
      %vm1774 = vcmp.lt.f32.partialorder %v1773, 0.0004427343
      %v1775 = vsel %vm1774, %v1772, %v1769
      %v1776 = vadd.f32 %v1720, 1.0
      %v1777 = vlog2.pop %v1776
      %v1778 = vmul.f32 %v1777, 0.6931472
      %v1779 = vmul.f32 -0.5, %v1720
      %v1780 = vadd.f32 %v1779, 1.0
      %v1781 = vmul.f32 %v1780, %v1720
      %v1782 = vand.u32 2147483647, %v1720
      %vm1783 = vcmp.lt.f32.partialorder %v1782, 0.0004427343
      %v1784 = vsel %vm1783, %v1781, %v1778
      %v1785 = vadd.f32 %v1721, 1.0
      %v1786 = vlog2.pop %v1785
      %v1787 = vmul.f32 %v1786, 0.6931472
      %v1788 = vmul.f32 -0.5, %v1721
      %v1789 = vadd.f32 %v1788, 1.0
      %v1790 = vmul.f32 %v1789, %v1721
      %v1791 = vand.u32 2147483647, %v1721
      %vm1792 = vcmp.lt.f32.partialorder %v1791, 0.0004427343
      %v1793 = vsel %vm1792, %v1790, %v1787
      %v1794 = vadd.f32 %v1722, 1.0
      %v1795 = vlog2.pop %v1794
      %v1796 = vmul.f32 %v1795, 0.6931472
      %v1797 = vmul.f32 -0.5, %v1722
      %v1798 = vadd.f32 %v1797, 1.0
      %v1799 = vmul.f32 %v1798, %v1722
      %v1800 = vand.u32 2147483647, %v1722
      %vm1801 = vcmp.lt.f32.partialorder %v1800, 0.0004427343
      %v1802 = vsel %vm1801, %v1799, %v1796
      %v1803 = vadd.f32 %v1723, 1.0
      %v1804 = vlog2.pop %v1803
      %v1805 = vmul.f32 %v1804, 0.6931472
      %v1806 = vmul.f32 -0.5, %v1723
      %v1807 = vadd.f32 %v1806, 1.0
      %v1808 = vmul.f32 %v1807, %v1723
      %v1809 = vand.u32 2147483647, %v1723
      %vm1810 = vcmp.lt.f32.partialorder %v1809, 0.0004427343
      %v1811 = vsel %vm1810, %v1808, %v1805
      %v1812 = vadd.f32 %v1724, 1.0
      %v1813 = vlog2.pop %v1812
      %v1814 = vmul.f32 %v1813, 0.6931472
      %v1815 = vmul.f32 -0.5, %v1724
      %v1816 = vadd.f32 %v1815, 1.0
      %v1817 = vmul.f32 %v1816, %v1724
      %v1818 = vand.u32 2147483647, %v1724
      %vm1819 = vcmp.lt.f32.partialorder %v1818, 0.0004427343
      %v1820 = vsel %vm1819, %v1817, %v1814
      %v1821 = vadd.f32 %v1725, 1.0
      %v1822 = vlog2.pop %v1821
      %v1823 = vmul.f32 %v1822, 0.6931472
      %v1824 = vmul.f32 -0.5, %v1725
      %v1825 = vadd.f32 %v1824, 1.0
      %v1826 = vmul.f32 %v1825, %v1725
      %v1827 = vand.u32 2147483647, %v1725
      %vm1828 = vcmp.lt.f32.partialorder %v1827, 0.0004427343
      %v1829 = vsel %vm1828, %v1826, %v1823
      %v1830 = vadd.f32 %v1726, 1.0
      %v1831 = vlog2.pop %v1830
      %v1832 = vmul.f32 %v1831, 0.6931472
      %v1833 = vmul.f32 -0.5, %v1726
      %v1834 = vadd.f32 %v1833, 1.0
      %v1835 = vmul.f32 %v1834, %v1726
      %v1836 = vand.u32 2147483647, %v1726
      %vm1837 = vcmp.lt.f32.partialorder %v1836, 0.0004427343
      %v1838 = vsel %vm1837, %v1835, %v1832
      %v1839 = vadd.f32 %v1727, 1.0
      %v1840 = vlog2.pop %v1839
      %v1841 = vmul.f32 %v1840, 0.6931472
      %v1842 = vmul.f32 -0.5, %v1727
      %v1843 = vadd.f32 %v1842, 1.0
      %v1844 = vmul.f32 %v1843, %v1727
      %v1845 = vand.u32 2147483647, %v1727
      %vm1846 = vcmp.lt.f32.partialorder %v1845, 0.0004427343
      %v1847 = vsel %vm1846, %v1844, %v1841
      %v1848 = vadd.f32 %v1728, 1.0
      %v1849 = vlog2.pop %v1848
      %v1850 = vmul.f32 %v1849, 0.6931472
      %v1851 = vmul.f32 -0.5, %v1728
      %v1852 = vadd.f32 %v1851, 1.0
      %v1853 = vmul.f32 %v1852, %v1728
      %v1854 = vand.u32 2147483647, %v1728
      %vm1855 = vcmp.lt.f32.partialorder %v1854, 0.0004427343
      %v1856 = vsel %vm1855, %v1853, %v1850
      %v1857 = vadd.f32 %v1729, 1.0
      %v1858 = vlog2.pop %v1857
      %v1859 = vmul.f32 %v1858, 0.6931472
      %v1860 = vmul.f32 -0.5, %v1729
      %v1861 = vadd.f32 %v1860, 1.0
      %v1862 = vmul.f32 %v1861, %v1729
      %v1863 = vand.u32 2147483647, %v1729
      %vm1864 = vcmp.lt.f32.partialorder %v1863, 0.0004427343
      %v1865 = vsel %vm1864, %v1862, %v1859
      %v1866 = vadd.f32 %v1730, 1.0
      %v1867 = vlog2.pop %v1866
      %v1868 = vmul.f32 %v1867, 0.6931472
      %v1869 = vmul.f32 -0.5, %v1730
      %v1870 = vadd.f32 %v1869, 1.0
      %v1871 = vmul.f32 %v1870, %v1730
      %v1872 = vand.u32 2147483647, %v1730
      %vm1873 = vcmp.lt.f32.partialorder %v1872, 0.0004427343
      %v1874 = vsel %vm1873, %v1871, %v1868
      %v1875 = vadd.f32 %v1731, 1.0
      %v1876 = vlog2.pop %v1875
      %v1877 = vmul.f32 %v1876, 0.6931472
      %v1878 = vmul.f32 -0.5, %v1731
      %v1879 = vadd.f32 %v1878, 1.0
      %v1880 = vmul.f32 %v1879, %v1731
      %v1881 = vand.u32 2147483647, %v1731
      %vm1882 = vcmp.lt.f32.partialorder %v1881, 0.0004427343
      %v1883 = vsel %vm1882, %v1880, %v1877
      %v1884 = vadd.f32 %v1732, 1.0
      %v1885 = vlog2.pop %v1884
      %v1886 = vmul.f32 %v1885, 0.6931472
      %v1887 = vmul.f32 -0.5, %v1732
      %v1888 = vadd.f32 %v1887, 1.0
      %v1889 = vmul.f32 %v1888, %v1732
      %v1890 = vand.u32 2147483647, %v1732
      %vm1891 = vcmp.lt.f32.partialorder %v1890, 0.0004427343
      %v1892 = vsel %vm1891, %v1889, %v1886
      %v1893 = vadd.f32 %v1733, 1.0
      %v1894 = vlog2.pop %v1893
      %v1895 = vmul.f32 %v1894, 0.6931472
      %v1896 = vmul.f32 -0.5, %v1733
      %v1897 = vadd.f32 %v1896, 1.0
      %v1898 = vmul.f32 %v1897, %v1733
      %v1899 = vand.u32 2147483647, %v1733
      %vm1900 = vcmp.lt.f32.partialorder %v1899, 0.0004427343
      %v1901 = vsel %vm1900, %v1898, %v1895
      %v1902 = vadd.f32 %v1734, 1.0
      %v1903 = vlog2.pop %v1902
      %v1904 = vmul.f32 %v1903, 0.6931472
      %v1905 = vmul.f32 -0.5, %v1734
      %v1906 = vadd.f32 %v1905, 1.0
      %v1907 = vmul.f32 %v1906, %v1734
      %v1908 = vand.u32 2147483647, %v1734
      %vm1909 = vcmp.lt.f32.partialorder %v1908, 0.0004427343
      %v1910 = vsel %vm1909, %v1907, %v1904
      %v1911 = vadd.f32 %v1735, 1.0
      %v1912 = vlog2.pop %v1911
      %v1913 = vmul.f32 %v1912, 0.6931472
      %v1914 = vmul.f32 -0.5, %v1735
      %v1915 = vadd.f32 %v1914, 1.0
      %v1916 = vmul.f32 %v1915, %v1735
      %v1917 = vand.u32 2147483647, %v1735
      %vm1918 = vcmp.lt.f32.partialorder %v1917, 0.0004427343
      %v1919 = vsel %vm1918, %v1916, %v1913
      %v1920 = vadd.f32 %v1736, 1.0
      %v1921 = vlog2.pop %v1920
      %v1922 = vmul.f32 %v1921, 0.6931472
      %v1923 = vmul.f32 -0.5, %v1736
      %v1924 = vadd.f32 %v1923, 1.0
      %v1925 = vmul.f32 %v1924, %v1736
      %v1926 = vand.u32 2147483647, %v1736
      %vm1927 = vcmp.lt.f32.partialorder %v1926, 0.0004427343
      %v1928 = vsel %vm1927, %v1925, %v1922
      %v1929 = vadd.f32 %v1737, 1.0
      %v1930 = vlog2.pop %v1929
      %v1931 = vmul.f32 %v1930, 0.6931472
      %v1932 = vmul.f32 -0.5, %v1737
      %v1933 = vadd.f32 %v1932, 1.0
      %v1934 = vmul.f32 %v1933, %v1737
      %v1935 = vand.u32 2147483647, %v1737
      %vm1936 = vcmp.lt.f32.partialorder %v1935, 0.0004427343
      %v1937 = vsel %vm1936, %v1934, %v1931
      %v1938 = vadd.f32 %v1738, 1.0
      %v1939 = vlog2.pop %v1938
      %v1940 = vmul.f32 %v1939, 0.6931472
      %v1941 = vmul.f32 -0.5, %v1738
      %v1942 = vadd.f32 %v1941, 1.0
      %v1943 = vmul.f32 %v1942, %v1738
      %v1944 = vand.u32 2147483647, %v1738
      %vm1945 = vcmp.lt.f32.partialorder %v1944, 0.0004427343
      %v1946 = vsel %vm1945, %v1943, %v1940
      %v1947 = vadd.f32 %v1739, 1.0
      %v1948 = vlog2.pop %v1947
      %v1949 = vmul.f32 %v1948, 0.6931472
      %v1950 = vmul.f32 -0.5, %v1739
      %v1951 = vadd.f32 %v1950, 1.0
      %v1952 = vmul.f32 %v1951, %v1739
      %v1953 = vand.u32 2147483647, %v1739
      %vm1954 = vcmp.lt.f32.partialorder %v1953, 0.0004427343
      %v1955 = vsel %vm1954, %v1952, %v1949
      %v1956 = vadd.f32 %v1740, 1.0
      %v1957 = vlog2.pop %v1956
      %v1958 = vmul.f32 %v1957, 0.6931472
      %v1959 = vmul.f32 -0.5, %v1740
      %v1960 = vadd.f32 %v1959, 1.0
      %v1961 = vmul.f32 %v1960, %v1740
      %v1962 = vand.u32 2147483647, %v1740
      %vm1963 = vcmp.lt.f32.partialorder %v1962, 0.0004427343
      %v1964 = vsel %vm1963, %v1961, %v1958
      %v1965 = vadd.f32 %v1741, 1.0
      %v1966 = vlog2.pop %v1965
      %v1967 = vmul.f32 %v1966, 0.6931472
      %v1968 = vmul.f32 -0.5, %v1741
      %v1969 = vadd.f32 %v1968, 1.0
      %v1970 = vmul.f32 %v1969, %v1741
      %v1971 = vand.u32 2147483647, %v1741
      %vm1972 = vcmp.lt.f32.partialorder %v1971, 0.0004427343
      %v1973 = vsel %vm1972, %v1970, %v1967
      %v1974 = vadd.f32 %v1742, 1.0
      %v1975 = vlog2.pop %v1974
      %v1976 = vmul.f32 %v1975, 0.6931472
      %v1977 = vmul.f32 -0.5, %v1742
      %v1978 = vadd.f32 %v1977, 1.0
      %v1979 = vmul.f32 %v1978, %v1742
      %v1980 = vand.u32 2147483647, %v1742
      %vm1981 = vcmp.lt.f32.partialorder %v1980, 0.0004427343
      %v1982 = vsel %vm1981, %v1979, %v1976
      %v1983 = vadd.f32 %v1743, 1.0
      %v1984 = vlog2.pop %v1983
      %v1985 = vmul.f32 %v1984, 0.6931472
      %v1986 = vmul.f32 -0.5, %v1743
      %v1987 = vadd.f32 %v1986, 1.0
      %v1988 = vmul.f32 %v1987, %v1743
      %v1989 = vand.u32 2147483647, %v1743
      %vm1990 = vcmp.lt.f32.partialorder %v1989, 0.0004427343
      %v1991 = vsel %vm1990, %v1988, %v1985
      %v1992 = vadd.f32 %v1744, 1.0
      %v1993 = vlog2.pop %v1992
      %v1994 = vmul.f32 %v1993, 0.6931472
      %v1995 = vmul.f32 -0.5, %v1744
      %v1996 = vadd.f32 %v1995, 1.0
      %v1997 = vmul.f32 %v1996, %v1744
      %v1998 = vand.u32 2147483647, %v1744
      %vm1999 = vcmp.lt.f32.partialorder %v1998, 0.0004427343
      %v2000 = vsel %vm1999, %v1997, %v1994
      %v2001 = vadd.f32 %v1745, 1.0
      %v2002 = vlog2.pop %v2001
      %v2003 = vmul.f32 %v2002, 0.6931472
      %v2004 = vmul.f32 -0.5, %v1745
      %v2005 = vadd.f32 %v2004, 1.0
      %v2006 = vmul.f32 %v2005, %v1745
      %v2007 = vand.u32 2147483647, %v1745
      %vm2008 = vcmp.lt.f32.partialorder %v2007, 0.0004427343
      %v2009 = vsel %vm2008, %v2006, %v2003
      %v2010 = vadd.f32 %v1746, 1.0
      %v2011 = vlog2.pop %v2010
      %v2012 = vmul.f32 %v2011, 0.6931472
      %v2013 = vmul.f32 -0.5, %v1746
      %v2014 = vadd.f32 %v2013, 1.0
      %v2015 = vmul.f32 %v2014, %v1746
      %v2016 = vand.u32 2147483647, %v1746
      %vm2017 = vcmp.lt.f32.partialorder %v2016, 0.0004427343
      %v2018 = vsel %vm2017, %v2015, %v2012
      %v2019 = vadd.f32 %v1747, 1.0
      %v2020 = vlog2.pop %v2019
      %v2021 = vmul.f32 %v2020, 0.6931472
      %v2022 = vmul.f32 -0.5, %v1747
      %v2023 = vadd.f32 %v2022, 1.0
      %v2024 = vmul.f32 %v2023, %v1747
      %v2025 = vand.u32 2147483647, %v1747
      %vm2026 = vcmp.lt.f32.partialorder %v2025, 0.0004427343
      %v2027 = vsel %vm2026, %v2024, %v2021
      %v2028 = vadd.f32 %v1748, 1.0
      %v2029 = vlog2.pop %v2028
      %v2030 = vmul.f32 %v2029, 0.6931472
      %v2031 = vmul.f32 -0.5, %v1748
      %v2032 = vadd.f32 %v2031, 1.0
      %v2033 = vmul.f32 %v2032, %v1748
      %v2034 = vand.u32 2147483647, %v1748
      %vm2035 = vcmp.lt.f32.partialorder %v2034, 0.0004427343
      %v2036 = vsel %vm2035, %v2033, %v2030
      %v2037 = vsub.f32 %v1437, %v1757
      %v2038 = vsub.f32 %v1446, %v1766
      %v2039 = vsub.f32 %v1455, %v1775
      %v2040 = vsub.f32 %v1464, %v1784
      %v2041 = vsub.f32 %v1473, %v1793
      %v2042 = vsub.f32 %v1482, %v1802
      %v2043 = vsub.f32 %v1491, %v1811
      %v2044 = vsub.f32 %v1500, %v1820
      %v2045 = vsub.f32 %v1509, %v1829
      %v2046 = vsub.f32 %v1518, %v1838
      %v2047 = vsub.f32 %v1527, %v1847
      %v2048 = vsub.f32 %v1536, %v1856
      %v2049 = vsub.f32 %v1545, %v1865
      %v2050 = vsub.f32 %v1554, %v1874
      %v2051 = vsub.f32 %v1563, %v1883
      %v2052 = vsub.f32 %v1572, %v1892
      %v2053 = vsub.f32 %v1581, %v1901
      %v2054 = vsub.f32 %v1590, %v1910
      %v2055 = vsub.f32 %v1599, %v1919
      %v2056 = vsub.f32 %v1608, %v1928
      %v2057 = vsub.f32 %v1617, %v1937
      %v2058 = vsub.f32 %v1626, %v1946
      %v2059 = vsub.f32 %v1635, %v1955
      %v2060 = vsub.f32 %v1644, %v1964
      %v2061 = vsub.f32 %v1653, %v1973
      %v2062 = vsub.f32 %v1662, %v1982
      %v2063 = vsub.f32 %v1671, %v1991
      %v2064 = vsub.f32 %v1680, %v2000
      %v2065 = vsub.f32 %v1689, %v2009
      %v2066 = vsub.f32 %v1698, %v2018
      %v2067 = vsub.f32 %v1707, %v2027
      %v2068 = vsub.f32 %v1716, %v2036
      %v2069 = vmul.f32 %v2037, 0.5
      %v2070 = vmul.f32 %v2038, 0.5
      %v2071 = vmul.f32 %v2039, 0.5
      %v2072 = vmul.f32 %v2040, 0.5
      %v2073 = vmul.f32 %v2041, 0.5
      %v2074 = vmul.f32 %v2042, 0.5
      %v2075 = vmul.f32 %v2043, 0.5
      %v2076 = vmul.f32 %v2044, 0.5
      %v2077 = vmul.f32 %v2045, 0.5
      %v2078 = vmul.f32 %v2046, 0.5
      %v2079 = vmul.f32 %v2047, 0.5
      %v2080 = vmul.f32 %v2048, 0.5
      %v2081 = vmul.f32 %v2049, 0.5
      %v2082 = vmul.f32 %v2050, 0.5
      %v2083 = vmul.f32 %v2051, 0.5
      %v2084 = vmul.f32 %v2052, 0.5
      %v2085 = vmul.f32 %v2053, 0.5
      %v2086 = vmul.f32 %v2054, 0.5
      %v2087 = vmul.f32 %v2055, 0.5
      %v2088 = vmul.f32 %v2056, 0.5
      %v2089 = vmul.f32 %v2057, 0.5
      %v2090 = vmul.f32 %v2058, 0.5
      %v2091 = vmul.f32 %v2059, 0.5
      %v2092 = vmul.f32 %v2060, 0.5
      %v2093 = vmul.f32 %v2061, 0.5
      %v2094 = vmul.f32 %v2062, 0.5
      %v2095 = vmul.f32 %v2063, 0.5
      %v2096 = vmul.f32 %v2064, 0.5
      %v2097 = vmul.f32 %v2065, 0.5
      %v2098 = vmul.f32 %v2066, 0.5
      %v2099 = vmul.f32 %v2067, 0.5
      %v2100 = vmul.f32 %v2068, 0.5
      %v2101 = vmul.f32 %v1302, %v2069
      %v2102 = vmul.f32 %v1304, %v2070
      %v2103 = vmul.f32 %v1306, %v2071
      %v2104 = vmul.f32 %v1308, %v2072
      %v2105 = vmul.f32 %v1310, %v2073
      %v2106 = vmul.f32 %v1312, %v2074
      %v2107 = vmul.f32 %v1314, %v2075
      %v2108 = vmul.f32 %v1316, %v2076
      %v2109 = vmul.f32 %v1318, %v2077
      %v2110 = vmul.f32 %v1320, %v2078
      %v2111 = vmul.f32 %v1322, %v2079
      %v2112 = vmul.f32 %v1324, %v2080
      %v2113 = vmul.f32 %v1326, %v2081
      %v2114 = vmul.f32 %v1328, %v2082
      %v2115 = vmul.f32 %v1330, %v2083
      %v2116 = vmul.f32 %v1332, %v2084
      %v2117 = vmul.f32 %v1334, %v2085
      %v2118 = vmul.f32 %v1336, %v2086
      %v2119 = vmul.f32 %v1338, %v2087
      %v2120 = vmul.f32 %v1340, %v2088
      %v2121 = vmul.f32 %v1342, %v2089
      %v2122 = vmul.f32 %v1344, %v2090
      %v2123 = vmul.f32 %v1346, %v2091
      %v2124 = vmul.f32 %v1348, %v2092
      %v2125 = vmul.f32 %v1350, %v2093
      %v2126 = vmul.f32 %v1352, %v2094
      %v2127 = vmul.f32 %v1354, %v2095
      %v2128 = vmul.f32 %v1356, %v2096
      %v2129 = vmul.f32 %v1358, %v2097
      %v2130 = vmul.f32 %v1360, %v2098
      %v2131 = vmul.f32 %v1362, %v2099
      %v2132 = vmul.f32 %v1364, %v2100
      %v2133 = vtanh.pop %v2101
      %v2134 = vtanh.pop %v2102
      %v2135 = vtanh.pop %v2103
      %v2136 = vtanh.pop %v2104
      %v2137 = vtanh.pop %v2105
      %v2138 = vtanh.pop %v2106
      %v2139 = vtanh.pop %v2107
      %v2140 = vtanh.pop %v2108
      %v2141 = vtanh.pop %v2109
      %v2142 = vtanh.pop %v2110
      %v2143 = vtanh.pop %v2111
      %v2144 = vtanh.pop %v2112
      %v2145 = vtanh.pop %v2113
      %v2146 = vtanh.pop %v2114
      %v2147 = vtanh.pop %v2115
      %v2148 = vtanh.pop %v2116
      %v2149 = vtanh.pop %v2117
      %v2150 = vtanh.pop %v2118
      %v2151 = vtanh.pop %v2119
      %v2152 = vtanh.pop %v2120
      %v2153 = vtanh.pop %v2121
      %v2154 = vtanh.pop %v2122
      %v2155 = vtanh.pop %v2123
      %v2156 = vtanh.pop %v2124
      %v2157 = vtanh.pop %v2125
      %v2158 = vtanh.pop %v2126
      %v2159 = vtanh.pop %v2127
      %v2160 = vtanh.pop %v2128
      %v2161 = vtanh.pop %v2129
      %v2162 = vtanh.pop %v2130
      %v2163 = vtanh.pop %v2131
      %v2164 = vtanh.pop %v2132
      %v2165 = vmul.f32 %v2133, %v759
      %v2166 = vmul.f32 %v2134, %v764
      %v2167 = vmul.f32 %v2135, %v769
      %v2168 = vmul.f32 %v2136, %v774
      %v2169 = vmul.f32 %v2137, %v779
      %v2170 = vmul.f32 %v2138, %v784
      %v2171 = vmul.f32 %v2139, %v789
      %v2172 = vmul.f32 %v2140, %v794
      %v2173 = vmul.f32 %v2141, %v799
      %v2174 = vmul.f32 %v2142, %v804
      %v2175 = vmul.f32 %v2143, %v809
      %v2176 = vmul.f32 %v2144, %v814
      %v2177 = vmul.f32 %v2145, %v819
      %v2178 = vmul.f32 %v2146, %v824
      %v2179 = vmul.f32 %v2147, %v829
      %v2180 = vmul.f32 %v2148, %v834
      %v2181 = vmul.f32 %v2149, %v839
      %v2182 = vmul.f32 %v2150, %v844
      %v2183 = vmul.f32 %v2151, %v849
      %v2184 = vmul.f32 %v2152, %v854
      %v2185 = vmul.f32 %v2153, %v859
      %v2186 = vmul.f32 %v2154, %v864
      %v2187 = vmul.f32 %v2155, %v869
      %v2188 = vmul.f32 %v2156, %v874
      %v2189 = vmul.f32 %v2157, %v879
      %v2190 = vmul.f32 %v2158, %v884
      %v2191 = vmul.f32 %v2159, %v889
      %v2192 = vmul.f32 %v2160, %v894
      %v2193 = vmul.f32 %v2161, %v899
      %v2194 = vmul.f32 %v2162, %v904
      %v2195 = vmul.f32 %v2163, %v909
      %v2196 = vmul.f32 %v2164, %v914
      %v2197 = vrcp.pop %v1269
      %v2198 = vmul.f32 %v2165, %v2197
      %v2199 = vrcp.pop %v1270
      %v2200 = vmul.f32 %v2166, %v2199
      %v2201 = vrcp.pop %v1271
      %v2202 = vmul.f32 %v2167, %v2201
      %v2203 = vrcp.pop %v1272
      %v2204 = vmul.f32 %v2168, %v2203
      %v2205 = vrcp.pop %v1273
      %v2206 = vmul.f32 %v2169, %v2205
      %v2207 = vrcp.pop %v1274
      %v2208 = vmul.f32 %v2170, %v2207
      %v2209 = vrcp.pop %v1275
      %v2210 = vmul.f32 %v2171, %v2209
      %v2211 = vrcp.pop %v1276
      %v2212 = vmul.f32 %v2172, %v2211
      %v2213 = vrcp.pop %v1277
      %v2214 = vmul.f32 %v2173, %v2213
      %v2215 = vrcp.pop %v1278
      %v2216 = vmul.f32 %v2174, %v2215
      %v2217 = vrcp.pop %v1279
      %v2218 = vmul.f32 %v2175, %v2217
      %v2219 = vrcp.pop %v1280
      %v2220 = vmul.f32 %v2176, %v2219
      %v2221 = vrcp.pop %v1281
      %v2222 = vmul.f32 %v2177, %v2221
      %v2223 = vrcp.pop %v1282
      %v2224 = vmul.f32 %v2178, %v2223
      %v2225 = vrcp.pop %v1283
      %v2226 = vmul.f32 %v2179, %v2225
      %v2227 = vrcp.pop %v1284
      %v2228 = vmul.f32 %v2180, %v2227
      %v2229 = vrcp.pop %v1285
      %v2230 = vmul.f32 %v2181, %v2229
      %v2231 = vrcp.pop %v1286
      %v2232 = vmul.f32 %v2182, %v2231
      %v2233 = vrcp.pop %v1287
      %v2234 = vmul.f32 %v2183, %v2233
      %v2235 = vrcp.pop %v1288
      %v2236 = vmul.f32 %v2184, %v2235
      %v2237 = vrcp.pop %v1289
      %v2238 = vmul.f32 %v2185, %v2237
      %v2239 = vrcp.pop %v1290
      %v2240 = vmul.f32 %v2186, %v2239
      %v2241 = vrcp.pop %v1291
      %v2242 = vmul.f32 %v2187, %v2241
      %v2243 = vrcp.pop %v1292
      %v2244 = vmul.f32 %v2188, %v2243
      %v2245 = vrcp.pop %v1293
      %v2246 = vmul.f32 %v2189, %v2245
      %v2247 = vrcp.pop %v1294
      %v2248 = vmul.f32 %v2190, %v2247
      %v2249 = vrcp.pop %v1295
      %v2250 = vmul.f32 %v2191, %v2249
      %v2251 = vrcp.pop %v1296
      %v2252 = vmul.f32 %v2192, %v2251
      %v2253 = vrcp.pop %v1297
      %v2254 = vmul.f32 %v2193, %v2253
      %v2255 = vrcp.pop %v1298
      %v2256 = vmul.f32 %v2194, %v2255
      %v2257 = vrcp.pop %v1299
      %v2258 = vmul.f32 %v2195, %v2257
      %v2259 = vrcp.pop %v1300
      %v2260 = vmul.f32 %v2196, %v2259
      %vm2261 = vcmp.eq.f32.partialorder %v951, 0.0
      %vm2262 = vcmp.eq.f32.partialorder %v954, 0.0
      %vm2263 = vcmp.eq.f32.partialorder %v957, 0.0
      %vm2264 = vcmp.eq.f32.partialorder %v960, 0.0
      %vm2265 = vcmp.eq.f32.partialorder %v963, 0.0
      %vm2266 = vcmp.eq.f32.partialorder %v966, 0.0
      %vm2267 = vcmp.eq.f32.partialorder %v969, 0.0
      %vm2268 = vcmp.eq.f32.partialorder %v972, 0.0
      %vm2269 = vcmp.eq.f32.partialorder %v975, 0.0
      %vm2270 = vcmp.eq.f32.partialorder %v978, 0.0
      %vm2271 = vcmp.eq.f32.partialorder %v981, 0.0
      %vm2272 = vcmp.eq.f32.partialorder %v984, 0.0
      %vm2273 = vcmp.eq.f32.partialorder %v987, 0.0
      %vm2274 = vcmp.eq.f32.partialorder %v990, 0.0
      %vm2275 = vcmp.eq.f32.partialorder %v993, 0.0
      %vm2276 = vcmp.eq.f32.partialorder %v996, 0.0
      %vm2277 = vcmp.eq.f32.partialorder %v999, 0.0
      %vm2278 = vcmp.eq.f32.partialorder %v1002, 0.0
      %vm2279 = vcmp.eq.f32.partialorder %v1005, 0.0
      %vm2280 = vcmp.eq.f32.partialorder %v1008, 0.0
      %vm2281 = vcmp.eq.f32.partialorder %v1011, 0.0
      %vm2282 = vcmp.eq.f32.partialorder %v1014, 0.0
      %vm2283 = vcmp.eq.f32.partialorder %v1017, 0.0
      %vm2284 = vcmp.eq.f32.partialorder %v1020, 0.0
      %vm2285 = vcmp.eq.f32.partialorder %v1023, 0.0
      %vm2286 = vcmp.eq.f32.partialorder %v1026, 0.0
      %vm2287 = vcmp.eq.f32.partialorder %v1029, 0.0
      %vm2288 = vcmp.eq.f32.partialorder %v1032, 0.0
      %vm2289 = vcmp.eq.f32.partialorder %v1035, 0.0
      %vm2290 = vcmp.eq.f32.partialorder %v1038, 0.0
      %vm2291 = vcmp.eq.f32.partialorder %v1041, 0.0
      %vm2292 = vcmp.eq.f32.partialorder %v1044, 0.0
      %v2293 = vsel %vm2261, 1, 0
      %v2294 = vsel %vm2262, 1, 0
      %v2295 = vsel %vm2263, 1, 0
      %v2296 = vsel %vm2264, 1, 0
      %v2297 = vsel %vm2265, 1, 0
      %v2298 = vsel %vm2266, 1, 0
      %v2299 = vsel %vm2267, 1, 0
      %v2300 = vsel %vm2268, 1, 0
      %v2301 = vsel %vm2269, 1, 0
      %v2302 = vsel %vm2270, 1, 0
      %v2303 = vsel %vm2271, 1, 0
      %v2304 = vsel %vm2272, 1, 0
      %v2305 = vsel %vm2273, 1, 0
      %v2306 = vsel %vm2274, 1, 0
      %v2307 = vsel %vm2275, 1, 0
      %v2308 = vsel %vm2276, 1, 0
      %v2309 = vsel %vm2277, 1, 0
      %v2310 = vsel %vm2278, 1, 0
      %v2311 = vsel %vm2279, 1, 0
      %v2312 = vsel %vm2280, 1, 0
      %v2313 = vsel %vm2281, 1, 0
      %v2314 = vsel %vm2282, 1, 0
      %v2315 = vsel %vm2283, 1, 0
      %v2316 = vsel %vm2284, 1, 0
      %v2317 = vsel %vm2285, 1, 0
      %v2318 = vsel %vm2286, 1, 0
      %v2319 = vsel %vm2287, 1, 0
      %v2320 = vsel %vm2288, 1, 0
      %v2321 = vsel %vm2289, 1, 0
      %v2322 = vsel %vm2290, 1, 0
      %v2323 = vsel %vm2291, 1, 0
      %v2324 = vsel %vm2292, 1, 0
      %vm2325 = vcmp.eq.s32.totalorder %v2293, 1
      %vm2326 = vcmp.eq.s32.totalorder %v2294, 1
      %vm2327 = vcmp.eq.s32.totalorder %v2295, 1
      %vm2328 = vcmp.eq.s32.totalorder %v2296, 1
      %vm2329 = vcmp.eq.s32.totalorder %v2297, 1
      %vm2330 = vcmp.eq.s32.totalorder %v2298, 1
      %vm2331 = vcmp.eq.s32.totalorder %v2299, 1
      %vm2332 = vcmp.eq.s32.totalorder %v2300, 1
      %vm2333 = vcmp.eq.s32.totalorder %v2301, 1
      %vm2334 = vcmp.eq.s32.totalorder %v2302, 1
      %vm2335 = vcmp.eq.s32.totalorder %v2303, 1
      %vm2336 = vcmp.eq.s32.totalorder %v2304, 1
      %vm2337 = vcmp.eq.s32.totalorder %v2305, 1
      %vm2338 = vcmp.eq.s32.totalorder %v2306, 1
      %vm2339 = vcmp.eq.s32.totalorder %v2307, 1
      %vm2340 = vcmp.eq.s32.totalorder %v2308, 1
      %vm2341 = vcmp.eq.s32.totalorder %v2309, 1
      %vm2342 = vcmp.eq.s32.totalorder %v2310, 1
      %vm2343 = vcmp.eq.s32.totalorder %v2311, 1
      %vm2344 = vcmp.eq.s32.totalorder %v2312, 1
      %vm2345 = vcmp.eq.s32.totalorder %v2313, 1
      %vm2346 = vcmp.eq.s32.totalorder %v2314, 1
      %vm2347 = vcmp.eq.s32.totalorder %v2315, 1
      %vm2348 = vcmp.eq.s32.totalorder %v2316, 1
      %vm2349 = vcmp.eq.s32.totalorder %v2317, 1
      %vm2350 = vcmp.eq.s32.totalorder %v2318, 1
      %vm2351 = vcmp.eq.s32.totalorder %v2319, 1
      %vm2352 = vcmp.eq.s32.totalorder %v2320, 1
      %vm2353 = vcmp.eq.s32.totalorder %v2321, 1
      %vm2354 = vcmp.eq.s32.totalorder %v2322, 1
      %vm2355 = vcmp.eq.s32.totalorder %v2323, 1
      %vm2356 = vcmp.eq.s32.totalorder %v2324, 1
      %v2357 = vsel %vm2325, 0.0, %v2198
      %v2358 = vsel %vm2326, 0.0, %v2200
      %v2359 = vsel %vm2327, 0.0, %v2202
      %v2360 = vsel %vm2328, 0.0, %v2204
      %v2361 = vsel %vm2329, 0.0, %v2206
      %v2362 = vsel %vm2330, 0.0, %v2208
      %v2363 = vsel %vm2331, 0.0, %v2210
      %v2364 = vsel %vm2332, 0.0, %v2212
      %v2365 = vsel %vm2333, 0.0, %v2214
      %v2366 = vsel %vm2334, 0.0, %v2216
      %v2367 = vsel %vm2335, 0.0, %v2218
      %v2368 = vsel %vm2336, 0.0, %v2220
      %v2369 = vsel %vm2337, 0.0, %v2222
      %v2370 = vsel %vm2338, 0.0, %v2224
      %v2371 = vsel %vm2339, 0.0, %v2226
      %v2372 = vsel %vm2340, 0.0, %v2228
      %v2373 = vsel %vm2341, 0.0, %v2230
      %v2374 = vsel %vm2342, 0.0, %v2232
      %v2375 = vsel %vm2343, 0.0, %v2234
      %v2376 = vsel %vm2344, 0.0, %v2236
      %v2377 = vsel %vm2345, 0.0, %v2238
      %v2378 = vsel %vm2346, 0.0, %v2240
      %v2379 = vsel %vm2347, 0.0, %v2242
      %v2380 = vsel %vm2348, 0.0, %v2244
      %v2381 = vsel %vm2349, 0.0, %v2246
      %v2382 = vsel %vm2350, 0.0, %v2248
      %v2383 = vsel %vm2351, 0.0, %v2250
      %v2384 = vsel %vm2352, 0.0, %v2252
      %v2385 = vsel %vm2353, 0.0, %v2254
      %v2386 = vsel %vm2354, 0.0, %v2256
      %v2387 = vsel %vm2355, 0.0, %v2258
      %v2388 = vsel %vm2356, 0.0, %v2260
      %v2389 = vmul.f32 %v2357, %v2357
      %v2390 = vmul.f32 %v2358, %v2358
      %v2391 = vmul.f32 %v2359, %v2359
      %v2392 = vmul.f32 %v2360, %v2360
      %v2393 = vmul.f32 %v2361, %v2361
      %v2394 = vmul.f32 %v2362, %v2362
      %v2395 = vmul.f32 %v2363, %v2363
      %v2396 = vmul.f32 %v2364, %v2364
      %v2397 = vmul.f32 %v2365, %v2365
      %v2398 = vmul.f32 %v2366, %v2366
      %v2399 = vmul.f32 %v2367, %v2367
      %v2400 = vmul.f32 %v2368, %v2368
      %v2401 = vmul.f32 %v2369, %v2369
      %v2402 = vmul.f32 %v2370, %v2370
      %v2403 = vmul.f32 %v2371, %v2371
      %v2404 = vmul.f32 %v2372, %v2372
      %v2405 = vmul.f32 %v2373, %v2373
      %v2406 = vmul.f32 %v2374, %v2374
      %v2407 = vmul.f32 %v2375, %v2375
      %v2408 = vmul.f32 %v2376, %v2376
      %v2409 = vmul.f32 %v2377, %v2377
      %v2410 = vmul.f32 %v2378, %v2378
      %v2411 = vmul.f32 %v2379, %v2379
      %v2412 = vmul.f32 %v2380, %v2380
      %v2413 = vmul.f32 %v2381, %v2381
      %v2414 = vmul.f32 %v2382, %v2382
      %v2415 = vmul.f32 %v2383, %v2383
      %v2416 = vmul.f32 %v2384, %v2384
      %v2417 = vmul.f32 %v2385, %v2385
      %v2418 = vmul.f32 %v2386, %v2386
      %v2419 = vmul.f32 %v2387, %v2387
      %v2420 = vmul.f32 %v2388, %v2388
      %v2421 = vsel %vm243, %v2389, 0.0
      %2422 = vadd.xlane.f32.xlu0 %v2421
      %v2423 = vpop.xlane.xlu0 %2422
      %v2424 = vsel %vm243, %v2390, 0.0
      %2425 = vadd.xlane.f32.xlu0 %v2424
      %v2426 = vpop.xlane.xlu0 %2425
      %v2427 = vsel %vm243, %v2391, 0.0
      %2428 = vadd.xlane.f32.xlu0 %v2427
      %v2429 = vpop.xlane.xlu0 %2428
      %v2430 = vsel %vm243, %v2392, 0.0
      %2431 = vadd.xlane.f32.xlu0 %v2430
      %v2432 = vpop.xlane.xlu0 %2431
      %v2433 = vsel %vm243, %v2393, 0.0
      %2434 = vadd.xlane.f32.xlu0 %v2433
      %v2435 = vpop.xlane.xlu0 %2434
      %v2436 = vsel %vm243, %v2394, 0.0
      %2437 = vadd.xlane.f32.xlu0 %v2436
      %v2438 = vpop.xlane.xlu0 %2437
      %v2439 = vsel %vm243, %v2395, 0.0
      %2440 = vadd.xlane.f32.xlu0 %v2439
      %v2441 = vpop.xlane.xlu0 %2440
      %v2442 = vsel %vm243, %v2396, 0.0
      %2443 = vadd.xlane.f32.xlu0 %v2442
      %v2444 = vpop.xlane.xlu0 %2443
      %v2445 = vsel %vm243, %v2397, 0.0
      %2446 = vadd.xlane.f32.xlu0 %v2445
      %v2447 = vpop.xlane.xlu0 %2446
      %v2448 = vsel %vm243, %v2398, 0.0
      %2449 = vadd.xlane.f32.xlu0 %v2448
      %v2450 = vpop.xlane.xlu0 %2449
      %v2451 = vsel %vm243, %v2399, 0.0
      %2452 = vadd.xlane.f32.xlu0 %v2451
      %v2453 = vpop.xlane.xlu0 %2452
      %v2454 = vsel %vm243, %v2400, 0.0
      %2455 = vadd.xlane.f32.xlu0 %v2454
      %v2456 = vpop.xlane.xlu0 %2455
      %v2457 = vsel %vm243, %v2401, 0.0
      %2458 = vadd.xlane.f32.xlu0 %v2457
      %v2459 = vpop.xlane.xlu0 %2458
      %v2460 = vsel %vm243, %v2402, 0.0
      %2461 = vadd.xlane.f32.xlu0 %v2460
      %v2462 = vpop.xlane.xlu0 %2461
      %v2463 = vsel %vm243, %v2403, 0.0
      %2464 = vadd.xlane.f32.xlu0 %v2463
      %v2465 = vpop.xlane.xlu0 %2464
      %v2466 = vsel %vm243, %v2404, 0.0
      %2467 = vadd.xlane.f32.xlu0 %v2466
      %v2468 = vpop.xlane.xlu0 %2467
      %v2469 = vsel %vm243, %v2405, 0.0
      %2470 = vadd.xlane.f32.xlu0 %v2469
      %v2471 = vpop.xlane.xlu0 %2470
      %v2472 = vsel %vm243, %v2406, 0.0
      %2473 = vadd.xlane.f32.xlu0 %v2472
      %v2474 = vpop.xlane.xlu0 %2473
      %v2475 = vsel %vm243, %v2407, 0.0
      %2476 = vadd.xlane.f32.xlu0 %v2475
      %v2477 = vpop.xlane.xlu0 %2476
      %v2478 = vsel %vm243, %v2408, 0.0
      %2479 = vadd.xlane.f32.xlu0 %v2478
      %v2480 = vpop.xlane.xlu0 %2479
      %v2481 = vsel %vm243, %v2409, 0.0
      %2482 = vadd.xlane.f32.xlu0 %v2481
      %v2483 = vpop.xlane.xlu0 %2482
      %v2484 = vsel %vm243, %v2410, 0.0
      %2485 = vadd.xlane.f32.xlu0 %v2484
      %v2486 = vpop.xlane.xlu0 %2485
      %v2487 = vsel %vm243, %v2411, 0.0
      %2488 = vadd.xlane.f32.xlu0 %v2487
      %v2489 = vpop.xlane.xlu0 %2488
      %v2490 = vsel %vm243, %v2412, 0.0
      %2491 = vadd.xlane.f32.xlu0 %v2490
      %v2492 = vpop.xlane.xlu0 %2491
      %v2493 = vsel %vm243, %v2413, 0.0
      %2494 = vadd.xlane.f32.xlu0 %v2493
      %v2495 = vpop.xlane.xlu0 %2494
      %v2496 = vsel %vm243, %v2414, 0.0
      %2497 = vadd.xlane.f32.xlu0 %v2496
      %v2498 = vpop.xlane.xlu0 %2497
      %v2499 = vsel %vm243, %v2415, 0.0
      %2500 = vadd.xlane.f32.xlu0 %v2499
      %v2501 = vpop.xlane.xlu0 %2500
      %v2502 = vsel %vm243, %v2416, 0.0
      %2503 = vadd.xlane.f32.xlu0 %v2502
      %v2504 = vpop.xlane.xlu0 %2503
      %v2505 = vsel %vm243, %v2417, 0.0
      %2506 = vadd.xlane.f32.xlu0 %v2505
      %v2507 = vpop.xlane.xlu0 %2506
      %v2508 = vsel %vm243, %v2418, 0.0
      %2509 = vadd.xlane.f32.xlu0 %v2508
      %v2510 = vpop.xlane.xlu0 %2509
      %v2511 = vsel %vm243, %v2419, 0.0
      %2512 = vadd.xlane.f32.xlu0 %v2511
      %v2513 = vpop.xlane.xlu0 %2512
      %v2514 = vsel %vm243, %v2420, 0.0
      %2515 = vadd.xlane.f32.xlu0 %v2514
      %v2516 = vpop.xlane.xlu0 %2515
      %v2517 = vrsqrt.pop %v2423
      %v2518 = vmul.f32 %v2423, %v2517
      %vm2519 = vcmp.eq.f32.partialorder %v2423, inf
      %v2520 = vsel %vm2519, %v2423, %v2518
      %vm2521 = vcmp.eq.f32.partialorder %v2423, 0.0
      %v2522 = vand.u32 %v2423, 2147483648
      %v2523 = vsel %vm2521, %v2522, %v2520
      %v2524 = vrsqrt.pop %v2426
      %v2525 = vmul.f32 %v2426, %v2524
      %vm2526 = vcmp.eq.f32.partialorder %v2426, inf
      %v2527 = vsel %vm2526, %v2426, %v2525
      %vm2528 = vcmp.eq.f32.partialorder %v2426, 0.0
      %v2529 = vand.u32 %v2426, 2147483648
      %v2530 = vsel %vm2528, %v2529, %v2527
      %v2531 = vrsqrt.pop %v2429
      %v2532 = vmul.f32 %v2429, %v2531
      %vm2533 = vcmp.eq.f32.partialorder %v2429, inf
      %v2534 = vsel %vm2533, %v2429, %v2532
      %vm2535 = vcmp.eq.f32.partialorder %v2429, 0.0
      %v2536 = vand.u32 %v2429, 2147483648
      %v2537 = vsel %vm2535, %v2536, %v2534
      %v2538 = vrsqrt.pop %v2432
      %v2539 = vmul.f32 %v2432, %v2538
      %vm2540 = vcmp.eq.f32.partialorder %v2432, inf
      %v2541 = vsel %vm2540, %v2432, %v2539
      %vm2542 = vcmp.eq.f32.partialorder %v2432, 0.0
      %v2543 = vand.u32 %v2432, 2147483648
      %v2544 = vsel %vm2542, %v2543, %v2541
      %v2545 = vrsqrt.pop %v2435
      %v2546 = vmul.f32 %v2435, %v2545
      %vm2547 = vcmp.eq.f32.partialorder %v2435, inf
      %v2548 = vsel %vm2547, %v2435, %v2546
      %vm2549 = vcmp.eq.f32.partialorder %v2435, 0.0
      %v2550 = vand.u32 %v2435, 2147483648
      %v2551 = vsel %vm2549, %v2550, %v2548
      %v2552 = vrsqrt.pop %v2438
      %v2553 = vmul.f32 %v2438, %v2552
      %vm2554 = vcmp.eq.f32.partialorder %v2438, inf
      %v2555 = vsel %vm2554, %v2438, %v2553
      %vm2556 = vcmp.eq.f32.partialorder %v2438, 0.0
      %v2557 = vand.u32 %v2438, 2147483648
      %v2558 = vsel %vm2556, %v2557, %v2555
      %v2559 = vrsqrt.pop %v2441
      %v2560 = vmul.f32 %v2441, %v2559
      %vm2561 = vcmp.eq.f32.partialorder %v2441, inf
      %v2562 = vsel %vm2561, %v2441, %v2560
      %vm2563 = vcmp.eq.f32.partialorder %v2441, 0.0
      %v2564 = vand.u32 %v2441, 2147483648
      %v2565 = vsel %vm2563, %v2564, %v2562
      %v2566 = vrsqrt.pop %v2444
      %v2567 = vmul.f32 %v2444, %v2566
      %vm2568 = vcmp.eq.f32.partialorder %v2444, inf
      %v2569 = vsel %vm2568, %v2444, %v2567
      %vm2570 = vcmp.eq.f32.partialorder %v2444, 0.0
      %v2571 = vand.u32 %v2444, 2147483648
      %v2572 = vsel %vm2570, %v2571, %v2569
      %v2573 = vrsqrt.pop %v2447
      %v2574 = vmul.f32 %v2447, %v2573
      %vm2575 = vcmp.eq.f32.partialorder %v2447, inf
      %v2576 = vsel %vm2575, %v2447, %v2574
      %vm2577 = vcmp.eq.f32.partialorder %v2447, 0.0
      %v2578 = vand.u32 %v2447, 2147483648
      %v2579 = vsel %vm2577, %v2578, %v2576
      %v2580 = vrsqrt.pop %v2450
      %v2581 = vmul.f32 %v2450, %v2580
      %vm2582 = vcmp.eq.f32.partialorder %v2450, inf
      %v2583 = vsel %vm2582, %v2450, %v2581
      %vm2584 = vcmp.eq.f32.partialorder %v2450, 0.0
      %v2585 = vand.u32 %v2450, 2147483648
      %v2586 = vsel %vm2584, %v2585, %v2583
      %v2587 = vrsqrt.pop %v2453
      %v2588 = vmul.f32 %v2453, %v2587
      %vm2589 = vcmp.eq.f32.partialorder %v2453, inf
      %v2590 = vsel %vm2589, %v2453, %v2588
      %vm2591 = vcmp.eq.f32.partialorder %v2453, 0.0
      %v2592 = vand.u32 %v2453, 2147483648
      %v2593 = vsel %vm2591, %v2592, %v2590
      %v2594 = vrsqrt.pop %v2456
      %v2595 = vmul.f32 %v2456, %v2594
      %vm2596 = vcmp.eq.f32.partialorder %v2456, inf
      %v2597 = vsel %vm2596, %v2456, %v2595
      %vm2598 = vcmp.eq.f32.partialorder %v2456, 0.0
      %v2599 = vand.u32 %v2456, 2147483648
      %v2600 = vsel %vm2598, %v2599, %v2597
      %v2601 = vrsqrt.pop %v2459
      %v2602 = vmul.f32 %v2459, %v2601
      %vm2603 = vcmp.eq.f32.partialorder %v2459, inf
      %v2604 = vsel %vm2603, %v2459, %v2602
      %vm2605 = vcmp.eq.f32.partialorder %v2459, 0.0
      %v2606 = vand.u32 %v2459, 2147483648
      %v2607 = vsel %vm2605, %v2606, %v2604
      %v2608 = vrsqrt.pop %v2462
      %v2609 = vmul.f32 %v2462, %v2608
      %vm2610 = vcmp.eq.f32.partialorder %v2462, inf
      %v2611 = vsel %vm2610, %v2462, %v2609
      %vm2612 = vcmp.eq.f32.partialorder %v2462, 0.0
      %v2613 = vand.u32 %v2462, 2147483648
      %v2614 = vsel %vm2612, %v2613, %v2611
      %v2615 = vrsqrt.pop %v2465
      %v2616 = vmul.f32 %v2465, %v2615
      %vm2617 = vcmp.eq.f32.partialorder %v2465, inf
      %v2618 = vsel %vm2617, %v2465, %v2616
      %vm2619 = vcmp.eq.f32.partialorder %v2465, 0.0
      %v2620 = vand.u32 %v2465, 2147483648
      %v2621 = vsel %vm2619, %v2620, %v2618
      %v2622 = vrsqrt.pop %v2468
      %v2623 = vmul.f32 %v2468, %v2622
      %vm2624 = vcmp.eq.f32.partialorder %v2468, inf
      %v2625 = vsel %vm2624, %v2468, %v2623
      %vm2626 = vcmp.eq.f32.partialorder %v2468, 0.0
      %v2627 = vand.u32 %v2468, 2147483648
      %v2628 = vsel %vm2626, %v2627, %v2625
      %v2629 = vrsqrt.pop %v2471
      %v2630 = vmul.f32 %v2471, %v2629
      %vm2631 = vcmp.eq.f32.partialorder %v2471, inf
      %v2632 = vsel %vm2631, %v2471, %v2630
      %vm2633 = vcmp.eq.f32.partialorder %v2471, 0.0
      %v2634 = vand.u32 %v2471, 2147483648
      %v2635 = vsel %vm2633, %v2634, %v2632
      %v2636 = vrsqrt.pop %v2474
      %v2637 = vmul.f32 %v2474, %v2636
      %vm2638 = vcmp.eq.f32.partialorder %v2474, inf
      %v2639 = vsel %vm2638, %v2474, %v2637
      %vm2640 = vcmp.eq.f32.partialorder %v2474, 0.0
      %v2641 = vand.u32 %v2474, 2147483648
      %v2642 = vsel %vm2640, %v2641, %v2639
      %v2643 = vrsqrt.pop %v2477
      %v2644 = vmul.f32 %v2477, %v2643
      %vm2645 = vcmp.eq.f32.partialorder %v2477, inf
      %v2646 = vsel %vm2645, %v2477, %v2644
      %vm2647 = vcmp.eq.f32.partialorder %v2477, 0.0
      %v2648 = vand.u32 %v2477, 2147483648
      %v2649 = vsel %vm2647, %v2648, %v2646
      %v2650 = vrsqrt.pop %v2480
      %v2651 = vmul.f32 %v2480, %v2650
      %vm2652 = vcmp.eq.f32.partialorder %v2480, inf
      %v2653 = vsel %vm2652, %v2480, %v2651
      %vm2654 = vcmp.eq.f32.partialorder %v2480, 0.0
      %v2655 = vand.u32 %v2480, 2147483648
      %v2656 = vsel %vm2654, %v2655, %v2653
      %v2657 = vrsqrt.pop %v2483
      %v2658 = vmul.f32 %v2483, %v2657
      %vm2659 = vcmp.eq.f32.partialorder %v2483, inf
      %v2660 = vsel %vm2659, %v2483, %v2658
      %vm2661 = vcmp.eq.f32.partialorder %v2483, 0.0
      %v2662 = vand.u32 %v2483, 2147483648
      %v2663 = vsel %vm2661, %v2662, %v2660
      %v2664 = vrsqrt.pop %v2486
      %v2665 = vmul.f32 %v2486, %v2664
      %vm2666 = vcmp.eq.f32.partialorder %v2486, inf
      %v2667 = vsel %vm2666, %v2486, %v2665
      %vm2668 = vcmp.eq.f32.partialorder %v2486, 0.0
      %v2669 = vand.u32 %v2486, 2147483648
      %v2670 = vsel %vm2668, %v2669, %v2667
      %v2671 = vrsqrt.pop %v2489
      %v2672 = vmul.f32 %v2489, %v2671
      %vm2673 = vcmp.eq.f32.partialorder %v2489, inf
      %v2674 = vsel %vm2673, %v2489, %v2672
      %vm2675 = vcmp.eq.f32.partialorder %v2489, 0.0
      %v2676 = vand.u32 %v2489, 2147483648
      %v2677 = vsel %vm2675, %v2676, %v2674
      %v2678 = vrsqrt.pop %v2492
      %v2679 = vmul.f32 %v2492, %v2678
      %vm2680 = vcmp.eq.f32.partialorder %v2492, inf
      %v2681 = vsel %vm2680, %v2492, %v2679
      %vm2682 = vcmp.eq.f32.partialorder %v2492, 0.0
      %v2683 = vand.u32 %v2492, 2147483648
      %v2684 = vsel %vm2682, %v2683, %v2681
      %v2685 = vrsqrt.pop %v2495
      %v2686 = vmul.f32 %v2495, %v2685
      %vm2687 = vcmp.eq.f32.partialorder %v2495, inf
      %v2688 = vsel %vm2687, %v2495, %v2686
      %vm2689 = vcmp.eq.f32.partialorder %v2495, 0.0
      %v2690 = vand.u32 %v2495, 2147483648
      %v2691 = vsel %vm2689, %v2690, %v2688
      %v2692 = vrsqrt.pop %v2498
      %v2693 = vmul.f32 %v2498, %v2692
      %vm2694 = vcmp.eq.f32.partialorder %v2498, inf
      %v2695 = vsel %vm2694, %v2498, %v2693
      %vm2696 = vcmp.eq.f32.partialorder %v2498, 0.0
      %v2697 = vand.u32 %v2498, 2147483648
      %v2698 = vsel %vm2696, %v2697, %v2695
      %v2699 = vrsqrt.pop %v2501
      %v2700 = vmul.f32 %v2501, %v2699
      %vm2701 = vcmp.eq.f32.partialorder %v2501, inf
      %v2702 = vsel %vm2701, %v2501, %v2700
      %vm2703 = vcmp.eq.f32.partialorder %v2501, 0.0
      %v2704 = vand.u32 %v2501, 2147483648
      %v2705 = vsel %vm2703, %v2704, %v2702
      %v2706 = vrsqrt.pop %v2504
      %v2707 = vmul.f32 %v2504, %v2706
      %vm2708 = vcmp.eq.f32.partialorder %v2504, inf
      %v2709 = vsel %vm2708, %v2504, %v2707
      %vm2710 = vcmp.eq.f32.partialorder %v2504, 0.0
      %v2711 = vand.u32 %v2504, 2147483648
      %v2712 = vsel %vm2710, %v2711, %v2709
      %v2713 = vrsqrt.pop %v2507
      %v2714 = vmul.f32 %v2507, %v2713
      %vm2715 = vcmp.eq.f32.partialorder %v2507, inf
      %v2716 = vsel %vm2715, %v2507, %v2714
      %vm2717 = vcmp.eq.f32.partialorder %v2507, 0.0
      %v2718 = vand.u32 %v2507, 2147483648
      %v2719 = vsel %vm2717, %v2718, %v2716
      %v2720 = vrsqrt.pop %v2510
      %v2721 = vmul.f32 %v2510, %v2720
      %vm2722 = vcmp.eq.f32.partialorder %v2510, inf
      %v2723 = vsel %vm2722, %v2510, %v2721
      %vm2724 = vcmp.eq.f32.partialorder %v2510, 0.0
      %v2725 = vand.u32 %v2510, 2147483648
      %v2726 = vsel %vm2724, %v2725, %v2723
      %v2727 = vrsqrt.pop %v2513
      %v2728 = vmul.f32 %v2513, %v2727
      %vm2729 = vcmp.eq.f32.partialorder %v2513, inf
      %v2730 = vsel %vm2729, %v2513, %v2728
      %vm2731 = vcmp.eq.f32.partialorder %v2513, 0.0
      %v2732 = vand.u32 %v2513, 2147483648
      %v2733 = vsel %vm2731, %v2732, %v2730
      %v2734 = vrsqrt.pop %v2516
      %v2735 = vmul.f32 %v2516, %v2734
      %vm2736 = vcmp.eq.f32.partialorder %v2516, inf
      %v2737 = vsel %vm2736, %v2516, %v2735
      %vm2738 = vcmp.eq.f32.partialorder %v2516, 0.0
      %v2739 = vand.u32 %v2516, 2147483648
      %v2740 = vsel %vm2738, %v2739, %v2737
      %v2741 = vmax.f32 %v2523, 1e-15
      %v2742 = vmax.f32 %v2530, 1e-15
      %v2743 = vmax.f32 %v2537, 1e-15
      %v2744 = vmax.f32 %v2544, 1e-15
      %v2745 = vmax.f32 %v2551, 1e-15
      %v2746 = vmax.f32 %v2558, 1e-15
      %v2747 = vmax.f32 %v2565, 1e-15
      %v2748 = vmax.f32 %v2572, 1e-15
      %v2749 = vmax.f32 %v2579, 1e-15
      %v2750 = vmax.f32 %v2586, 1e-15
      %v2751 = vmax.f32 %v2593, 1e-15
      %v2752 = vmax.f32 %v2600, 1e-15
      %v2753 = vmax.f32 %v2607, 1e-15
      %v2754 = vmax.f32 %v2614, 1e-15
      %v2755 = vmax.f32 %v2621, 1e-15
      %v2756 = vmax.f32 %v2628, 1e-15
      %v2757 = vmax.f32 %v2635, 1e-15
      %v2758 = vmax.f32 %v2642, 1e-15
      %v2759 = vmax.f32 %v2649, 1e-15
      %v2760 = vmax.f32 %v2656, 1e-15
      %v2761 = vmax.f32 %v2663, 1e-15
      %v2762 = vmax.f32 %v2670, 1e-15
      %v2763 = vmax.f32 %v2677, 1e-15
      %v2764 = vmax.f32 %v2684, 1e-15
      %v2765 = vmax.f32 %v2691, 1e-15
      %v2766 = vmax.f32 %v2698, 1e-15
      %v2767 = vmax.f32 %v2705, 1e-15
      %v2768 = vmax.f32 %v2712, 1e-15
      %v2769 = vmax.f32 %v2719, 1e-15
      %v2770 = vmax.f32 %v2726, 1e-15
      %v2771 = vmax.f32 %v2733, 1e-15
      %v2772 = vmax.f32 %v2740, 1e-15
      %vm2773 = vcmp.gt.f32.partialorder %v2741, 0.996
      %vm2774 = vcmp.gt.f32.partialorder %v2742, 0.996
      %vm2775 = vcmp.gt.f32.partialorder %v2743, 0.996
      %vm2776 = vcmp.gt.f32.partialorder %v2744, 0.996
      %vm2777 = vcmp.gt.f32.partialorder %v2745, 0.996
      %vm2778 = vcmp.gt.f32.partialorder %v2746, 0.996
      %vm2779 = vcmp.gt.f32.partialorder %v2747, 0.996
      %vm2780 = vcmp.gt.f32.partialorder %v2748, 0.996
      %vm2781 = vcmp.gt.f32.partialorder %v2749, 0.996
      %vm2782 = vcmp.gt.f32.partialorder %v2750, 0.996
      %vm2783 = vcmp.gt.f32.partialorder %v2751, 0.996
      %vm2784 = vcmp.gt.f32.partialorder %v2752, 0.996
      %vm2785 = vcmp.gt.f32.partialorder %v2753, 0.996
      %vm2786 = vcmp.gt.f32.partialorder %v2754, 0.996
      %vm2787 = vcmp.gt.f32.partialorder %v2755, 0.996
      %vm2788 = vcmp.gt.f32.partialorder %v2756, 0.996
      %vm2789 = vcmp.gt.f32.partialorder %v2757, 0.996
      %vm2790 = vcmp.gt.f32.partialorder %v2758, 0.996
      %vm2791 = vcmp.gt.f32.partialorder %v2759, 0.996
      %vm2792 = vcmp.gt.f32.partialorder %v2760, 0.996
      %vm2793 = vcmp.gt.f32.partialorder %v2761, 0.996
      %vm2794 = vcmp.gt.f32.partialorder %v2762, 0.996
      %vm2795 = vcmp.gt.f32.partialorder %v2763, 0.996
      %vm2796 = vcmp.gt.f32.partialorder %v2764, 0.996
      %vm2797 = vcmp.gt.f32.partialorder %v2765, 0.996
      %vm2798 = vcmp.gt.f32.partialorder %v2766, 0.996
      %vm2799 = vcmp.gt.f32.partialorder %v2767, 0.996
      %vm2800 = vcmp.gt.f32.partialorder %v2768, 0.996
      %vm2801 = vcmp.gt.f32.partialorder %v2769, 0.996
      %vm2802 = vcmp.gt.f32.partialorder %v2770, 0.996
      %vm2803 = vcmp.gt.f32.partialorder %v2771, 0.996
      %vm2804 = vcmp.gt.f32.partialorder %v2772, 0.996
      %v2805 = vrcp.pop %v2741
      %v2806 = vmul.f32 %v2357, %v2805
      %v2807 = vrcp.pop %v2742
      %v2808 = vmul.f32 %v2358, %v2807
      %v2809 = vrcp.pop %v2743
      %v2810 = vmul.f32 %v2359, %v2809
      %v2811 = vrcp.pop %v2744
      %v2812 = vmul.f32 %v2360, %v2811
      %v2813 = vrcp.pop %v2745
      %v2814 = vmul.f32 %v2361, %v2813
      %v2815 = vrcp.pop %v2746
      %v2816 = vmul.f32 %v2362, %v2815
      %v2817 = vrcp.pop %v2747
      %v2818 = vmul.f32 %v2363, %v2817
      %v2819 = vrcp.pop %v2748
      %v2820 = vmul.f32 %v2364, %v2819
      %v2821 = vrcp.pop %v2749
      %v2822 = vmul.f32 %v2365, %v2821
      %v2823 = vrcp.pop %v2750
      %v2824 = vmul.f32 %v2366, %v2823
      %v2825 = vrcp.pop %v2751
      %v2826 = vmul.f32 %v2367, %v2825
      %v2827 = vrcp.pop %v2752
      %v2828 = vmul.f32 %v2368, %v2827
      %v2829 = vrcp.pop %v2753
      %v2830 = vmul.f32 %v2369, %v2829
      %v2831 = vrcp.pop %v2754
      %v2832 = vmul.f32 %v2370, %v2831
      %v2833 = vrcp.pop %v2755
      %v2834 = vmul.f32 %v2371, %v2833
      %v2835 = vrcp.pop %v2756
      %v2836 = vmul.f32 %v2372, %v2835
      %v2837 = vrcp.pop %v2757
      %v2838 = vmul.f32 %v2373, %v2837
      %v2839 = vrcp.pop %v2758
      %v2840 = vmul.f32 %v2374, %v2839
      %v2841 = vrcp.pop %v2759
      %v2842 = vmul.f32 %v2375, %v2841
      %v2843 = vrcp.pop %v2760
      %v2844 = vmul.f32 %v2376, %v2843
      %v2845 = vrcp.pop %v2761
      %v2846 = vmul.f32 %v2377, %v2845
      %v2847 = vrcp.pop %v2762
      %v2848 = vmul.f32 %v2378, %v2847
      %v2849 = vrcp.pop %v2763
      %v2850 = vmul.f32 %v2379, %v2849
      %v2851 = vrcp.pop %v2764
      %v2852 = vmul.f32 %v2380, %v2851
      %v2853 = vrcp.pop %v2765
      %v2854 = vmul.f32 %v2381, %v2853
      %v2855 = vrcp.pop %v2766
      %v2856 = vmul.f32 %v2382, %v2855
      %v2857 = vrcp.pop %v2767
      %v2858 = vmul.f32 %v2383, %v2857
      %v2859 = vrcp.pop %v2768
      %v2860 = vmul.f32 %v2384, %v2859
      %v2861 = vrcp.pop %v2769
      %v2862 = vmul.f32 %v2385, %v2861
      %v2863 = vrcp.pop %v2770
      %v2864 = vmul.f32 %v2386, %v2863
      %v2865 = vrcp.pop %v2771
      %v2866 = vmul.f32 %v2387, %v2865
      %v2867 = vrcp.pop %v2772
      %v2868 = vmul.f32 %v2388, %v2867
      %v2869 = vmul.f32 %v2806, 0.996
      %v2870 = vmul.f32 %v2808, 0.996
      %v2871 = vmul.f32 %v2810, 0.996
      %v2872 = vmul.f32 %v2812, 0.996
      %v2873 = vmul.f32 %v2814, 0.996
      %v2874 = vmul.f32 %v2816, 0.996
      %v2875 = vmul.f32 %v2818, 0.996
      %v2876 = vmul.f32 %v2820, 0.996
      %v2877 = vmul.f32 %v2822, 0.996
      %v2878 = vmul.f32 %v2824, 0.996
      %v2879 = vmul.f32 %v2826, 0.996
      %v2880 = vmul.f32 %v2828, 0.996
      %v2881 = vmul.f32 %v2830, 0.996
      %v2882 = vmul.f32 %v2832, 0.996
      %v2883 = vmul.f32 %v2834, 0.996
      %v2884 = vmul.f32 %v2836, 0.996
      %v2885 = vmul.f32 %v2838, 0.996
      %v2886 = vmul.f32 %v2840, 0.996
      %v2887 = vmul.f32 %v2842, 0.996
      %v2888 = vmul.f32 %v2844, 0.996
      %v2889 = vmul.f32 %v2846, 0.996
      %v2890 = vmul.f32 %v2848, 0.996
      %v2891 = vmul.f32 %v2850, 0.996
      %v2892 = vmul.f32 %v2852, 0.996
      %v2893 = vmul.f32 %v2854, 0.996
      %v2894 = vmul.f32 %v2856, 0.996
      %v2895 = vmul.f32 %v2858, 0.996
      %v2896 = vmul.f32 %v2860, 0.996
      %v2897 = vmul.f32 %v2862, 0.996
      %v2898 = vmul.f32 %v2864, 0.996
      %v2899 = vmul.f32 %v2866, 0.996
      %v2900 = vmul.f32 %v2868, 0.996
      %v2901 = vsel %vm2773, 1, 0
      %v2902 = vsel %vm2774, 1, 0
      %v2903 = vsel %vm2775, 1, 0
      %v2904 = vsel %vm2776, 1, 0
      %v2905 = vsel %vm2777, 1, 0
      %v2906 = vsel %vm2778, 1, 0
      %v2907 = vsel %vm2779, 1, 0
      %v2908 = vsel %vm2780, 1, 0
      %v2909 = vsel %vm2781, 1, 0
      %v2910 = vsel %vm2782, 1, 0
      %v2911 = vsel %vm2783, 1, 0
      %v2912 = vsel %vm2784, 1, 0
      %v2913 = vsel %vm2785, 1, 0
      %v2914 = vsel %vm2786, 1, 0
      %v2915 = vsel %vm2787, 1, 0
      %v2916 = vsel %vm2788, 1, 0
      %v2917 = vsel %vm2789, 1, 0
      %v2918 = vsel %vm2790, 1, 0
      %v2919 = vsel %vm2791, 1, 0
      %v2920 = vsel %vm2792, 1, 0
      %v2921 = vsel %vm2793, 1, 0
      %v2922 = vsel %vm2794, 1, 0
      %v2923 = vsel %vm2795, 1, 0
      %v2924 = vsel %vm2796, 1, 0
      %v2925 = vsel %vm2797, 1, 0
      %v2926 = vsel %vm2798, 1, 0
      %v2927 = vsel %vm2799, 1, 0
      %v2928 = vsel %vm2800, 1, 0
      %v2929 = vsel %vm2801, 1, 0
      %v2930 = vsel %vm2802, 1, 0
      %v2931 = vsel %vm2803, 1, 0
      %v2932 = vsel %vm2804, 1, 0
      %vm2933 = vcmp.eq.s32.totalorder %v2901, 1
      %vm2934 = vcmp.eq.s32.totalorder %v2902, 1
      %vm2935 = vcmp.eq.s32.totalorder %v2903, 1
      %vm2936 = vcmp.eq.s32.totalorder %v2904, 1
      %vm2937 = vcmp.eq.s32.totalorder %v2905, 1
      %vm2938 = vcmp.eq.s32.totalorder %v2906, 1
      %vm2939 = vcmp.eq.s32.totalorder %v2907, 1
      %vm2940 = vcmp.eq.s32.totalorder %v2908, 1
      %vm2941 = vcmp.eq.s32.totalorder %v2909, 1
      %vm2942 = vcmp.eq.s32.totalorder %v2910, 1
      %vm2943 = vcmp.eq.s32.totalorder %v2911, 1
      %vm2944 = vcmp.eq.s32.totalorder %v2912, 1
      %vm2945 = vcmp.eq.s32.totalorder %v2913, 1
      %vm2946 = vcmp.eq.s32.totalorder %v2914, 1
      %vm2947 = vcmp.eq.s32.totalorder %v2915, 1
      %vm2948 = vcmp.eq.s32.totalorder %v2916, 1
      %vm2949 = vcmp.eq.s32.totalorder %v2917, 1
      %vm2950 = vcmp.eq.s32.totalorder %v2918, 1
      %vm2951 = vcmp.eq.s32.totalorder %v2919, 1
      %vm2952 = vcmp.eq.s32.totalorder %v2920, 1
      %vm2953 = vcmp.eq.s32.totalorder %v2921, 1
      %vm2954 = vcmp.eq.s32.totalorder %v2922, 1
      %vm2955 = vcmp.eq.s32.totalorder %v2923, 1
      %vm2956 = vcmp.eq.s32.totalorder %v2924, 1
      %vm2957 = vcmp.eq.s32.totalorder %v2925, 1
      %vm2958 = vcmp.eq.s32.totalorder %v2926, 1
      %vm2959 = vcmp.eq.s32.totalorder %v2927, 1
      %vm2960 = vcmp.eq.s32.totalorder %v2928, 1
      %vm2961 = vcmp.eq.s32.totalorder %v2929, 1
      %vm2962 = vcmp.eq.s32.totalorder %v2930, 1
      %vm2963 = vcmp.eq.s32.totalorder %v2931, 1
      %vm2964 = vcmp.eq.s32.totalorder %v2932, 1
      %v2965 = vsel %vm2933, %v2869, %v2357
      %v2966 = vsel %vm2934, %v2870, %v2358
      %v2967 = vsel %vm2935, %v2871, %v2359
      %v2968 = vsel %vm2936, %v2872, %v2360
      %v2969 = vsel %vm2937, %v2873, %v2361
      %v2970 = vsel %vm2938, %v2874, %v2362
      %v2971 = vsel %vm2939, %v2875, %v2363
      %v2972 = vsel %vm2940, %v2876, %v2364
      %v2973 = vsel %vm2941, %v2877, %v2365
      %v2974 = vsel %vm2942, %v2878, %v2366
      %v2975 = vsel %vm2943, %v2879, %v2367
      %v2976 = vsel %vm2944, %v2880, %v2368
      %v2977 = vsel %vm2945, %v2881, %v2369
      %v2978 = vsel %vm2946, %v2882, %v2370
      %v2979 = vsel %vm2947, %v2883, %v2371
      %v2980 = vsel %vm2948, %v2884, %v2372
      %v2981 = vsel %vm2949, %v2885, %v2373
      %v2982 = vsel %vm2950, %v2886, %v2374
      %v2983 = vsel %vm2951, %v2887, %v2375
      %v2984 = vsel %vm2952, %v2888, %v2376
      %v2985 = vsel %vm2953, %v2889, %v2377
      %v2986 = vsel %vm2954, %v2890, %v2378
      %v2987 = vsel %vm2955, %v2891, %v2379
      %v2988 = vsel %vm2956, %v2892, %v2380
      %v2989 = vsel %vm2957, %v2893, %v2381
      %v2990 = vsel %vm2958, %v2894, %v2382
      %v2991 = vsel %vm2959, %v2895, %v2383
      %v2992 = vsel %vm2960, %v2896, %v2384
      %v2993 = vsel %vm2961, %v2897, %v2385
      %v2994 = vsel %vm2962, %v2898, %v2386
      %v2995 = vsel %vm2963, %v2899, %v2387
      %v2996 = vsel %vm2964, %v2900, %v2388
      %v2997 = vmul.f32 %v2965, %v2965
      %v2998 = vmul.f32 %v2966, %v2966
      %v2999 = vmul.f32 %v2967, %v2967
      %v3000 = vmul.f32 %v2968, %v2968
      %v3001 = vmul.f32 %v2969, %v2969
      %v3002 = vmul.f32 %v2970, %v2970
      %v3003 = vmul.f32 %v2971, %v2971
      %v3004 = vmul.f32 %v2972, %v2972
      %v3005 = vmul.f32 %v2973, %v2973
      %v3006 = vmul.f32 %v2974, %v2974
      %v3007 = vmul.f32 %v2975, %v2975
      %v3008 = vmul.f32 %v2976, %v2976
      %v3009 = vmul.f32 %v2977, %v2977
      %v3010 = vmul.f32 %v2978, %v2978
      %v3011 = vmul.f32 %v2979, %v2979
      %v3012 = vmul.f32 %v2980, %v2980
      %v3013 = vmul.f32 %v2981, %v2981
      %v3014 = vmul.f32 %v2982, %v2982
      %v3015 = vmul.f32 %v2983, %v2983
      %v3016 = vmul.f32 %v2984, %v2984
      %v3017 = vmul.f32 %v2985, %v2985
      %v3018 = vmul.f32 %v2986, %v2986
      %v3019 = vmul.f32 %v2987, %v2987
      %v3020 = vmul.f32 %v2988, %v2988
      %v3021 = vmul.f32 %v2989, %v2989
      %v3022 = vmul.f32 %v2990, %v2990
      %v3023 = vmul.f32 %v2991, %v2991
      %v3024 = vmul.f32 %v2992, %v2992
      %v3025 = vmul.f32 %v2993, %v2993
      %v3026 = vmul.f32 %v2994, %v2994
      %v3027 = vmul.f32 %v2995, %v2995
      %v3028 = vmul.f32 %v2996, %v2996
      %v3029 = vsel %vm243, %v2997, 0.0
      %3030 = vadd.xlane.f32.xlu0 %v3029
      %v3031 = vpop.xlane.xlu0 %3030
      %v3032 = vsel %vm243, %v2998, 0.0
      %3033 = vadd.xlane.f32.xlu0 %v3032
      %v3034 = vpop.xlane.xlu0 %3033
      %v3035 = vsel %vm243, %v2999, 0.0
      %3036 = vadd.xlane.f32.xlu0 %v3035
      %v3037 = vpop.xlane.xlu0 %3036
      %v3038 = vsel %vm243, %v3000, 0.0
      %3039 = vadd.xlane.f32.xlu0 %v3038
      %v3040 = vpop.xlane.xlu0 %3039
      %v3041 = vsel %vm243, %v3001, 0.0
      %3042 = vadd.xlane.f32.xlu0 %v3041
      %v3043 = vpop.xlane.xlu0 %3042
      %v3044 = vsel %vm243, %v3002, 0.0
      %3045 = vadd.xlane.f32.xlu0 %v3044
      %v3046 = vpop.xlane.xlu0 %3045
      %v3047 = vsel %vm243, %v3003, 0.0
      %3048 = vadd.xlane.f32.xlu0 %v3047
      %v3049 = vpop.xlane.xlu0 %3048
      %v3050 = vsel %vm243, %v3004, 0.0
      %3051 = vadd.xlane.f32.xlu0 %v3050
      %v3052 = vpop.xlane.xlu0 %3051
      %v3053 = vsel %vm243, %v3005, 0.0
      %3054 = vadd.xlane.f32.xlu0 %v3053
      %v3055 = vpop.xlane.xlu0 %3054
      %v3056 = vsel %vm243, %v3006, 0.0
      %3057 = vadd.xlane.f32.xlu0 %v3056
      %v3058 = vpop.xlane.xlu0 %3057
      %v3059 = vsel %vm243, %v3007, 0.0
      %3060 = vadd.xlane.f32.xlu0 %v3059
      %v3061 = vpop.xlane.xlu0 %3060
      %v3062 = vsel %vm243, %v3008, 0.0
      %3063 = vadd.xlane.f32.xlu0 %v3062
      %v3064 = vpop.xlane.xlu0 %3063
      %v3065 = vsel %vm243, %v3009, 0.0
      %3066 = vadd.xlane.f32.xlu0 %v3065
      %v3067 = vpop.xlane.xlu0 %3066
      %v3068 = vsel %vm243, %v3010, 0.0
      %3069 = vadd.xlane.f32.xlu0 %v3068
      %v3070 = vpop.xlane.xlu0 %3069
      %v3071 = vsel %vm243, %v3011, 0.0
      %3072 = vadd.xlane.f32.xlu0 %v3071
      %v3073 = vpop.xlane.xlu0 %3072
      %v3074 = vsel %vm243, %v3012, 0.0
      %3075 = vadd.xlane.f32.xlu0 %v3074
      %v3076 = vpop.xlane.xlu0 %3075
      %v3077 = vsel %vm243, %v3013, 0.0
      %3078 = vadd.xlane.f32.xlu0 %v3077
      %v3079 = vpop.xlane.xlu0 %3078
      %v3080 = vsel %vm243, %v3014, 0.0
      %3081 = vadd.xlane.f32.xlu0 %v3080
      %v3082 = vpop.xlane.xlu0 %3081
      %v3083 = vsel %vm243, %v3015, 0.0
      %3084 = vadd.xlane.f32.xlu0 %v3083
      %v3085 = vpop.xlane.xlu0 %3084
      %v3086 = vsel %vm243, %v3016, 0.0
      %3087 = vadd.xlane.f32.xlu0 %v3086
      %v3088 = vpop.xlane.xlu0 %3087
      %v3089 = vsel %vm243, %v3017, 0.0
      %3090 = vadd.xlane.f32.xlu0 %v3089
      %v3091 = vpop.xlane.xlu0 %3090
      %v3092 = vsel %vm243, %v3018, 0.0
      %3093 = vadd.xlane.f32.xlu0 %v3092
      %v3094 = vpop.xlane.xlu0 %3093
      %v3095 = vsel %vm243, %v3019, 0.0
      %3096 = vadd.xlane.f32.xlu0 %v3095
      %v3097 = vpop.xlane.xlu0 %3096
      %v3098 = vsel %vm243, %v3020, 0.0
      %3099 = vadd.xlane.f32.xlu0 %v3098
      %v3100 = vpop.xlane.xlu0 %3099
      %v3101 = vsel %vm243, %v3021, 0.0
      %3102 = vadd.xlane.f32.xlu0 %v3101
      %v3103 = vpop.xlane.xlu0 %3102
      %v3104 = vsel %vm243, %v3022, 0.0
      %3105 = vadd.xlane.f32.xlu0 %v3104
      %v3106 = vpop.xlane.xlu0 %3105
      %v3107 = vsel %vm243, %v3023, 0.0
      %3108 = vadd.xlane.f32.xlu0 %v3107
      %v3109 = vpop.xlane.xlu0 %3108
      %v3110 = vsel %vm243, %v3024, 0.0
      %3111 = vadd.xlane.f32.xlu0 %v3110
      %v3112 = vpop.xlane.xlu0 %3111
      %v3113 = vsel %vm243, %v3025, 0.0
      %3114 = vadd.xlane.f32.xlu0 %v3113
      %v3115 = vpop.xlane.xlu0 %3114
      %v3116 = vsel %vm243, %v3026, 0.0
      %3117 = vadd.xlane.f32.xlu0 %v3116
      %v3118 = vpop.xlane.xlu0 %3117
      %v3119 = vsel %vm243, %v3027, 0.0
      %3120 = vadd.xlane.f32.xlu0 %v3119
      %v3121 = vpop.xlane.xlu0 %3120
      %v3122 = vsel %vm243, %v3028, 0.0
      %3123 = vadd.xlane.f32.xlu0 %v3122
      %v3124 = vpop.xlane.xlu0 %3123
      %v3125 = vmul.f32 %v210, %v210
      %vm3126 = vcmask 253952
      %v3127 = vsel %vm3126, %v3125, 0.0
      %3128 = vadd.xlane.f32.xlu0 %v3127
      %v3129 = vpop.xlane.xlu0 %3128
      %v3131 = vlaneseq
      %v3132 = vshrl.u32 %v3131, 7
      %v3133 = vsub.s32 0, %v3132
      %v3134 = vrot.slane %v210, %v3133
      %v3136 = vmul.f32 %v2965, %v3134
      %v3137 = vmul.f32 %v2966, %v3134
      %v3138 = vmul.f32 %v2967, %v3134
      %v3139 = vmul.f32 %v2968, %v3134
      %v3140 = vmul.f32 %v2969, %v3134
      %v3141 = vmul.f32 %v2970, %v3134
      %v3142 = vmul.f32 %v2971, %v3134
      %v3143 = vmul.f32 %v2972, %v3134
      %v3144 = vmul.f32 %v2973, %v3134
      %v3145 = vmul.f32 %v2974, %v3134
      %v3146 = vmul.f32 %v2975, %v3134
      %v3147 = vmul.f32 %v2976, %v3134
      %v3148 = vmul.f32 %v2977, %v3134
      %v3149 = vmul.f32 %v2978, %v3134
      %v3150 = vmul.f32 %v2979, %v3134
      %v3151 = vmul.f32 %v2980, %v3134
      %v3152 = vmul.f32 %v2981, %v3134
      %v3153 = vmul.f32 %v2982, %v3134
      %v3154 = vmul.f32 %v2983, %v3134
      %v3155 = vmul.f32 %v2984, %v3134
      %v3156 = vmul.f32 %v2985, %v3134
      %v3157 = vmul.f32 %v2986, %v3134
      %v3158 = vmul.f32 %v2987, %v3134
      %v3159 = vmul.f32 %v2988, %v3134
      %v3160 = vmul.f32 %v2989, %v3134
      %v3161 = vmul.f32 %v2990, %v3134
      %v3162 = vmul.f32 %v2991, %v3134
      %v3163 = vmul.f32 %v2992, %v3134
      %v3164 = vmul.f32 %v2993, %v3134
      %v3165 = vmul.f32 %v2994, %v3134
      %v3166 = vmul.f32 %v2995, %v3134
      %v3167 = vmul.f32 %v2996, %v3134
      %v3168 = vsel %vm243, %v3136, 0.0
      %3169 = vadd.xlane.f32.xlu0 %v3168
      %v3170 = vpop.xlane.xlu0 %3169
      %v3171 = vsel %vm243, %v3137, 0.0
      %3172 = vadd.xlane.f32.xlu0 %v3171
      %v3173 = vpop.xlane.xlu0 %3172
      %v3174 = vsel %vm243, %v3138, 0.0
      %3175 = vadd.xlane.f32.xlu0 %v3174
      %v3176 = vpop.xlane.xlu0 %3175
      %v3177 = vsel %vm243, %v3139, 0.0
      %3178 = vadd.xlane.f32.xlu0 %v3177
      %v3179 = vpop.xlane.xlu0 %3178
      %v3180 = vsel %vm243, %v3140, 0.0
      %3181 = vadd.xlane.f32.xlu0 %v3180
      %v3182 = vpop.xlane.xlu0 %3181
      %v3183 = vsel %vm243, %v3141, 0.0
      %3184 = vadd.xlane.f32.xlu0 %v3183
      %v3185 = vpop.xlane.xlu0 %3184
      %v3186 = vsel %vm243, %v3142, 0.0
      %3187 = vadd.xlane.f32.xlu0 %v3186
      %v3188 = vpop.xlane.xlu0 %3187
      %v3189 = vsel %vm243, %v3143, 0.0
      %3190 = vadd.xlane.f32.xlu0 %v3189
      %v3191 = vpop.xlane.xlu0 %3190
      %v3192 = vsel %vm243, %v3144, 0.0
      %3193 = vadd.xlane.f32.xlu0 %v3192
      %v3194 = vpop.xlane.xlu0 %3193
      %v3195 = vsel %vm243, %v3145, 0.0
      %3196 = vadd.xlane.f32.xlu0 %v3195
      %v3197 = vpop.xlane.xlu0 %3196
      %v3198 = vsel %vm243, %v3146, 0.0
      %3199 = vadd.xlane.f32.xlu0 %v3198
      %v3200 = vpop.xlane.xlu0 %3199
      %v3201 = vsel %vm243, %v3147, 0.0
      %3202 = vadd.xlane.f32.xlu0 %v3201
      %v3203 = vpop.xlane.xlu0 %3202
      %v3204 = vsel %vm243, %v3148, 0.0
      %3205 = vadd.xlane.f32.xlu0 %v3204
      %v3206 = vpop.xlane.xlu0 %3205
      %v3207 = vsel %vm243, %v3149, 0.0
      %3208 = vadd.xlane.f32.xlu0 %v3207
      %v3209 = vpop.xlane.xlu0 %3208
      %v3210 = vsel %vm243, %v3150, 0.0
      %3211 = vadd.xlane.f32.xlu0 %v3210
      %v3212 = vpop.xlane.xlu0 %3211
      %v3213 = vsel %vm243, %v3151, 0.0
      %3214 = vadd.xlane.f32.xlu0 %v3213
      %v3215 = vpop.xlane.xlu0 %3214
      %v3216 = vsel %vm243, %v3152, 0.0
      %3217 = vadd.xlane.f32.xlu0 %v3216
      %v3218 = vpop.xlane.xlu0 %3217
      %v3219 = vsel %vm243, %v3153, 0.0
      %3220 = vadd.xlane.f32.xlu0 %v3219
      %v3221 = vpop.xlane.xlu0 %3220
      %v3222 = vsel %vm243, %v3154, 0.0
      %3223 = vadd.xlane.f32.xlu0 %v3222
      %v3224 = vpop.xlane.xlu0 %3223
      %v3225 = vsel %vm243, %v3155, 0.0
      %3226 = vadd.xlane.f32.xlu0 %v3225
      %v3227 = vpop.xlane.xlu0 %3226
      %v3228 = vsel %vm243, %v3156, 0.0
      %3229 = vadd.xlane.f32.xlu0 %v3228
      %v3230 = vpop.xlane.xlu0 %3229
      %v3231 = vsel %vm243, %v3157, 0.0
      %3232 = vadd.xlane.f32.xlu0 %v3231
      %v3233 = vpop.xlane.xlu0 %3232
      %v3234 = vsel %vm243, %v3158, 0.0
      %3235 = vadd.xlane.f32.xlu0 %v3234
      %v3236 = vpop.xlane.xlu0 %3235
      %v3237 = vsel %vm243, %v3159, 0.0
      %3238 = vadd.xlane.f32.xlu0 %v3237
      %v3239 = vpop.xlane.xlu0 %3238
      %v3240 = vsel %vm243, %v3160, 0.0
      %3241 = vadd.xlane.f32.xlu0 %v3240
      %v3242 = vpop.xlane.xlu0 %3241
      %v3243 = vsel %vm243, %v3161, 0.0
      %3244 = vadd.xlane.f32.xlu0 %v3243
      %v3245 = vpop.xlane.xlu0 %3244
      %v3246 = vsel %vm243, %v3162, 0.0
      %3247 = vadd.xlane.f32.xlu0 %v3246
      %v3248 = vpop.xlane.xlu0 %3247
      %v3249 = vsel %vm243, %v3163, 0.0
      %3250 = vadd.xlane.f32.xlu0 %v3249
      %v3251 = vpop.xlane.xlu0 %3250
      %v3252 = vsel %vm243, %v3164, 0.0
      %3253 = vadd.xlane.f32.xlu0 %v3252
      %v3254 = vpop.xlane.xlu0 %3253
      %v3255 = vsel %vm243, %v3165, 0.0
      %3256 = vadd.xlane.f32.xlu0 %v3255
      %v3257 = vpop.xlane.xlu0 %3256
      %v3258 = vsel %vm243, %v3166, 0.0
      %3259 = vadd.xlane.f32.xlu0 %v3258
      %v3260 = vpop.xlane.xlu0 %3259
      %v3261 = vsel %vm243, %v3167, 0.0
      %3262 = vadd.xlane.f32.xlu0 %v3261
      %v3263 = vpop.xlane.xlu0 %3262
      %v3264 = vmul.f32 %v3170, 2.0
      %v3265 = vmul.f32 %v3173, 2.0
      %v3266 = vmul.f32 %v3176, 2.0
      %v3267 = vmul.f32 %v3179, 2.0
      %v3268 = vmul.f32 %v3182, 2.0
      %v3269 = vmul.f32 %v3185, 2.0
      %v3270 = vmul.f32 %v3188, 2.0
      %v3271 = vmul.f32 %v3191, 2.0
      %v3272 = vmul.f32 %v3194, 2.0
      %v3273 = vmul.f32 %v3197, 2.0
      %v3274 = vmul.f32 %v3200, 2.0
      %v3275 = vmul.f32 %v3203, 2.0
      %v3276 = vmul.f32 %v3206, 2.0
      %v3277 = vmul.f32 %v3209, 2.0
      %v3278 = vmul.f32 %v3212, 2.0
      %v3279 = vmul.f32 %v3215, 2.0
      %v3280 = vmul.f32 %v3218, 2.0
      %v3281 = vmul.f32 %v3221, 2.0
      %v3282 = vmul.f32 %v3224, 2.0
      %v3283 = vmul.f32 %v3227, 2.0
      %v3284 = vmul.f32 %v3230, 2.0
      %v3285 = vmul.f32 %v3233, 2.0
      %v3286 = vmul.f32 %v3236, 2.0
      %v3287 = vmul.f32 %v3239, 2.0
      %v3288 = vmul.f32 %v3242, 2.0
      %v3289 = vmul.f32 %v3245, 2.0
      %v3290 = vmul.f32 %v3248, 2.0
      %v3291 = vmul.f32 %v3251, 2.0
      %v3292 = vmul.f32 %v3254, 2.0
      %v3293 = vmul.f32 %v3257, 2.0
      %v3294 = vmul.f32 %v3260, 2.0
      %v3295 = vmul.f32 %v3263, 2.0
      %v3296 = vadd.f32 %v3264, 1.0
      %v3297 = vadd.f32 %v3265, 1.0
      %v3298 = vadd.f32 %v3266, 1.0
      %v3299 = vadd.f32 %v3267, 1.0
      %v3300 = vadd.f32 %v3268, 1.0
      %v3301 = vadd.f32 %v3269, 1.0
      %v3302 = vadd.f32 %v3270, 1.0
      %v3303 = vadd.f32 %v3271, 1.0
      %v3304 = vadd.f32 %v3272, 1.0
      %v3305 = vadd.f32 %v3273, 1.0
      %v3306 = vadd.f32 %v3274, 1.0
      %v3307 = vadd.f32 %v3275, 1.0
      %v3308 = vadd.f32 %v3276, 1.0
      %v3309 = vadd.f32 %v3277, 1.0
      %v3310 = vadd.f32 %v3278, 1.0
      %v3311 = vadd.f32 %v3279, 1.0
      %v3312 = vadd.f32 %v3280, 1.0
      %v3313 = vadd.f32 %v3281, 1.0
      %v3314 = vadd.f32 %v3282, 1.0
      %v3315 = vadd.f32 %v3283, 1.0
      %v3316 = vadd.f32 %v3284, 1.0
      %v3317 = vadd.f32 %v3285, 1.0
      %v3318 = vadd.f32 %v3286, 1.0
      %v3319 = vadd.f32 %v3287, 1.0
      %v3320 = vadd.f32 %v3288, 1.0
      %v3321 = vadd.f32 %v3289, 1.0
      %v3322 = vadd.f32 %v3290, 1.0
      %v3323 = vadd.f32 %v3291, 1.0
      %v3324 = vadd.f32 %v3292, 1.0
      %v3325 = vadd.f32 %v3293, 1.0
      %v3326 = vadd.f32 %v3294, 1.0
      %v3327 = vadd.f32 %v3295, 1.0
      %v3328 = vlaneseq
      %v3329 = vshrl.u32 %v3328, 7
      %v3330 = vsub.s32 0, %v3329
      %v3331 = vrot.slane %v3129, %v3330
      %v3332 = vadd.f32 %v3296, %v3331
      %v3333 = vadd.f32 %v3297, %v3331
      %v3334 = vadd.f32 %v3298, %v3331
      %v3335 = vadd.f32 %v3299, %v3331
      %v3336 = vadd.f32 %v3300, %v3331
      %v3337 = vadd.f32 %v3301, %v3331
      %v3338 = vadd.f32 %v3302, %v3331
      %v3339 = vadd.f32 %v3303, %v3331
      %v3340 = vadd.f32 %v3304, %v3331
      %v3341 = vadd.f32 %v3305, %v3331
      %v3342 = vadd.f32 %v3306, %v3331
      %v3343 = vadd.f32 %v3307, %v3331
      %v3344 = vadd.f32 %v3308, %v3331
      %v3345 = vadd.f32 %v3309, %v3331
      %v3346 = vadd.f32 %v3310, %v3331
      %v3347 = vadd.f32 %v3311, %v3331
      %v3348 = vadd.f32 %v3312, %v3331
      %v3349 = vadd.f32 %v3313, %v3331
      %v3350 = vadd.f32 %v3314, %v3331
      %v3351 = vadd.f32 %v3315, %v3331
      %v3352 = vadd.f32 %v3316, %v3331
      %v3353 = vadd.f32 %v3317, %v3331
      %v3354 = vadd.f32 %v3318, %v3331
      %v3355 = vadd.f32 %v3319, %v3331
      %v3356 = vadd.f32 %v3320, %v3331
      %v3357 = vadd.f32 %v3321, %v3331
      %v3358 = vadd.f32 %v3322, %v3331
      %v3359 = vadd.f32 %v3323, %v3331
      %v3360 = vadd.f32 %v3324, %v3331
      %v3361 = vadd.f32 %v3325, %v3331
      %v3362 = vadd.f32 %v3326, %v3331
      %v3363 = vadd.f32 %v3327, %v3331
      %v3364 = vmul.f32 %v3332, %v2965
      %v3365 = vmul.f32 %v3333, %v2966
      %v3366 = vmul.f32 %v3334, %v2967
      %v3367 = vmul.f32 %v3335, %v2968
      %v3368 = vmul.f32 %v3336, %v2969
      %v3369 = vmul.f32 %v3337, %v2970
      %v3370 = vmul.f32 %v3338, %v2971
      %v3371 = vmul.f32 %v3339, %v2972
      %v3372 = vmul.f32 %v3340, %v2973
      %v3373 = vmul.f32 %v3341, %v2974
      %v3374 = vmul.f32 %v3342, %v2975
      %v3375 = vmul.f32 %v3343, %v2976
      %v3376 = vmul.f32 %v3344, %v2977
      %v3377 = vmul.f32 %v3345, %v2978
      %v3378 = vmul.f32 %v3346, %v2979
      %v3379 = vmul.f32 %v3347, %v2980
      %v3380 = vmul.f32 %v3348, %v2981
      %v3381 = vmul.f32 %v3349, %v2982
      %v3382 = vmul.f32 %v3350, %v2983
      %v3383 = vmul.f32 %v3351, %v2984
      %v3384 = vmul.f32 %v3352, %v2985
      %v3385 = vmul.f32 %v3353, %v2986
      %v3386 = vmul.f32 %v3354, %v2987
      %v3387 = vmul.f32 %v3355, %v2988
      %v3388 = vmul.f32 %v3356, %v2989
      %v3389 = vmul.f32 %v3357, %v2990
      %v3390 = vmul.f32 %v3358, %v2991
      %v3391 = vmul.f32 %v3359, %v2992
      %v3392 = vmul.f32 %v3360, %v2993
      %v3393 = vmul.f32 %v3361, %v2994
      %v3394 = vmul.f32 %v3362, %v2995
      %v3395 = vmul.f32 %v3363, %v2996
      %v3396 = vsub.f32 1.0, %v3031
      %v3397 = vsub.f32 1.0, %v3034
      %v3398 = vsub.f32 1.0, %v3037
      %v3399 = vsub.f32 1.0, %v3040
      %v3400 = vsub.f32 1.0, %v3043
      %v3401 = vsub.f32 1.0, %v3046
      %v3402 = vsub.f32 1.0, %v3049
      %v3403 = vsub.f32 1.0, %v3052
      %v3404 = vsub.f32 1.0, %v3055
      %v3405 = vsub.f32 1.0, %v3058
      %v3406 = vsub.f32 1.0, %v3061
      %v3407 = vsub.f32 1.0, %v3064
      %v3408 = vsub.f32 1.0, %v3067
      %v3409 = vsub.f32 1.0, %v3070
      %v3410 = vsub.f32 1.0, %v3073
      %v3411 = vsub.f32 1.0, %v3076
      %v3412 = vsub.f32 1.0, %v3079
      %v3413 = vsub.f32 1.0, %v3082
      %v3414 = vsub.f32 1.0, %v3085
      %v3415 = vsub.f32 1.0, %v3088
      %v3416 = vsub.f32 1.0, %v3091
      %v3417 = vsub.f32 1.0, %v3094
      %v3418 = vsub.f32 1.0, %v3097
      %v3419 = vsub.f32 1.0, %v3100
      %v3420 = vsub.f32 1.0, %v3103
      %v3421 = vsub.f32 1.0, %v3106
      %v3422 = vsub.f32 1.0, %v3109
      %v3423 = vsub.f32 1.0, %v3112
      %v3424 = vsub.f32 1.0, %v3115
      %v3425 = vsub.f32 1.0, %v3118
      %v3426 = vsub.f32 1.0, %v3121
      %v3427 = vsub.f32 1.0, %v3124
      %v3428 = vmul.f32 %v3396, %v3134
      %v3429 = vmul.f32 %v3397, %v3134
      %v3430 = vmul.f32 %v3398, %v3134
      %v3431 = vmul.f32 %v3399, %v3134
      %v3432 = vmul.f32 %v3400, %v3134
      %v3433 = vmul.f32 %v3401, %v3134
      %v3434 = vmul.f32 %v3402, %v3134
      %v3435 = vmul.f32 %v3403, %v3134
      %v3436 = vmul.f32 %v3404, %v3134
      %v3437 = vmul.f32 %v3405, %v3134
      %v3438 = vmul.f32 %v3406, %v3134
      %v3439 = vmul.f32 %v3407, %v3134
      %v3440 = vmul.f32 %v3408, %v3134
      %v3441 = vmul.f32 %v3409, %v3134
      %v3442 = vmul.f32 %v3410, %v3134
      %v3443 = vmul.f32 %v3411, %v3134
      %v3444 = vmul.f32 %v3412, %v3134
      %v3445 = vmul.f32 %v3413, %v3134
      %v3446 = vmul.f32 %v3414, %v3134
      %v3447 = vmul.f32 %v3415, %v3134
      %v3448 = vmul.f32 %v3416, %v3134
      %v3449 = vmul.f32 %v3417, %v3134
      %v3450 = vmul.f32 %v3418, %v3134
      %v3451 = vmul.f32 %v3419, %v3134
      %v3452 = vmul.f32 %v3420, %v3134
      %v3453 = vmul.f32 %v3421, %v3134
      %v3454 = vmul.f32 %v3422, %v3134
      %v3455 = vmul.f32 %v3423, %v3134
      %v3456 = vmul.f32 %v3424, %v3134
      %v3457 = vmul.f32 %v3425, %v3134
      %v3458 = vmul.f32 %v3426, %v3134
      %v3459 = vmul.f32 %v3427, %v3134
      %v3460 = vadd.f32 %v3364, %v3428
      %v3461 = vadd.f32 %v3365, %v3429
      %v3462 = vadd.f32 %v3366, %v3430
      %v3463 = vadd.f32 %v3367, %v3431
      %v3464 = vadd.f32 %v3368, %v3432
      %v3465 = vadd.f32 %v3369, %v3433
      %v3466 = vadd.f32 %v3370, %v3434
      %v3467 = vadd.f32 %v3371, %v3435
      %v3468 = vadd.f32 %v3372, %v3436
      %v3469 = vadd.f32 %v3373, %v3437
      %v3470 = vadd.f32 %v3374, %v3438
      %v3471 = vadd.f32 %v3375, %v3439
      %v3472 = vadd.f32 %v3376, %v3440
      %v3473 = vadd.f32 %v3377, %v3441
      %v3474 = vadd.f32 %v3378, %v3442
      %v3475 = vadd.f32 %v3379, %v3443
      %v3476 = vadd.f32 %v3380, %v3444
      %v3477 = vadd.f32 %v3381, %v3445
      %v3478 = vadd.f32 %v3382, %v3446
      %v3479 = vadd.f32 %v3383, %v3447
      %v3480 = vadd.f32 %v3384, %v3448
      %v3481 = vadd.f32 %v3385, %v3449
      %v3482 = vadd.f32 %v3386, %v3450
      %v3483 = vadd.f32 %v3387, %v3451
      %v3484 = vadd.f32 %v3388, %v3452
      %v3485 = vadd.f32 %v3389, %v3453
      %v3486 = vadd.f32 %v3390, %v3454
      %v3487 = vadd.f32 %v3391, %v3455
      %v3488 = vadd.f32 %v3392, %v3456
      %v3489 = vadd.f32 %v3393, %v3457
      %v3490 = vadd.f32 %v3394, %v3458
      %v3491 = vadd.f32 %v3395, %v3459
      %v3492 = vmul.f32 %v3031, %v3331
      %v3493 = vmul.f32 %v3034, %v3331
      %v3494 = vmul.f32 %v3037, %v3331
      %v3495 = vmul.f32 %v3040, %v3331
      %v3496 = vmul.f32 %v3043, %v3331
      %v3497 = vmul.f32 %v3046, %v3331
      %v3498 = vmul.f32 %v3049, %v3331
      %v3499 = vmul.f32 %v3052, %v3331
      %v3500 = vmul.f32 %v3055, %v3331
      %v3501 = vmul.f32 %v3058, %v3331
      %v3502 = vmul.f32 %v3061, %v3331
      %v3503 = vmul.f32 %v3064, %v3331
      %v3504 = vmul.f32 %v3067, %v3331
      %v3505 = vmul.f32 %v3070, %v3331
      %v3506 = vmul.f32 %v3073, %v3331
      %v3507 = vmul.f32 %v3076, %v3331
      %v3508 = vmul.f32 %v3079, %v3331
      %v3509 = vmul.f32 %v3082, %v3331
      %v3510 = vmul.f32 %v3085, %v3331
      %v3511 = vmul.f32 %v3088, %v3331
      %v3512 = vmul.f32 %v3091, %v3331
      %v3513 = vmul.f32 %v3094, %v3331
      %v3514 = vmul.f32 %v3097, %v3331
      %v3515 = vmul.f32 %v3100, %v3331
      %v3516 = vmul.f32 %v3103, %v3331
      %v3517 = vmul.f32 %v3106, %v3331
      %v3518 = vmul.f32 %v3109, %v3331
      %v3519 = vmul.f32 %v3112, %v3331
      %v3520 = vmul.f32 %v3115, %v3331
      %v3521 = vmul.f32 %v3118, %v3331
      %v3522 = vmul.f32 %v3121, %v3331
      %v3523 = vmul.f32 %v3124, %v3331
      %v3524 = vadd.f32 %v3296, %v3492
      %v3525 = vadd.f32 %v3297, %v3493
      %v3526 = vadd.f32 %v3298, %v3494
      %v3527 = vadd.f32 %v3299, %v3495
      %v3528 = vadd.f32 %v3300, %v3496
      %v3529 = vadd.f32 %v3301, %v3497
      %v3530 = vadd.f32 %v3302, %v3498
      %v3531 = vadd.f32 %v3303, %v3499
      %v3532 = vadd.f32 %v3304, %v3500
      %v3533 = vadd.f32 %v3305, %v3501
      %v3534 = vadd.f32 %v3306, %v3502
      %v3535 = vadd.f32 %v3307, %v3503
      %v3536 = vadd.f32 %v3308, %v3504
      %v3537 = vadd.f32 %v3309, %v3505
      %v3538 = vadd.f32 %v3310, %v3506
      %v3539 = vadd.f32 %v3311, %v3507
      %v3540 = vadd.f32 %v3312, %v3508
      %v3541 = vadd.f32 %v3313, %v3509
      %v3542 = vadd.f32 %v3314, %v3510
      %v3543 = vadd.f32 %v3315, %v3511
      %v3544 = vadd.f32 %v3316, %v3512
      %v3545 = vadd.f32 %v3317, %v3513
      %v3546 = vadd.f32 %v3318, %v3514
      %v3547 = vadd.f32 %v3319, %v3515
      %v3548 = vadd.f32 %v3320, %v3516
      %v3549 = vadd.f32 %v3321, %v3517
      %v3550 = vadd.f32 %v3322, %v3518
      %v3551 = vadd.f32 %v3323, %v3519
      %v3552 = vadd.f32 %v3324, %v3520
      %v3553 = vadd.f32 %v3325, %v3521
      %v3554 = vadd.f32 %v3326, %v3522
      %v3555 = vadd.f32 %v3327, %v3523
      %v3556 = vmax.f32 %v3524, 1e-15
      %v3557 = vmax.f32 %v3525, 1e-15
      %v3558 = vmax.f32 %v3526, 1e-15
      %v3559 = vmax.f32 %v3527, 1e-15
      %v3560 = vmax.f32 %v3528, 1e-15
      %v3561 = vmax.f32 %v3529, 1e-15
      %v3562 = vmax.f32 %v3530, 1e-15
      %v3563 = vmax.f32 %v3531, 1e-15
      %v3564 = vmax.f32 %v3532, 1e-15
      %v3565 = vmax.f32 %v3533, 1e-15
      %v3566 = vmax.f32 %v3534, 1e-15
      %v3567 = vmax.f32 %v3535, 1e-15
      %v3568 = vmax.f32 %v3536, 1e-15
      %v3569 = vmax.f32 %v3537, 1e-15
      %v3570 = vmax.f32 %v3538, 1e-15
      %v3571 = vmax.f32 %v3539, 1e-15
      %v3572 = vmax.f32 %v3540, 1e-15
      %v3573 = vmax.f32 %v3541, 1e-15
      %v3574 = vmax.f32 %v3542, 1e-15
      %v3575 = vmax.f32 %v3543, 1e-15
      %v3576 = vmax.f32 %v3544, 1e-15
      %v3577 = vmax.f32 %v3545, 1e-15
      %v3578 = vmax.f32 %v3546, 1e-15
      %v3579 = vmax.f32 %v3547, 1e-15
      %v3580 = vmax.f32 %v3548, 1e-15
      %v3581 = vmax.f32 %v3549, 1e-15
      %v3582 = vmax.f32 %v3550, 1e-15
      %v3583 = vmax.f32 %v3551, 1e-15
      %v3584 = vmax.f32 %v3552, 1e-15
      %v3585 = vmax.f32 %v3553, 1e-15
      %v3586 = vmax.f32 %v3554, 1e-15
      %v3587 = vmax.f32 %v3555, 1e-15
      %v3588 = vrcp.pop %v3556
      %v3589 = vmul.f32 %v3460, %v3588
      %v3590 = vrcp.pop %v3557
      %v3591 = vmul.f32 %v3461, %v3590
      %v3592 = vrcp.pop %v3558
      %v3593 = vmul.f32 %v3462, %v3592
      %v3594 = vrcp.pop %v3559
      %v3595 = vmul.f32 %v3463, %v3594
      %v3596 = vrcp.pop %v3560
      %v3597 = vmul.f32 %v3464, %v3596
      %v3598 = vrcp.pop %v3561
      %v3599 = vmul.f32 %v3465, %v3598
      %v3600 = vrcp.pop %v3562
      %v3601 = vmul.f32 %v3466, %v3600
      %v3602 = vrcp.pop %v3563
      %v3603 = vmul.f32 %v3467, %v3602
      %v3604 = vrcp.pop %v3564
      %v3605 = vmul.f32 %v3468, %v3604
      %v3606 = vrcp.pop %v3565
      %v3607 = vmul.f32 %v3469, %v3606
      %v3608 = vrcp.pop %v3566
      %v3609 = vmul.f32 %v3470, %v3608
      %v3610 = vrcp.pop %v3567
      %v3611 = vmul.f32 %v3471, %v3610
      %v3612 = vrcp.pop %v3568
      %v3613 = vmul.f32 %v3472, %v3612
      %v3614 = vrcp.pop %v3569
      %v3615 = vmul.f32 %v3473, %v3614
      %v3616 = vrcp.pop %v3570
      %v3617 = vmul.f32 %v3474, %v3616
      %v3618 = vrcp.pop %v3571
      %v3619 = vmul.f32 %v3475, %v3618
      %v3620 = vrcp.pop %v3572
      %v3621 = vmul.f32 %v3476, %v3620
      %v3622 = vrcp.pop %v3573
      %v3623 = vmul.f32 %v3477, %v3622
      %v3624 = vrcp.pop %v3574
      %v3625 = vmul.f32 %v3478, %v3624
      %v3626 = vrcp.pop %v3575
      %v3627 = vmul.f32 %v3479, %v3626
      %v3628 = vrcp.pop %v3576
      %v3629 = vmul.f32 %v3480, %v3628
      %v3630 = vrcp.pop %v3577
      %v3631 = vmul.f32 %v3481, %v3630
      %v3632 = vrcp.pop %v3578
      %v3633 = vmul.f32 %v3482, %v3632
      %v3634 = vrcp.pop %v3579
      %v3635 = vmul.f32 %v3483, %v3634
      %v3636 = vrcp.pop %v3580
      %v3637 = vmul.f32 %v3484, %v3636
      %v3638 = vrcp.pop %v3581
      %v3639 = vmul.f32 %v3485, %v3638
      %v3640 = vrcp.pop %v3582
      %v3641 = vmul.f32 %v3486, %v3640
      %v3642 = vrcp.pop %v3583
      %v3643 = vmul.f32 %v3487, %v3642
      %v3644 = vrcp.pop %v3584
      %v3645 = vmul.f32 %v3488, %v3644
      %v3646 = vrcp.pop %v3585
      %v3647 = vmul.f32 %v3489, %v3646
      %v3648 = vrcp.pop %v3586
      %v3649 = vmul.f32 %v3490, %v3648
      %v3650 = vrcp.pop %v3587
      %v3651 = vmul.f32 %v3491, %v3650
      %v3652 = vmul.f32 %v3589, %v3589
      %v3653 = vmul.f32 %v3591, %v3591
      %v3654 = vmul.f32 %v3593, %v3593
      %v3655 = vmul.f32 %v3595, %v3595
      %v3656 = vmul.f32 %v3597, %v3597
      %v3657 = vmul.f32 %v3599, %v3599
      %v3658 = vmul.f32 %v3601, %v3601
      %v3659 = vmul.f32 %v3603, %v3603
      %v3660 = vmul.f32 %v3605, %v3605
      %v3661 = vmul.f32 %v3607, %v3607
      %v3662 = vmul.f32 %v3609, %v3609
      %v3663 = vmul.f32 %v3611, %v3611
      %v3664 = vmul.f32 %v3613, %v3613
      %v3665 = vmul.f32 %v3615, %v3615
      %v3666 = vmul.f32 %v3617, %v3617
      %v3667 = vmul.f32 %v3619, %v3619
      %v3668 = vmul.f32 %v3621, %v3621
      %v3669 = vmul.f32 %v3623, %v3623
      %v3670 = vmul.f32 %v3625, %v3625
      %v3671 = vmul.f32 %v3627, %v3627
      %v3672 = vmul.f32 %v3629, %v3629
      %v3673 = vmul.f32 %v3631, %v3631
      %v3674 = vmul.f32 %v3633, %v3633
      %v3675 = vmul.f32 %v3635, %v3635
      %v3676 = vmul.f32 %v3637, %v3637
      %v3677 = vmul.f32 %v3639, %v3639
      %v3678 = vmul.f32 %v3641, %v3641
      %v3679 = vmul.f32 %v3643, %v3643
      %v3680 = vmul.f32 %v3645, %v3645
      %v3681 = vmul.f32 %v3647, %v3647
      %v3682 = vmul.f32 %v3649, %v3649
      %v3683 = vmul.f32 %v3651, %v3651
      %v3684 = vsel %vm243, %v3652, 0.0
      %3685 = vadd.xlane.f32.xlu0 %v3684
      %v3686 = vpop.xlane.xlu0 %3685
      %v3687 = vsel %vm243, %v3653, 0.0
      %3688 = vadd.xlane.f32.xlu0 %v3687
      %v3689 = vpop.xlane.xlu0 %3688
      %v3690 = vsel %vm243, %v3654, 0.0
      %3691 = vadd.xlane.f32.xlu0 %v3690
      %v3692 = vpop.xlane.xlu0 %3691
      %v3693 = vsel %vm243, %v3655, 0.0
      %3694 = vadd.xlane.f32.xlu0 %v3693
      %v3695 = vpop.xlane.xlu0 %3694
      %v3696 = vsel %vm243, %v3656, 0.0
      %3697 = vadd.xlane.f32.xlu0 %v3696
      %v3698 = vpop.xlane.xlu0 %3697
      %v3699 = vsel %vm243, %v3657, 0.0
      %3700 = vadd.xlane.f32.xlu0 %v3699
      %v3701 = vpop.xlane.xlu0 %3700
      %v3702 = vsel %vm243, %v3658, 0.0
      %3703 = vadd.xlane.f32.xlu0 %v3702
      %v3704 = vpop.xlane.xlu0 %3703
      %v3705 = vsel %vm243, %v3659, 0.0
      %3706 = vadd.xlane.f32.xlu0 %v3705
      %v3707 = vpop.xlane.xlu0 %3706
      %v3708 = vsel %vm243, %v3660, 0.0
      %3709 = vadd.xlane.f32.xlu0 %v3708
      %v3710 = vpop.xlane.xlu0 %3709
      %v3711 = vsel %vm243, %v3661, 0.0
      %3712 = vadd.xlane.f32.xlu0 %v3711
      %v3713 = vpop.xlane.xlu0 %3712
      %v3714 = vsel %vm243, %v3662, 0.0
      %3715 = vadd.xlane.f32.xlu0 %v3714
      %v3716 = vpop.xlane.xlu0 %3715
      %v3717 = vsel %vm243, %v3663, 0.0
      %3718 = vadd.xlane.f32.xlu0 %v3717
      %v3719 = vpop.xlane.xlu0 %3718
      %v3720 = vsel %vm243, %v3664, 0.0
      %3721 = vadd.xlane.f32.xlu0 %v3720
      %v3722 = vpop.xlane.xlu0 %3721
      %v3723 = vsel %vm243, %v3665, 0.0
      %3724 = vadd.xlane.f32.xlu0 %v3723
      %v3725 = vpop.xlane.xlu0 %3724
      %v3726 = vsel %vm243, %v3666, 0.0
      %3727 = vadd.xlane.f32.xlu0 %v3726
      %v3728 = vpop.xlane.xlu0 %3727
      %v3729 = vsel %vm243, %v3667, 0.0
      %3730 = vadd.xlane.f32.xlu0 %v3729
      %v3731 = vpop.xlane.xlu0 %3730
      %v3732 = vsel %vm243, %v3668, 0.0
      %3733 = vadd.xlane.f32.xlu0 %v3732
      %v3734 = vpop.xlane.xlu0 %3733
      %v3735 = vsel %vm243, %v3669, 0.0
      %3736 = vadd.xlane.f32.xlu0 %v3735
      %v3737 = vpop.xlane.xlu0 %3736
      %v3738 = vsel %vm243, %v3670, 0.0
      %3739 = vadd.xlane.f32.xlu0 %v3738
      %v3740 = vpop.xlane.xlu0 %3739
      %v3741 = vsel %vm243, %v3671, 0.0
      %3742 = vadd.xlane.f32.xlu0 %v3741
      %v3743 = vpop.xlane.xlu0 %3742
      %v3744 = vsel %vm243, %v3672, 0.0
      %3745 = vadd.xlane.f32.xlu0 %v3744
      %v3746 = vpop.xlane.xlu0 %3745
      %v3747 = vsel %vm243, %v3673, 0.0
      %3748 = vadd.xlane.f32.xlu0 %v3747
      %v3749 = vpop.xlane.xlu0 %3748
      %v3750 = vsel %vm243, %v3674, 0.0
      %3751 = vadd.xlane.f32.xlu0 %v3750
      %v3752 = vpop.xlane.xlu0 %3751
      %v3753 = vsel %vm243, %v3675, 0.0
      %3754 = vadd.xlane.f32.xlu0 %v3753
      %v3755 = vpop.xlane.xlu0 %3754
      %v3756 = vsel %vm243, %v3676, 0.0
      %3757 = vadd.xlane.f32.xlu0 %v3756
      %v3758 = vpop.xlane.xlu0 %3757
      %v3759 = vsel %vm243, %v3677, 0.0
      %3760 = vadd.xlane.f32.xlu0 %v3759
      %v3761 = vpop.xlane.xlu0 %3760
      %v3762 = vsel %vm243, %v3678, 0.0
      %3763 = vadd.xlane.f32.xlu0 %v3762
      %v3764 = vpop.xlane.xlu0 %3763
      %v3765 = vsel %vm243, %v3679, 0.0
      %3766 = vadd.xlane.f32.xlu0 %v3765
      %v3767 = vpop.xlane.xlu0 %3766
      %v3768 = vsel %vm243, %v3680, 0.0
      %3769 = vadd.xlane.f32.xlu0 %v3768
      %v3770 = vpop.xlane.xlu0 %3769
      %v3771 = vsel %vm243, %v3681, 0.0
      %3772 = vadd.xlane.f32.xlu0 %v3771
      %v3773 = vpop.xlane.xlu0 %3772
      %v3774 = vsel %vm243, %v3682, 0.0
      %3775 = vadd.xlane.f32.xlu0 %v3774
      %v3776 = vpop.xlane.xlu0 %3775
      %v3777 = vsel %vm243, %v3683, 0.0
      %3778 = vadd.xlane.f32.xlu0 %v3777
      %v3779 = vpop.xlane.xlu0 %3778
      %v3780 = vrsqrt.pop %v3686
      %v3781 = vmul.f32 %v3686, %v3780
      %vm3782 = vcmp.eq.f32.partialorder %v3686, inf
      %v3783 = vsel %vm3782, %v3686, %v3781
      %vm3784 = vcmp.eq.f32.partialorder %v3686, 0.0
      %v3785 = vand.u32 %v3686, 2147483648
      %v3786 = vsel %vm3784, %v3785, %v3783
      %v3787 = vrsqrt.pop %v3689
      %v3788 = vmul.f32 %v3689, %v3787
      %vm3789 = vcmp.eq.f32.partialorder %v3689, inf
      %v3790 = vsel %vm3789, %v3689, %v3788
      %vm3791 = vcmp.eq.f32.partialorder %v3689, 0.0
      %v3792 = vand.u32 %v3689, 2147483648
      %v3793 = vsel %vm3791, %v3792, %v3790
      %v3794 = vrsqrt.pop %v3692
      %v3795 = vmul.f32 %v3692, %v3794
      %vm3796 = vcmp.eq.f32.partialorder %v3692, inf
      %v3797 = vsel %vm3796, %v3692, %v3795
      %vm3798 = vcmp.eq.f32.partialorder %v3692, 0.0
      %v3799 = vand.u32 %v3692, 2147483648
      %v3800 = vsel %vm3798, %v3799, %v3797
      %v3801 = vrsqrt.pop %v3695
      %v3802 = vmul.f32 %v3695, %v3801
      %vm3803 = vcmp.eq.f32.partialorder %v3695, inf
      %v3804 = vsel %vm3803, %v3695, %v3802
      %vm3805 = vcmp.eq.f32.partialorder %v3695, 0.0
      %v3806 = vand.u32 %v3695, 2147483648
      %v3807 = vsel %vm3805, %v3806, %v3804
      %v3808 = vrsqrt.pop %v3698
      %v3809 = vmul.f32 %v3698, %v3808
      %vm3810 = vcmp.eq.f32.partialorder %v3698, inf
      %v3811 = vsel %vm3810, %v3698, %v3809
      %vm3812 = vcmp.eq.f32.partialorder %v3698, 0.0
      %v3813 = vand.u32 %v3698, 2147483648
      %v3814 = vsel %vm3812, %v3813, %v3811
      %v3815 = vrsqrt.pop %v3701
      %v3816 = vmul.f32 %v3701, %v3815
      %vm3817 = vcmp.eq.f32.partialorder %v3701, inf
      %v3818 = vsel %vm3817, %v3701, %v3816
      %vm3819 = vcmp.eq.f32.partialorder %v3701, 0.0
      %v3820 = vand.u32 %v3701, 2147483648
      %v3821 = vsel %vm3819, %v3820, %v3818
      %v3822 = vrsqrt.pop %v3704
      %v3823 = vmul.f32 %v3704, %v3822
      %vm3824 = vcmp.eq.f32.partialorder %v3704, inf
      %v3825 = vsel %vm3824, %v3704, %v3823
      %vm3826 = vcmp.eq.f32.partialorder %v3704, 0.0
      %v3827 = vand.u32 %v3704, 2147483648
      %v3828 = vsel %vm3826, %v3827, %v3825
      %v3829 = vrsqrt.pop %v3707
      %v3830 = vmul.f32 %v3707, %v3829
      %vm3831 = vcmp.eq.f32.partialorder %v3707, inf
      %v3832 = vsel %vm3831, %v3707, %v3830
      %vm3833 = vcmp.eq.f32.partialorder %v3707, 0.0
      %v3834 = vand.u32 %v3707, 2147483648
      %v3835 = vsel %vm3833, %v3834, %v3832
      %v3836 = vrsqrt.pop %v3710
      %v3837 = vmul.f32 %v3710, %v3836
      %vm3838 = vcmp.eq.f32.partialorder %v3710, inf
      %v3839 = vsel %vm3838, %v3710, %v3837
      %vm3840 = vcmp.eq.f32.partialorder %v3710, 0.0
      %v3841 = vand.u32 %v3710, 2147483648
      %v3842 = vsel %vm3840, %v3841, %v3839
      %v3843 = vrsqrt.pop %v3713
      %v3844 = vmul.f32 %v3713, %v3843
      %vm3845 = vcmp.eq.f32.partialorder %v3713, inf
      %v3846 = vsel %vm3845, %v3713, %v3844
      %vm3847 = vcmp.eq.f32.partialorder %v3713, 0.0
      %v3848 = vand.u32 %v3713, 2147483648
      %v3849 = vsel %vm3847, %v3848, %v3846
      %v3850 = vrsqrt.pop %v3716
      %v3851 = vmul.f32 %v3716, %v3850
      %vm3852 = vcmp.eq.f32.partialorder %v3716, inf
      %v3853 = vsel %vm3852, %v3716, %v3851
      %vm3854 = vcmp.eq.f32.partialorder %v3716, 0.0
      %v3855 = vand.u32 %v3716, 2147483648
      %v3856 = vsel %vm3854, %v3855, %v3853
      %v3857 = vrsqrt.pop %v3719
      %v3858 = vmul.f32 %v3719, %v3857
      %vm3859 = vcmp.eq.f32.partialorder %v3719, inf
      %v3860 = vsel %vm3859, %v3719, %v3858
      %vm3861 = vcmp.eq.f32.partialorder %v3719, 0.0
      %v3862 = vand.u32 %v3719, 2147483648
      %v3863 = vsel %vm3861, %v3862, %v3860
      %v3864 = vrsqrt.pop %v3722
      %v3865 = vmul.f32 %v3722, %v3864
      %vm3866 = vcmp.eq.f32.partialorder %v3722, inf
      %v3867 = vsel %vm3866, %v3722, %v3865
      %vm3868 = vcmp.eq.f32.partialorder %v3722, 0.0
      %v3869 = vand.u32 %v3722, 2147483648
      %v3870 = vsel %vm3868, %v3869, %v3867
      %v3871 = vrsqrt.pop %v3725
      %v3872 = vmul.f32 %v3725, %v3871
      %vm3873 = vcmp.eq.f32.partialorder %v3725, inf
      %v3874 = vsel %vm3873, %v3725, %v3872
      %vm3875 = vcmp.eq.f32.partialorder %v3725, 0.0
      %v3876 = vand.u32 %v3725, 2147483648
      %v3877 = vsel %vm3875, %v3876, %v3874
      %v3878 = vrsqrt.pop %v3728
      %v3879 = vmul.f32 %v3728, %v3878
      %vm3880 = vcmp.eq.f32.partialorder %v3728, inf
      %v3881 = vsel %vm3880, %v3728, %v3879
      %vm3882 = vcmp.eq.f32.partialorder %v3728, 0.0
      %v3883 = vand.u32 %v3728, 2147483648
      %v3884 = vsel %vm3882, %v3883, %v3881
      %v3885 = vrsqrt.pop %v3731
      %v3886 = vmul.f32 %v3731, %v3885
      %vm3887 = vcmp.eq.f32.partialorder %v3731, inf
      %v3888 = vsel %vm3887, %v3731, %v3886
      %vm3889 = vcmp.eq.f32.partialorder %v3731, 0.0
      %v3890 = vand.u32 %v3731, 2147483648
      %v3891 = vsel %vm3889, %v3890, %v3888
      %v3892 = vrsqrt.pop %v3734
      %v3893 = vmul.f32 %v3734, %v3892
      %vm3894 = vcmp.eq.f32.partialorder %v3734, inf
      %v3895 = vsel %vm3894, %v3734, %v3893
      %vm3896 = vcmp.eq.f32.partialorder %v3734, 0.0
      %v3897 = vand.u32 %v3734, 2147483648
      %v3898 = vsel %vm3896, %v3897, %v3895
      %v3899 = vrsqrt.pop %v3737
      %v3900 = vmul.f32 %v3737, %v3899
      %vm3901 = vcmp.eq.f32.partialorder %v3737, inf
      %v3902 = vsel %vm3901, %v3737, %v3900
      %vm3903 = vcmp.eq.f32.partialorder %v3737, 0.0
      %v3904 = vand.u32 %v3737, 2147483648
      %v3905 = vsel %vm3903, %v3904, %v3902
      %v3906 = vrsqrt.pop %v3740
      %v3907 = vmul.f32 %v3740, %v3906
      %vm3908 = vcmp.eq.f32.partialorder %v3740, inf
      %v3909 = vsel %vm3908, %v3740, %v3907
      %vm3910 = vcmp.eq.f32.partialorder %v3740, 0.0
      %v3911 = vand.u32 %v3740, 2147483648
      %v3912 = vsel %vm3910, %v3911, %v3909
      %v3913 = vrsqrt.pop %v3743
      %v3914 = vmul.f32 %v3743, %v3913
      %vm3915 = vcmp.eq.f32.partialorder %v3743, inf
      %v3916 = vsel %vm3915, %v3743, %v3914
      %vm3917 = vcmp.eq.f32.partialorder %v3743, 0.0
      %v3918 = vand.u32 %v3743, 2147483648
      %v3919 = vsel %vm3917, %v3918, %v3916
      %v3920 = vrsqrt.pop %v3746
      %v3921 = vmul.f32 %v3746, %v3920
      %vm3922 = vcmp.eq.f32.partialorder %v3746, inf
      %v3923 = vsel %vm3922, %v3746, %v3921
      %vm3924 = vcmp.eq.f32.partialorder %v3746, 0.0
      %v3925 = vand.u32 %v3746, 2147483648
      %v3926 = vsel %vm3924, %v3925, %v3923
      %v3927 = vrsqrt.pop %v3749
      %v3928 = vmul.f32 %v3749, %v3927
      %vm3929 = vcmp.eq.f32.partialorder %v3749, inf
      %v3930 = vsel %vm3929, %v3749, %v3928
      %vm3931 = vcmp.eq.f32.partialorder %v3749, 0.0
      %v3932 = vand.u32 %v3749, 2147483648
      %v3933 = vsel %vm3931, %v3932, %v3930
      %v3934 = vrsqrt.pop %v3752
      %v3935 = vmul.f32 %v3752, %v3934
      %vm3936 = vcmp.eq.f32.partialorder %v3752, inf
      %v3937 = vsel %vm3936, %v3752, %v3935
      %vm3938 = vcmp.eq.f32.partialorder %v3752, 0.0
      %v3939 = vand.u32 %v3752, 2147483648
      %v3940 = vsel %vm3938, %v3939, %v3937
      %v3941 = vrsqrt.pop %v3755
      %v3942 = vmul.f32 %v3755, %v3941
      %vm3943 = vcmp.eq.f32.partialorder %v3755, inf
      %v3944 = vsel %vm3943, %v3755, %v3942
      %vm3945 = vcmp.eq.f32.partialorder %v3755, 0.0
      %v3946 = vand.u32 %v3755, 2147483648
      %v3947 = vsel %vm3945, %v3946, %v3944
      %v3948 = vrsqrt.pop %v3758
      %v3949 = vmul.f32 %v3758, %v3948
      %vm3950 = vcmp.eq.f32.partialorder %v3758, inf
      %v3951 = vsel %vm3950, %v3758, %v3949
      %vm3952 = vcmp.eq.f32.partialorder %v3758, 0.0
      %v3953 = vand.u32 %v3758, 2147483648
      %v3954 = vsel %vm3952, %v3953, %v3951
      %v3955 = vrsqrt.pop %v3761
      %v3956 = vmul.f32 %v3761, %v3955
      %vm3957 = vcmp.eq.f32.partialorder %v3761, inf
      %v3958 = vsel %vm3957, %v3761, %v3956
      %vm3959 = vcmp.eq.f32.partialorder %v3761, 0.0
      %v3960 = vand.u32 %v3761, 2147483648
      %v3961 = vsel %vm3959, %v3960, %v3958
      %v3962 = vrsqrt.pop %v3764
      %v3963 = vmul.f32 %v3764, %v3962
      %vm3964 = vcmp.eq.f32.partialorder %v3764, inf
      %v3965 = vsel %vm3964, %v3764, %v3963
      %vm3966 = vcmp.eq.f32.partialorder %v3764, 0.0
      %v3967 = vand.u32 %v3764, 2147483648
      %v3968 = vsel %vm3966, %v3967, %v3965
      %v3969 = vrsqrt.pop %v3767
      %v3970 = vmul.f32 %v3767, %v3969
      %vm3971 = vcmp.eq.f32.partialorder %v3767, inf
      %v3972 = vsel %vm3971, %v3767, %v3970
      %vm3973 = vcmp.eq.f32.partialorder %v3767, 0.0
      %v3974 = vand.u32 %v3767, 2147483648
      %v3975 = vsel %vm3973, %v3974, %v3972
      %v3976 = vrsqrt.pop %v3770
      %v3977 = vmul.f32 %v3770, %v3976
      %vm3978 = vcmp.eq.f32.partialorder %v3770, inf
      %v3979 = vsel %vm3978, %v3770, %v3977
      %vm3980 = vcmp.eq.f32.partialorder %v3770, 0.0
      %v3981 = vand.u32 %v3770, 2147483648
      %v3982 = vsel %vm3980, %v3981, %v3979
      %v3983 = vrsqrt.pop %v3773
      %v3984 = vmul.f32 %v3773, %v3983
      %vm3985 = vcmp.eq.f32.partialorder %v3773, inf
      %v3986 = vsel %vm3985, %v3773, %v3984
      %vm3987 = vcmp.eq.f32.partialorder %v3773, 0.0
      %v3988 = vand.u32 %v3773, 2147483648
      %v3989 = vsel %vm3987, %v3988, %v3986
      %v3990 = vrsqrt.pop %v3776
      %v3991 = vmul.f32 %v3776, %v3990
      %vm3992 = vcmp.eq.f32.partialorder %v3776, inf
      %v3993 = vsel %vm3992, %v3776, %v3991
      %vm3994 = vcmp.eq.f32.partialorder %v3776, 0.0
      %v3995 = vand.u32 %v3776, 2147483648
      %v3996 = vsel %vm3994, %v3995, %v3993
      %v3997 = vrsqrt.pop %v3779
      %v3998 = vmul.f32 %v3779, %v3997
      %vm3999 = vcmp.eq.f32.partialorder %v3779, inf
      %v4000 = vsel %vm3999, %v3779, %v3998
      %vm4001 = vcmp.eq.f32.partialorder %v3779, 0.0
      %v4002 = vand.u32 %v3779, 2147483648
      %v4003 = vsel %vm4001, %v4002, %v4000
      %v4004 = vmax.f32 %v3786, 1e-15
      %v4005 = vmax.f32 %v3793, 1e-15
      %v4006 = vmax.f32 %v3800, 1e-15
      %v4007 = vmax.f32 %v3807, 1e-15
      %v4008 = vmax.f32 %v3814, 1e-15
      %v4009 = vmax.f32 %v3821, 1e-15
      %v4010 = vmax.f32 %v3828, 1e-15
      %v4011 = vmax.f32 %v3835, 1e-15
      %v4012 = vmax.f32 %v3842, 1e-15
      %v4013 = vmax.f32 %v3849, 1e-15
      %v4014 = vmax.f32 %v3856, 1e-15
      %v4015 = vmax.f32 %v3863, 1e-15
      %v4016 = vmax.f32 %v3870, 1e-15
      %v4017 = vmax.f32 %v3877, 1e-15
      %v4018 = vmax.f32 %v3884, 1e-15
      %v4019 = vmax.f32 %v3891, 1e-15
      %v4020 = vmax.f32 %v3898, 1e-15
      %v4021 = vmax.f32 %v3905, 1e-15
      %v4022 = vmax.f32 %v3912, 1e-15
      %v4023 = vmax.f32 %v3919, 1e-15
      %v4024 = vmax.f32 %v3926, 1e-15
      %v4025 = vmax.f32 %v3933, 1e-15
      %v4026 = vmax.f32 %v3940, 1e-15
      %v4027 = vmax.f32 %v3947, 1e-15
      %v4028 = vmax.f32 %v3954, 1e-15
      %v4029 = vmax.f32 %v3961, 1e-15
      %v4030 = vmax.f32 %v3968, 1e-15
      %v4031 = vmax.f32 %v3975, 1e-15
      %v4032 = vmax.f32 %v3982, 1e-15
      %v4033 = vmax.f32 %v3989, 1e-15
      %v4034 = vmax.f32 %v3996, 1e-15
      %v4035 = vmax.f32 %v4003, 1e-15
      %vm4036 = vcmp.gt.f32.partialorder %v4004, 0.996
      %vm4037 = vcmp.gt.f32.partialorder %v4005, 0.996
      %vm4038 = vcmp.gt.f32.partialorder %v4006, 0.996
      %vm4039 = vcmp.gt.f32.partialorder %v4007, 0.996
      %vm4040 = vcmp.gt.f32.partialorder %v4008, 0.996
      %vm4041 = vcmp.gt.f32.partialorder %v4009, 0.996
      %vm4042 = vcmp.gt.f32.partialorder %v4010, 0.996
      %vm4043 = vcmp.gt.f32.partialorder %v4011, 0.996
      %vm4044 = vcmp.gt.f32.partialorder %v4012, 0.996
      %vm4045 = vcmp.gt.f32.partialorder %v4013, 0.996
      %vm4046 = vcmp.gt.f32.partialorder %v4014, 0.996
      %vm4047 = vcmp.gt.f32.partialorder %v4015, 0.996
      %vm4048 = vcmp.gt.f32.partialorder %v4016, 0.996
      %vm4049 = vcmp.gt.f32.partialorder %v4017, 0.996
      %vm4050 = vcmp.gt.f32.partialorder %v4018, 0.996
      %vm4051 = vcmp.gt.f32.partialorder %v4019, 0.996
      %vm4052 = vcmp.gt.f32.partialorder %v4020, 0.996
      %vm4053 = vcmp.gt.f32.partialorder %v4021, 0.996
      %vm4054 = vcmp.gt.f32.partialorder %v4022, 0.996
      %vm4055 = vcmp.gt.f32.partialorder %v4023, 0.996
      %vm4056 = vcmp.gt.f32.partialorder %v4024, 0.996
      %vm4057 = vcmp.gt.f32.partialorder %v4025, 0.996
      %vm4058 = vcmp.gt.f32.partialorder %v4026, 0.996
      %vm4059 = vcmp.gt.f32.partialorder %v4027, 0.996
      %vm4060 = vcmp.gt.f32.partialorder %v4028, 0.996
      %vm4061 = vcmp.gt.f32.partialorder %v4029, 0.996
      %vm4062 = vcmp.gt.f32.partialorder %v4030, 0.996
      %vm4063 = vcmp.gt.f32.partialorder %v4031, 0.996
      %vm4064 = vcmp.gt.f32.partialorder %v4032, 0.996
      %vm4065 = vcmp.gt.f32.partialorder %v4033, 0.996
      %vm4066 = vcmp.gt.f32.partialorder %v4034, 0.996
      %vm4067 = vcmp.gt.f32.partialorder %v4035, 0.996
      %v4068 = vrcp.pop %v4004
      %v4069 = vmul.f32 %v3589, %v4068
      %v4070 = vrcp.pop %v4005
      %v4071 = vmul.f32 %v3591, %v4070
      %v4072 = vrcp.pop %v4006
      %v4073 = vmul.f32 %v3593, %v4072
      %v4074 = vrcp.pop %v4007
      %v4075 = vmul.f32 %v3595, %v4074
      %v4076 = vrcp.pop %v4008
      %v4077 = vmul.f32 %v3597, %v4076
      %v4078 = vrcp.pop %v4009
      %v4079 = vmul.f32 %v3599, %v4078
      %v4080 = vrcp.pop %v4010
      %v4081 = vmul.f32 %v3601, %v4080
      %v4082 = vrcp.pop %v4011
      %v4083 = vmul.f32 %v3603, %v4082
      %v4084 = vrcp.pop %v4012
      %v4085 = vmul.f32 %v3605, %v4084
      %v4086 = vrcp.pop %v4013
      %v4087 = vmul.f32 %v3607, %v4086
      %v4088 = vrcp.pop %v4014
      %v4089 = vmul.f32 %v3609, %v4088
      %v4090 = vrcp.pop %v4015
      %v4091 = vmul.f32 %v3611, %v4090
      %v4092 = vrcp.pop %v4016
      %v4093 = vmul.f32 %v3613, %v4092
      %v4094 = vrcp.pop %v4017
      %v4095 = vmul.f32 %v3615, %v4094
      %v4096 = vrcp.pop %v4018
      %v4097 = vmul.f32 %v3617, %v4096
      %v4098 = vrcp.pop %v4019
      %v4099 = vmul.f32 %v3619, %v4098
      %v4100 = vrcp.pop %v4020
      %v4101 = vmul.f32 %v3621, %v4100
      %v4102 = vrcp.pop %v4021
      %v4103 = vmul.f32 %v3623, %v4102
      %v4104 = vrcp.pop %v4022
      %v4105 = vmul.f32 %v3625, %v4104
      %v4106 = vrcp.pop %v4023
      %v4107 = vmul.f32 %v3627, %v4106
      %v4108 = vrcp.pop %v4024
      %v4109 = vmul.f32 %v3629, %v4108
      %v4110 = vrcp.pop %v4025
      %v4111 = vmul.f32 %v3631, %v4110
      %v4112 = vrcp.pop %v4026
      %v4113 = vmul.f32 %v3633, %v4112
      %v4114 = vrcp.pop %v4027
      %v4115 = vmul.f32 %v3635, %v4114
      %v4116 = vrcp.pop %v4028
      %v4117 = vmul.f32 %v3637, %v4116
      %v4118 = vrcp.pop %v4029
      %v4119 = vmul.f32 %v3639, %v4118
      %v4120 = vrcp.pop %v4030
      %v4121 = vmul.f32 %v3641, %v4120
      %v4122 = vrcp.pop %v4031
      %v4123 = vmul.f32 %v3643, %v4122
      %v4124 = vrcp.pop %v4032
      %v4125 = vmul.f32 %v3645, %v4124
      %v4126 = vrcp.pop %v4033
      %v4127 = vmul.f32 %v3647, %v4126
      %v4128 = vrcp.pop %v4034
      %v4129 = vmul.f32 %v3649, %v4128
      %v4130 = vrcp.pop %v4035
      %v4131 = vmul.f32 %v3651, %v4130
      %v4132 = vmul.f32 %v4069, 0.996
      %v4133 = vmul.f32 %v4071, 0.996
      %v4134 = vmul.f32 %v4073, 0.996
      %v4135 = vmul.f32 %v4075, 0.996
      %v4136 = vmul.f32 %v4077, 0.996
      %v4137 = vmul.f32 %v4079, 0.996
      %v4138 = vmul.f32 %v4081, 0.996
      %v4139 = vmul.f32 %v4083, 0.996
      %v4140 = vmul.f32 %v4085, 0.996
      %v4141 = vmul.f32 %v4087, 0.996
      %v4142 = vmul.f32 %v4089, 0.996
      %v4143 = vmul.f32 %v4091, 0.996
      %v4144 = vmul.f32 %v4093, 0.996
      %v4145 = vmul.f32 %v4095, 0.996
      %v4146 = vmul.f32 %v4097, 0.996
      %v4147 = vmul.f32 %v4099, 0.996
      %v4148 = vmul.f32 %v4101, 0.996
      %v4149 = vmul.f32 %v4103, 0.996
      %v4150 = vmul.f32 %v4105, 0.996
      %v4151 = vmul.f32 %v4107, 0.996
      %v4152 = vmul.f32 %v4109, 0.996
      %v4153 = vmul.f32 %v4111, 0.996
      %v4154 = vmul.f32 %v4113, 0.996
      %v4155 = vmul.f32 %v4115, 0.996
      %v4156 = vmul.f32 %v4117, 0.996
      %v4157 = vmul.f32 %v4119, 0.996
      %v4158 = vmul.f32 %v4121, 0.996
      %v4159 = vmul.f32 %v4123, 0.996
      %v4160 = vmul.f32 %v4125, 0.996
      %v4161 = vmul.f32 %v4127, 0.996
      %v4162 = vmul.f32 %v4129, 0.996
      %v4163 = vmul.f32 %v4131, 0.996
      %v4164 = vsel %vm4036, 1, 0
      %v4165 = vsel %vm4037, 1, 0
      %v4166 = vsel %vm4038, 1, 0
      %v4167 = vsel %vm4039, 1, 0
      %v4168 = vsel %vm4040, 1, 0
      %v4169 = vsel %vm4041, 1, 0
      %v4170 = vsel %vm4042, 1, 0
      %v4171 = vsel %vm4043, 1, 0
      %v4172 = vsel %vm4044, 1, 0
      %v4173 = vsel %vm4045, 1, 0
      %v4174 = vsel %vm4046, 1, 0
      %v4175 = vsel %vm4047, 1, 0
      %v4176 = vsel %vm4048, 1, 0
      %v4177 = vsel %vm4049, 1, 0
      %v4178 = vsel %vm4050, 1, 0
      %v4179 = vsel %vm4051, 1, 0
      %v4180 = vsel %vm4052, 1, 0
      %v4181 = vsel %vm4053, 1, 0
      %v4182 = vsel %vm4054, 1, 0
      %v4183 = vsel %vm4055, 1, 0
      %v4184 = vsel %vm4056, 1, 0
      %v4185 = vsel %vm4057, 1, 0
      %v4186 = vsel %vm4058, 1, 0
      %v4187 = vsel %vm4059, 1, 0
      %v4188 = vsel %vm4060, 1, 0
      %v4189 = vsel %vm4061, 1, 0
      %v4190 = vsel %vm4062, 1, 0
      %v4191 = vsel %vm4063, 1, 0
      %v4192 = vsel %vm4064, 1, 0
      %v4193 = vsel %vm4065, 1, 0
      %v4194 = vsel %vm4066, 1, 0
      %v4195 = vsel %vm4067, 1, 0
      %vm4196 = vcmp.eq.s32.totalorder %v4164, 1
      %vm4197 = vcmp.eq.s32.totalorder %v4165, 1
      %vm4198 = vcmp.eq.s32.totalorder %v4166, 1
      %vm4199 = vcmp.eq.s32.totalorder %v4167, 1
      %vm4200 = vcmp.eq.s32.totalorder %v4168, 1
      %vm4201 = vcmp.eq.s32.totalorder %v4169, 1
      %vm4202 = vcmp.eq.s32.totalorder %v4170, 1
      %vm4203 = vcmp.eq.s32.totalorder %v4171, 1
      %vm4204 = vcmp.eq.s32.totalorder %v4172, 1
      %vm4205 = vcmp.eq.s32.totalorder %v4173, 1
      %vm4206 = vcmp.eq.s32.totalorder %v4174, 1
      %vm4207 = vcmp.eq.s32.totalorder %v4175, 1
      %vm4208 = vcmp.eq.s32.totalorder %v4176, 1
      %vm4209 = vcmp.eq.s32.totalorder %v4177, 1
      %vm4210 = vcmp.eq.s32.totalorder %v4178, 1
      %vm4211 = vcmp.eq.s32.totalorder %v4179, 1
      %vm4212 = vcmp.eq.s32.totalorder %v4180, 1
      %vm4213 = vcmp.eq.s32.totalorder %v4181, 1
      %vm4214 = vcmp.eq.s32.totalorder %v4182, 1
      %vm4215 = vcmp.eq.s32.totalorder %v4183, 1
      %vm4216 = vcmp.eq.s32.totalorder %v4184, 1
      %vm4217 = vcmp.eq.s32.totalorder %v4185, 1
      %vm4218 = vcmp.eq.s32.totalorder %v4186, 1
      %vm4219 = vcmp.eq.s32.totalorder %v4187, 1
      %vm4220 = vcmp.eq.s32.totalorder %v4188, 1
      %vm4221 = vcmp.eq.s32.totalorder %v4189, 1
      %vm4222 = vcmp.eq.s32.totalorder %v4190, 1
      %vm4223 = vcmp.eq.s32.totalorder %v4191, 1
      %vm4224 = vcmp.eq.s32.totalorder %v4192, 1
      %vm4225 = vcmp.eq.s32.totalorder %v4193, 1
      %vm4226 = vcmp.eq.s32.totalorder %v4194, 1
      %vm4227 = vcmp.eq.s32.totalorder %v4195, 1
      %v4228 = vsel %vm4196, %v4132, %v3589
      %v4229 = vsel %vm4197, %v4133, %v3591
      %v4230 = vsel %vm4198, %v4134, %v3593
      %v4231 = vsel %vm4199, %v4135, %v3595
      %v4232 = vsel %vm4200, %v4136, %v3597
      %v4233 = vsel %vm4201, %v4137, %v3599
      %v4234 = vsel %vm4202, %v4138, %v3601
      %v4235 = vsel %vm4203, %v4139, %v3603
      %v4236 = vsel %vm4204, %v4140, %v3605
      %v4237 = vsel %vm4205, %v4141, %v3607
      %v4238 = vsel %vm4206, %v4142, %v3609
      %v4239 = vsel %vm4207, %v4143, %v3611
      %v4240 = vsel %vm4208, %v4144, %v3613
      %v4241 = vsel %vm4209, %v4145, %v3615
      %v4242 = vsel %vm4210, %v4146, %v3617
      %v4243 = vsel %vm4211, %v4147, %v3619
      %v4244 = vsel %vm4212, %v4148, %v3621
      %v4245 = vsel %vm4213, %v4149, %v3623
      %v4246 = vsel %vm4214, %v4150, %v3625
      %v4247 = vsel %vm4215, %v4151, %v3627
      %v4248 = vsel %vm4216, %v4152, %v3629
      %v4249 = vsel %vm4217, %v4153, %v3631
      %v4250 = vsel %vm4218, %v4154, %v3633
      %v4251 = vsel %vm4219, %v4155, %v3635
      %v4252 = vsel %vm4220, %v4156, %v3637
      %v4253 = vsel %vm4221, %v4157, %v3639
      %v4254 = vsel %vm4222, %v4158, %v3641
      %v4255 = vsel %vm4223, %v4159, %v3643
      %v4256 = vsel %vm4224, %v4160, %v3645
      %v4257 = vsel %vm4225, %v4161, %v3647
      %v4258 = vsel %vm4226, %v4162, %v3649
      %v4259 = vsel %vm4227, %v4163, %v3651
      %v4260 = vsel %vm4036, 0.996, %v4004
      %v4261 = vsel %vm4037, 0.996, %v4005
      %v4262 = vsel %vm4038, 0.996, %v4006
      %v4263 = vsel %vm4039, 0.996, %v4007
      %v4264 = vsel %vm4040, 0.996, %v4008
      %v4265 = vsel %vm4041, 0.996, %v4009
      %v4266 = vsel %vm4042, 0.996, %v4010
      %v4267 = vsel %vm4043, 0.996, %v4011
      %v4268 = vsel %vm4044, 0.996, %v4012
      %v4269 = vsel %vm4045, 0.996, %v4013
      %v4270 = vsel %vm4046, 0.996, %v4014
      %v4271 = vsel %vm4047, 0.996, %v4015
      %v4272 = vsel %vm4048, 0.996, %v4016
      %v4273 = vsel %vm4049, 0.996, %v4017
      %v4274 = vsel %vm4050, 0.996, %v4018
      %v4275 = vsel %vm4051, 0.996, %v4019
      %v4276 = vsel %vm4052, 0.996, %v4020
      %v4277 = vsel %vm4053, 0.996, %v4021
      %v4278 = vsel %vm4054, 0.996, %v4022
      %v4279 = vsel %vm4055, 0.996, %v4023
      %v4280 = vsel %vm4056, 0.996, %v4024
      %v4281 = vsel %vm4057, 0.996, %v4025
      %v4282 = vsel %vm4058, 0.996, %v4026
      %v4283 = vsel %vm4059, 0.996, %v4027
      %v4284 = vsel %vm4060, 0.996, %v4028
      %v4285 = vsel %vm4061, 0.996, %v4029
      %v4286 = vsel %vm4062, 0.996, %v4030
      %v4287 = vsel %vm4063, 0.996, %v4031
      %v4288 = vsel %vm4064, 0.996, %v4032
      %v4289 = vsel %vm4065, 0.996, %v4033
      %v4290 = vsel %vm4066, 0.996, %v4034
      %v4291 = vsel %vm4067, 0.996, %v4035
      %v4292 = vmax.f32 %v4260, -1.0
      %v4293 = vmax.f32 %v4261, -1.0
      %v4294 = vmax.f32 %v4262, -1.0
      %v4295 = vmax.f32 %v4263, -1.0
      %v4296 = vmax.f32 %v4264, -1.0
      %v4297 = vmax.f32 %v4265, -1.0
      %v4298 = vmax.f32 %v4266, -1.0
      %v4299 = vmax.f32 %v4267, -1.0
      %v4300 = vmax.f32 %v4268, -1.0
      %v4301 = vmax.f32 %v4269, -1.0
      %v4302 = vmax.f32 %v4270, -1.0
      %v4303 = vmax.f32 %v4271, -1.0
      %v4304 = vmax.f32 %v4272, -1.0
      %v4305 = vmax.f32 %v4273, -1.0
      %v4306 = vmax.f32 %v4274, -1.0
      %v4307 = vmax.f32 %v4275, -1.0
      %v4308 = vmax.f32 %v4276, -1.0
      %v4309 = vmax.f32 %v4277, -1.0
      %v4310 = vmax.f32 %v4278, -1.0
      %v4311 = vmax.f32 %v4279, -1.0
      %v4312 = vmax.f32 %v4280, -1.0
      %v4313 = vmax.f32 %v4281, -1.0
      %v4314 = vmax.f32 %v4282, -1.0
      %v4315 = vmax.f32 %v4283, -1.0
      %v4316 = vmax.f32 %v4284, -1.0
      %v4317 = vmax.f32 %v4285, -1.0
      %v4318 = vmax.f32 %v4286, -1.0
      %v4319 = vmax.f32 %v4287, -1.0
      %v4320 = vmax.f32 %v4288, -1.0
      %v4321 = vmax.f32 %v4289, -1.0
      %v4322 = vmax.f32 %v4290, -1.0
      %v4323 = vmax.f32 %v4291, -1.0
      %v4324 = vmin.f32 %v4292, 1.0
      %v4325 = vmin.f32 %v4293, 1.0
      %v4326 = vmin.f32 %v4294, 1.0
      %v4327 = vmin.f32 %v4295, 1.0
      %v4328 = vmin.f32 %v4296, 1.0
      %v4329 = vmin.f32 %v4297, 1.0
      %v4330 = vmin.f32 %v4298, 1.0
      %v4331 = vmin.f32 %v4299, 1.0
      %v4332 = vmin.f32 %v4300, 1.0
      %v4333 = vmin.f32 %v4301, 1.0
      %v4334 = vmin.f32 %v4302, 1.0
      %v4335 = vmin.f32 %v4303, 1.0
      %v4336 = vmin.f32 %v4304, 1.0
      %v4337 = vmin.f32 %v4305, 1.0
      %v4338 = vmin.f32 %v4306, 1.0
      %v4339 = vmin.f32 %v4307, 1.0
      %v4340 = vmin.f32 %v4308, 1.0
      %v4341 = vmin.f32 %v4309, 1.0
      %v4342 = vmin.f32 %v4310, 1.0
      %v4343 = vmin.f32 %v4311, 1.0
      %v4344 = vmin.f32 %v4312, 1.0
      %v4345 = vmin.f32 %v4313, 1.0
      %v4346 = vmin.f32 %v4314, 1.0
      %v4347 = vmin.f32 %v4315, 1.0
      %v4348 = vmin.f32 %v4316, 1.0
      %v4349 = vmin.f32 %v4317, 1.0
      %v4350 = vmin.f32 %v4318, 1.0
      %v4351 = vmin.f32 %v4319, 1.0
      %v4352 = vmin.f32 %v4320, 1.0
      %v4353 = vmin.f32 %v4321, 1.0
      %v4354 = vmin.f32 %v4322, 1.0
      %v4355 = vmin.f32 %v4323, 1.0
      %v4356 = vadd.f32 %v4324, 1.0
      %v4357 = vlog2.pop %v4356
      %v4358 = vmul.f32 %v4357, 0.6931472
      %v4359 = vmul.f32 -0.5, %v4324
      %v4360 = vadd.f32 %v4359, 1.0
      %v4361 = vmul.f32 %v4360, %v4324
      %v4362 = vand.u32 2147483647, %v4324
      %vm4363 = vcmp.lt.f32.partialorder %v4362, 0.0004427343
      %v4364 = vsel %vm4363, %v4361, %v4358
      %v4365 = vadd.f32 %v4325, 1.0
      %v4366 = vlog2.pop %v4365
      %v4367 = vmul.f32 %v4366, 0.6931472
      %v4368 = vmul.f32 -0.5, %v4325
      %v4369 = vadd.f32 %v4368, 1.0
      %v4370 = vmul.f32 %v4369, %v4325
      %v4371 = vand.u32 2147483647, %v4325
      %vm4372 = vcmp.lt.f32.partialorder %v4371, 0.0004427343
      %v4373 = vsel %vm4372, %v4370, %v4367
      %v4374 = vadd.f32 %v4326, 1.0
      %v4375 = vlog2.pop %v4374
      %v4376 = vmul.f32 %v4375, 0.6931472
      %v4377 = vmul.f32 -0.5, %v4326
      %v4378 = vadd.f32 %v4377, 1.0
      %v4379 = vmul.f32 %v4378, %v4326
      %v4380 = vand.u32 2147483647, %v4326
      %vm4381 = vcmp.lt.f32.partialorder %v4380, 0.0004427343
      %v4382 = vsel %vm4381, %v4379, %v4376
      %v4383 = vadd.f32 %v4327, 1.0
      %v4384 = vlog2.pop %v4383
      %v4385 = vmul.f32 %v4384, 0.6931472
      %v4386 = vmul.f32 -0.5, %v4327
      %v4387 = vadd.f32 %v4386, 1.0
      %v4388 = vmul.f32 %v4387, %v4327
      %v4389 = vand.u32 2147483647, %v4327
      %vm4390 = vcmp.lt.f32.partialorder %v4389, 0.0004427343
      %v4391 = vsel %vm4390, %v4388, %v4385
      %v4392 = vadd.f32 %v4328, 1.0
      %v4393 = vlog2.pop %v4392
      %v4394 = vmul.f32 %v4393, 0.6931472
      %v4395 = vmul.f32 -0.5, %v4328
      %v4396 = vadd.f32 %v4395, 1.0
      %v4397 = vmul.f32 %v4396, %v4328
      %v4398 = vand.u32 2147483647, %v4328
      %vm4399 = vcmp.lt.f32.partialorder %v4398, 0.0004427343
      %v4400 = vsel %vm4399, %v4397, %v4394
      %v4401 = vadd.f32 %v4329, 1.0
      %v4402 = vlog2.pop %v4401
      %v4403 = vmul.f32 %v4402, 0.6931472
      %v4404 = vmul.f32 -0.5, %v4329
      %v4405 = vadd.f32 %v4404, 1.0
      %v4406 = vmul.f32 %v4405, %v4329
      %v4407 = vand.u32 2147483647, %v4329
      %vm4408 = vcmp.lt.f32.partialorder %v4407, 0.0004427343
      %v4409 = vsel %vm4408, %v4406, %v4403
      %v4410 = vadd.f32 %v4330, 1.0
      %v4411 = vlog2.pop %v4410
      %v4412 = vmul.f32 %v4411, 0.6931472
      %v4413 = vmul.f32 -0.5, %v4330
      %v4414 = vadd.f32 %v4413, 1.0
      %v4415 = vmul.f32 %v4414, %v4330
      %v4416 = vand.u32 2147483647, %v4330
      %vm4417 = vcmp.lt.f32.partialorder %v4416, 0.0004427343
      %v4418 = vsel %vm4417, %v4415, %v4412
      %v4419 = vadd.f32 %v4331, 1.0
      %v4420 = vlog2.pop %v4419
      %v4421 = vmul.f32 %v4420, 0.6931472
      %v4422 = vmul.f32 -0.5, %v4331
      %v4423 = vadd.f32 %v4422, 1.0
      %v4424 = vmul.f32 %v4423, %v4331
      %v4425 = vand.u32 2147483647, %v4331
      %vm4426 = vcmp.lt.f32.partialorder %v4425, 0.0004427343
      %v4427 = vsel %vm4426, %v4424, %v4421
      %v4428 = vadd.f32 %v4332, 1.0
      %v4429 = vlog2.pop %v4428
      %v4430 = vmul.f32 %v4429, 0.6931472
      %v4431 = vmul.f32 -0.5, %v4332
      %v4432 = vadd.f32 %v4431, 1.0
      %v4433 = vmul.f32 %v4432, %v4332
      %v4434 = vand.u32 2147483647, %v4332
      %vm4435 = vcmp.lt.f32.partialorder %v4434, 0.0004427343
      %v4436 = vsel %vm4435, %v4433, %v4430
      %v4437 = vadd.f32 %v4333, 1.0
      %v4438 = vlog2.pop %v4437
      %v4439 = vmul.f32 %v4438, 0.6931472
      %v4440 = vmul.f32 -0.5, %v4333
      %v4441 = vadd.f32 %v4440, 1.0
      %v4442 = vmul.f32 %v4441, %v4333
      %v4443 = vand.u32 2147483647, %v4333
      %vm4444 = vcmp.lt.f32.partialorder %v4443, 0.0004427343
      %v4445 = vsel %vm4444, %v4442, %v4439
      %v4446 = vadd.f32 %v4334, 1.0
      %v4447 = vlog2.pop %v4446
      %v4448 = vmul.f32 %v4447, 0.6931472
      %v4449 = vmul.f32 -0.5, %v4334
      %v4450 = vadd.f32 %v4449, 1.0
      %v4451 = vmul.f32 %v4450, %v4334
      %v4452 = vand.u32 2147483647, %v4334
      %vm4453 = vcmp.lt.f32.partialorder %v4452, 0.0004427343
      %v4454 = vsel %vm4453, %v4451, %v4448
      %v4455 = vadd.f32 %v4335, 1.0
      %v4456 = vlog2.pop %v4455
      %v4457 = vmul.f32 %v4456, 0.6931472
      %v4458 = vmul.f32 -0.5, %v4335
      %v4459 = vadd.f32 %v4458, 1.0
      %v4460 = vmul.f32 %v4459, %v4335
      %v4461 = vand.u32 2147483647, %v4335
      %vm4462 = vcmp.lt.f32.partialorder %v4461, 0.0004427343
      %v4463 = vsel %vm4462, %v4460, %v4457
      %v4464 = vadd.f32 %v4336, 1.0
      %v4465 = vlog2.pop %v4464
      %v4466 = vmul.f32 %v4465, 0.6931472
      %v4467 = vmul.f32 -0.5, %v4336
      %v4468 = vadd.f32 %v4467, 1.0
      %v4469 = vmul.f32 %v4468, %v4336
      %v4470 = vand.u32 2147483647, %v4336
      %vm4471 = vcmp.lt.f32.partialorder %v4470, 0.0004427343
      %v4472 = vsel %vm4471, %v4469, %v4466
      %v4473 = vadd.f32 %v4337, 1.0
      %v4474 = vlog2.pop %v4473
      %v4475 = vmul.f32 %v4474, 0.6931472
      %v4476 = vmul.f32 -0.5, %v4337
      %v4477 = vadd.f32 %v4476, 1.0
      %v4478 = vmul.f32 %v4477, %v4337
      %v4479 = vand.u32 2147483647, %v4337
      %vm4480 = vcmp.lt.f32.partialorder %v4479, 0.0004427343
      %v4481 = vsel %vm4480, %v4478, %v4475
      %v4482 = vadd.f32 %v4338, 1.0
      %v4483 = vlog2.pop %v4482
      %v4484 = vmul.f32 %v4483, 0.6931472
      %v4485 = vmul.f32 -0.5, %v4338
      %v4486 = vadd.f32 %v4485, 1.0
      %v4487 = vmul.f32 %v4486, %v4338
      %v4488 = vand.u32 2147483647, %v4338
      %vm4489 = vcmp.lt.f32.partialorder %v4488, 0.0004427343
      %v4490 = vsel %vm4489, %v4487, %v4484
      %v4491 = vadd.f32 %v4339, 1.0
      %v4492 = vlog2.pop %v4491
      %v4493 = vmul.f32 %v4492, 0.6931472
      %v4494 = vmul.f32 -0.5, %v4339
      %v4495 = vadd.f32 %v4494, 1.0
      %v4496 = vmul.f32 %v4495, %v4339
      %v4497 = vand.u32 2147483647, %v4339
      %vm4498 = vcmp.lt.f32.partialorder %v4497, 0.0004427343
      %v4499 = vsel %vm4498, %v4496, %v4493
      %v4500 = vadd.f32 %v4340, 1.0
      %v4501 = vlog2.pop %v4500
      %v4502 = vmul.f32 %v4501, 0.6931472
      %v4503 = vmul.f32 -0.5, %v4340
      %v4504 = vadd.f32 %v4503, 1.0
      %v4505 = vmul.f32 %v4504, %v4340
      %v4506 = vand.u32 2147483647, %v4340
      %vm4507 = vcmp.lt.f32.partialorder %v4506, 0.0004427343
      %v4508 = vsel %vm4507, %v4505, %v4502
      %v4509 = vadd.f32 %v4341, 1.0
      %v4510 = vlog2.pop %v4509
      %v4511 = vmul.f32 %v4510, 0.6931472
      %v4512 = vmul.f32 -0.5, %v4341
      %v4513 = vadd.f32 %v4512, 1.0
      %v4514 = vmul.f32 %v4513, %v4341
      %v4515 = vand.u32 2147483647, %v4341
      %vm4516 = vcmp.lt.f32.partialorder %v4515, 0.0004427343
      %v4517 = vsel %vm4516, %v4514, %v4511
      %v4518 = vadd.f32 %v4342, 1.0
      %v4519 = vlog2.pop %v4518
      %v4520 = vmul.f32 %v4519, 0.6931472
      %v4521 = vmul.f32 -0.5, %v4342
      %v4522 = vadd.f32 %v4521, 1.0
      %v4523 = vmul.f32 %v4522, %v4342
      %v4524 = vand.u32 2147483647, %v4342
      %vm4525 = vcmp.lt.f32.partialorder %v4524, 0.0004427343
      %v4526 = vsel %vm4525, %v4523, %v4520
      %v4527 = vadd.f32 %v4343, 1.0
      %v4528 = vlog2.pop %v4527
      %v4529 = vmul.f32 %v4528, 0.6931472
      %v4530 = vmul.f32 -0.5, %v4343
      %v4531 = vadd.f32 %v4530, 1.0
      %v4532 = vmul.f32 %v4531, %v4343
      %v4533 = vand.u32 2147483647, %v4343
      %vm4534 = vcmp.lt.f32.partialorder %v4533, 0.0004427343
      %v4535 = vsel %vm4534, %v4532, %v4529
      %v4536 = vadd.f32 %v4344, 1.0
      %v4537 = vlog2.pop %v4536
      %v4538 = vmul.f32 %v4537, 0.6931472
      %v4539 = vmul.f32 -0.5, %v4344
      %v4540 = vadd.f32 %v4539, 1.0
      %v4541 = vmul.f32 %v4540, %v4344
      %v4542 = vand.u32 2147483647, %v4344
      %vm4543 = vcmp.lt.f32.partialorder %v4542, 0.0004427343
      %v4544 = vsel %vm4543, %v4541, %v4538
      %v4545 = vadd.f32 %v4345, 1.0
      %v4546 = vlog2.pop %v4545
      %v4547 = vmul.f32 %v4546, 0.6931472
      %v4548 = vmul.f32 -0.5, %v4345
      %v4549 = vadd.f32 %v4548, 1.0
      %v4550 = vmul.f32 %v4549, %v4345
      %v4551 = vand.u32 2147483647, %v4345
      %vm4552 = vcmp.lt.f32.partialorder %v4551, 0.0004427343
      %v4553 = vsel %vm4552, %v4550, %v4547
      %v4554 = vadd.f32 %v4346, 1.0
      %v4555 = vlog2.pop %v4554
      %v4556 = vmul.f32 %v4555, 0.6931472
      %v4557 = vmul.f32 -0.5, %v4346
      %v4558 = vadd.f32 %v4557, 1.0
      %v4559 = vmul.f32 %v4558, %v4346
      %v4560 = vand.u32 2147483647, %v4346
      %vm4561 = vcmp.lt.f32.partialorder %v4560, 0.0004427343
      %v4562 = vsel %vm4561, %v4559, %v4556
      %v4563 = vadd.f32 %v4347, 1.0
      %v4564 = vlog2.pop %v4563
      %v4565 = vmul.f32 %v4564, 0.6931472
      %v4566 = vmul.f32 -0.5, %v4347
      %v4567 = vadd.f32 %v4566, 1.0
      %v4568 = vmul.f32 %v4567, %v4347
      %v4569 = vand.u32 2147483647, %v4347
      %vm4570 = vcmp.lt.f32.partialorder %v4569, 0.0004427343
      %v4571 = vsel %vm4570, %v4568, %v4565
      %v4572 = vadd.f32 %v4348, 1.0
      %v4573 = vlog2.pop %v4572
      %v4574 = vmul.f32 %v4573, 0.6931472
      %v4575 = vmul.f32 -0.5, %v4348
      %v4576 = vadd.f32 %v4575, 1.0
      %v4577 = vmul.f32 %v4576, %v4348
      %v4578 = vand.u32 2147483647, %v4348
      %vm4579 = vcmp.lt.f32.partialorder %v4578, 0.0004427343
      %v4580 = vsel %vm4579, %v4577, %v4574
      %v4581 = vadd.f32 %v4349, 1.0
      %v4582 = vlog2.pop %v4581
      %v4583 = vmul.f32 %v4582, 0.6931472
      %v4584 = vmul.f32 -0.5, %v4349
      %v4585 = vadd.f32 %v4584, 1.0
      %v4586 = vmul.f32 %v4585, %v4349
      %v4587 = vand.u32 2147483647, %v4349
      %vm4588 = vcmp.lt.f32.partialorder %v4587, 0.0004427343
      %v4589 = vsel %vm4588, %v4586, %v4583
      %v4590 = vadd.f32 %v4350, 1.0
      %v4591 = vlog2.pop %v4590
      %v4592 = vmul.f32 %v4591, 0.6931472
      %v4593 = vmul.f32 -0.5, %v4350
      %v4594 = vadd.f32 %v4593, 1.0
      %v4595 = vmul.f32 %v4594, %v4350
      %v4596 = vand.u32 2147483647, %v4350
      %vm4597 = vcmp.lt.f32.partialorder %v4596, 0.0004427343
      %v4598 = vsel %vm4597, %v4595, %v4592
      %v4599 = vadd.f32 %v4351, 1.0
      %v4600 = vlog2.pop %v4599
      %v4601 = vmul.f32 %v4600, 0.6931472
      %v4602 = vmul.f32 -0.5, %v4351
      %v4603 = vadd.f32 %v4602, 1.0
      %v4604 = vmul.f32 %v4603, %v4351
      %v4605 = vand.u32 2147483647, %v4351
      %vm4606 = vcmp.lt.f32.partialorder %v4605, 0.0004427343
      %v4607 = vsel %vm4606, %v4604, %v4601
      %v4608 = vadd.f32 %v4352, 1.0
      %v4609 = vlog2.pop %v4608
      %v4610 = vmul.f32 %v4609, 0.6931472
      %v4611 = vmul.f32 -0.5, %v4352
      %v4612 = vadd.f32 %v4611, 1.0
      %v4613 = vmul.f32 %v4612, %v4352
      %v4614 = vand.u32 2147483647, %v4352
      %vm4615 = vcmp.lt.f32.partialorder %v4614, 0.0004427343
      %v4616 = vsel %vm4615, %v4613, %v4610
      %v4617 = vadd.f32 %v4353, 1.0
      %v4618 = vlog2.pop %v4617
      %v4619 = vmul.f32 %v4618, 0.6931472
      %v4620 = vmul.f32 -0.5, %v4353
      %v4621 = vadd.f32 %v4620, 1.0
      %v4622 = vmul.f32 %v4621, %v4353
      %v4623 = vand.u32 2147483647, %v4353
      %vm4624 = vcmp.lt.f32.partialorder %v4623, 0.0004427343
      %v4625 = vsel %vm4624, %v4622, %v4619
      %v4626 = vadd.f32 %v4354, 1.0
      %v4627 = vlog2.pop %v4626
      %v4628 = vmul.f32 %v4627, 0.6931472
      %v4629 = vmul.f32 -0.5, %v4354
      %v4630 = vadd.f32 %v4629, 1.0
      %v4631 = vmul.f32 %v4630, %v4354
      %v4632 = vand.u32 2147483647, %v4354
      %vm4633 = vcmp.lt.f32.partialorder %v4632, 0.0004427343
      %v4634 = vsel %vm4633, %v4631, %v4628
      %v4635 = vadd.f32 %v4355, 1.0
      %v4636 = vlog2.pop %v4635
      %v4637 = vmul.f32 %v4636, 0.6931472
      %v4638 = vmul.f32 -0.5, %v4355
      %v4639 = vadd.f32 %v4638, 1.0
      %v4640 = vmul.f32 %v4639, %v4355
      %v4641 = vand.u32 2147483647, %v4355
      %vm4642 = vcmp.lt.f32.partialorder %v4641, 0.0004427343
      %v4643 = vsel %vm4642, %v4640, %v4637
      %v4644 = vsub.f32 0.0, %v4324
      %v4645 = vsub.f32 0.0, %v4325
      %v4646 = vsub.f32 0.0, %v4326
      %v4647 = vsub.f32 0.0, %v4327
      %v4648 = vsub.f32 0.0, %v4328
      %v4649 = vsub.f32 0.0, %v4329
      %v4650 = vsub.f32 0.0, %v4330
      %v4651 = vsub.f32 0.0, %v4331
      %v4652 = vsub.f32 0.0, %v4332
      %v4653 = vsub.f32 0.0, %v4333
      %v4654 = vsub.f32 0.0, %v4334
      %v4655 = vsub.f32 0.0, %v4335
      %v4656 = vsub.f32 0.0, %v4336
      %v4657 = vsub.f32 0.0, %v4337
      %v4658 = vsub.f32 0.0, %v4338
      %v4659 = vsub.f32 0.0, %v4339
      %v4660 = vsub.f32 0.0, %v4340
      %v4661 = vsub.f32 0.0, %v4341
      %v4662 = vsub.f32 0.0, %v4342
      %v4663 = vsub.f32 0.0, %v4343
      %v4664 = vsub.f32 0.0, %v4344
      %v4665 = vsub.f32 0.0, %v4345
      %v4666 = vsub.f32 0.0, %v4346
      %v4667 = vsub.f32 0.0, %v4347
      %v4668 = vsub.f32 0.0, %v4348
      %v4669 = vsub.f32 0.0, %v4349
      %v4670 = vsub.f32 0.0, %v4350
      %v4671 = vsub.f32 0.0, %v4351
      %v4672 = vsub.f32 0.0, %v4352
      %v4673 = vsub.f32 0.0, %v4353
      %v4674 = vsub.f32 0.0, %v4354
      %v4675 = vsub.f32 0.0, %v4355
      %v4676 = vadd.f32 %v4644, 1.0
      %v4677 = vlog2.pop %v4676
      %v4678 = vmul.f32 %v4677, 0.6931472
      %v4679 = vmul.f32 -0.5, %v4644
      %v4680 = vadd.f32 %v4679, 1.0
      %v4681 = vmul.f32 %v4680, %v4644
      %v4682 = vand.u32 2147483647, %v4644
      %vm4683 = vcmp.lt.f32.partialorder %v4682, 0.0004427343
      %v4684 = vsel %vm4683, %v4681, %v4678
      %v4685 = vadd.f32 %v4645, 1.0
      %v4686 = vlog2.pop %v4685
      %v4687 = vmul.f32 %v4686, 0.6931472
      %v4688 = vmul.f32 -0.5, %v4645
      %v4689 = vadd.f32 %v4688, 1.0
      %v4690 = vmul.f32 %v4689, %v4645
      %v4691 = vand.u32 2147483647, %v4645
      %vm4692 = vcmp.lt.f32.partialorder %v4691, 0.0004427343
      %v4693 = vsel %vm4692, %v4690, %v4687
      %v4694 = vadd.f32 %v4646, 1.0
      %v4695 = vlog2.pop %v4694
      %v4696 = vmul.f32 %v4695, 0.6931472
      %v4697 = vmul.f32 -0.5, %v4646
      %v4698 = vadd.f32 %v4697, 1.0
      %v4699 = vmul.f32 %v4698, %v4646
      %v4700 = vand.u32 2147483647, %v4646
      %vm4701 = vcmp.lt.f32.partialorder %v4700, 0.0004427343
      %v4702 = vsel %vm4701, %v4699, %v4696
      %v4703 = vadd.f32 %v4647, 1.0
      %v4704 = vlog2.pop %v4703
      %v4705 = vmul.f32 %v4704, 0.6931472
      %v4706 = vmul.f32 -0.5, %v4647
      %v4707 = vadd.f32 %v4706, 1.0
      %v4708 = vmul.f32 %v4707, %v4647
      %v4709 = vand.u32 2147483647, %v4647
      %vm4710 = vcmp.lt.f32.partialorder %v4709, 0.0004427343
      %v4711 = vsel %vm4710, %v4708, %v4705
      %v4712 = vadd.f32 %v4648, 1.0
      %v4713 = vlog2.pop %v4712
      %v4714 = vmul.f32 %v4713, 0.6931472
      %v4715 = vmul.f32 -0.5, %v4648
      %v4716 = vadd.f32 %v4715, 1.0
      %v4717 = vmul.f32 %v4716, %v4648
      %v4718 = vand.u32 2147483647, %v4648
      %vm4719 = vcmp.lt.f32.partialorder %v4718, 0.0004427343
      %v4720 = vsel %vm4719, %v4717, %v4714
      %v4721 = vadd.f32 %v4649, 1.0
      %v4722 = vlog2.pop %v4721
      %v4723 = vmul.f32 %v4722, 0.6931472
      %v4724 = vmul.f32 -0.5, %v4649
      %v4725 = vadd.f32 %v4724, 1.0
      %v4726 = vmul.f32 %v4725, %v4649
      %v4727 = vand.u32 2147483647, %v4649
      %vm4728 = vcmp.lt.f32.partialorder %v4727, 0.0004427343
      %v4729 = vsel %vm4728, %v4726, %v4723
      %v4730 = vadd.f32 %v4650, 1.0
      %v4731 = vlog2.pop %v4730
      %v4732 = vmul.f32 %v4731, 0.6931472
      %v4733 = vmul.f32 -0.5, %v4650
      %v4734 = vadd.f32 %v4733, 1.0
      %v4735 = vmul.f32 %v4734, %v4650
      %v4736 = vand.u32 2147483647, %v4650
      %vm4737 = vcmp.lt.f32.partialorder %v4736, 0.0004427343
      %v4738 = vsel %vm4737, %v4735, %v4732
      %v4739 = vadd.f32 %v4651, 1.0
      %v4740 = vlog2.pop %v4739
      %v4741 = vmul.f32 %v4740, 0.6931472
      %v4742 = vmul.f32 -0.5, %v4651
      %v4743 = vadd.f32 %v4742, 1.0
      %v4744 = vmul.f32 %v4743, %v4651
      %v4745 = vand.u32 2147483647, %v4651
      %vm4746 = vcmp.lt.f32.partialorder %v4745, 0.0004427343
      %v4747 = vsel %vm4746, %v4744, %v4741
      %v4748 = vadd.f32 %v4652, 1.0
      %v4749 = vlog2.pop %v4748
      %v4750 = vmul.f32 %v4749, 0.6931472
      %v4751 = vmul.f32 -0.5, %v4652
      %v4752 = vadd.f32 %v4751, 1.0
      %v4753 = vmul.f32 %v4752, %v4652
      %v4754 = vand.u32 2147483647, %v4652
      %vm4755 = vcmp.lt.f32.partialorder %v4754, 0.0004427343
      %v4756 = vsel %vm4755, %v4753, %v4750
      %v4757 = vadd.f32 %v4653, 1.0
      %v4758 = vlog2.pop %v4757
      %v4759 = vmul.f32 %v4758, 0.6931472
      %v4760 = vmul.f32 -0.5, %v4653
      %v4761 = vadd.f32 %v4760, 1.0
      %v4762 = vmul.f32 %v4761, %v4653
      %v4763 = vand.u32 2147483647, %v4653
      %vm4764 = vcmp.lt.f32.partialorder %v4763, 0.0004427343
      %v4765 = vsel %vm4764, %v4762, %v4759
      %v4766 = vadd.f32 %v4654, 1.0
      %v4767 = vlog2.pop %v4766
      %v4768 = vmul.f32 %v4767, 0.6931472
      %v4769 = vmul.f32 -0.5, %v4654
      %v4770 = vadd.f32 %v4769, 1.0
      %v4771 = vmul.f32 %v4770, %v4654
      %v4772 = vand.u32 2147483647, %v4654
      %vm4773 = vcmp.lt.f32.partialorder %v4772, 0.0004427343
      %v4774 = vsel %vm4773, %v4771, %v4768
      %v4775 = vadd.f32 %v4655, 1.0
      %v4776 = vlog2.pop %v4775
      %v4777 = vmul.f32 %v4776, 0.6931472
      %v4778 = vmul.f32 -0.5, %v4655
      %v4779 = vadd.f32 %v4778, 1.0
      %v4780 = vmul.f32 %v4779, %v4655
      %v4781 = vand.u32 2147483647, %v4655
      %vm4782 = vcmp.lt.f32.partialorder %v4781, 0.0004427343
      %v4783 = vsel %vm4782, %v4780, %v4777
      %v4784 = vadd.f32 %v4656, 1.0
      %v4785 = vlog2.pop %v4784
      %v4786 = vmul.f32 %v4785, 0.6931472
      %v4787 = vmul.f32 -0.5, %v4656
      %v4788 = vadd.f32 %v4787, 1.0
      %v4789 = vmul.f32 %v4788, %v4656
      %v4790 = vand.u32 2147483647, %v4656
      %vm4791 = vcmp.lt.f32.partialorder %v4790, 0.0004427343
      %v4792 = vsel %vm4791, %v4789, %v4786
      %v4793 = vadd.f32 %v4657, 1.0
      %v4794 = vlog2.pop %v4793
      %v4795 = vmul.f32 %v4794, 0.6931472
      %v4796 = vmul.f32 -0.5, %v4657
      %v4797 = vadd.f32 %v4796, 1.0
      %v4798 = vmul.f32 %v4797, %v4657
      %v4799 = vand.u32 2147483647, %v4657
      %vm4800 = vcmp.lt.f32.partialorder %v4799, 0.0004427343
      %v4801 = vsel %vm4800, %v4798, %v4795
      %v4802 = vadd.f32 %v4658, 1.0
      %v4803 = vlog2.pop %v4802
      %v4804 = vmul.f32 %v4803, 0.6931472
      %v4805 = vmul.f32 -0.5, %v4658
      %v4806 = vadd.f32 %v4805, 1.0
      %v4807 = vmul.f32 %v4806, %v4658
      %v4808 = vand.u32 2147483647, %v4658
      %vm4809 = vcmp.lt.f32.partialorder %v4808, 0.0004427343
      %v4810 = vsel %vm4809, %v4807, %v4804
      %v4811 = vadd.f32 %v4659, 1.0
      %v4812 = vlog2.pop %v4811
      %v4813 = vmul.f32 %v4812, 0.6931472
      %v4814 = vmul.f32 -0.5, %v4659
      %v4815 = vadd.f32 %v4814, 1.0
      %v4816 = vmul.f32 %v4815, %v4659
      %v4817 = vand.u32 2147483647, %v4659
      %vm4818 = vcmp.lt.f32.partialorder %v4817, 0.0004427343
      %v4819 = vsel %vm4818, %v4816, %v4813
      %v4820 = vadd.f32 %v4660, 1.0
      %v4821 = vlog2.pop %v4820
      %v4822 = vmul.f32 %v4821, 0.6931472
      %v4823 = vmul.f32 -0.5, %v4660
      %v4824 = vadd.f32 %v4823, 1.0
      %v4825 = vmul.f32 %v4824, %v4660
      %v4826 = vand.u32 2147483647, %v4660
      %vm4827 = vcmp.lt.f32.partialorder %v4826, 0.0004427343
      %v4828 = vsel %vm4827, %v4825, %v4822
      %v4829 = vadd.f32 %v4661, 1.0
      %v4830 = vlog2.pop %v4829
      %v4831 = vmul.f32 %v4830, 0.6931472
      %v4832 = vmul.f32 -0.5, %v4661
      %v4833 = vadd.f32 %v4832, 1.0
      %v4834 = vmul.f32 %v4833, %v4661
      %v4835 = vand.u32 2147483647, %v4661
      %vm4836 = vcmp.lt.f32.partialorder %v4835, 0.0004427343
      %v4837 = vsel %vm4836, %v4834, %v4831
      %v4838 = vadd.f32 %v4662, 1.0
      %v4839 = vlog2.pop %v4838
      %v4840 = vmul.f32 %v4839, 0.6931472
      %v4841 = vmul.f32 -0.5, %v4662
      %v4842 = vadd.f32 %v4841, 1.0
      %v4843 = vmul.f32 %v4842, %v4662
      %v4844 = vand.u32 2147483647, %v4662
      %vm4845 = vcmp.lt.f32.partialorder %v4844, 0.0004427343
      %v4846 = vsel %vm4845, %v4843, %v4840
      %v4847 = vadd.f32 %v4663, 1.0
      %v4848 = vlog2.pop %v4847
      %v4849 = vmul.f32 %v4848, 0.6931472
      %v4850 = vmul.f32 -0.5, %v4663
      %v4851 = vadd.f32 %v4850, 1.0
      %v4852 = vmul.f32 %v4851, %v4663
      %v4853 = vand.u32 2147483647, %v4663
      %vm4854 = vcmp.lt.f32.partialorder %v4853, 0.0004427343
      %v4855 = vsel %vm4854, %v4852, %v4849
      %v4856 = vadd.f32 %v4664, 1.0
      %v4857 = vlog2.pop %v4856
      %v4858 = vmul.f32 %v4857, 0.6931472
      %v4859 = vmul.f32 -0.5, %v4664
      %v4860 = vadd.f32 %v4859, 1.0
      %v4861 = vmul.f32 %v4860, %v4664
      %v4862 = vand.u32 2147483647, %v4664
      %vm4863 = vcmp.lt.f32.partialorder %v4862, 0.0004427343
      %v4864 = vsel %vm4863, %v4861, %v4858
      %v4865 = vadd.f32 %v4665, 1.0
      %v4866 = vlog2.pop %v4865
      %v4867 = vmul.f32 %v4866, 0.6931472
      %v4868 = vmul.f32 -0.5, %v4665
      %v4869 = vadd.f32 %v4868, 1.0
      %v4870 = vmul.f32 %v4869, %v4665
      %v4871 = vand.u32 2147483647, %v4665
      %vm4872 = vcmp.lt.f32.partialorder %v4871, 0.0004427343
      %v4873 = vsel %vm4872, %v4870, %v4867
      %v4874 = vadd.f32 %v4666, 1.0
      %v4875 = vlog2.pop %v4874
      %v4876 = vmul.f32 %v4875, 0.6931472
      %v4877 = vmul.f32 -0.5, %v4666
      %v4878 = vadd.f32 %v4877, 1.0
      %v4879 = vmul.f32 %v4878, %v4666
      %v4880 = vand.u32 2147483647, %v4666
      %vm4881 = vcmp.lt.f32.partialorder %v4880, 0.0004427343
      %v4882 = vsel %vm4881, %v4879, %v4876
      %v4883 = vadd.f32 %v4667, 1.0
      %v4884 = vlog2.pop %v4883
      %v4885 = vmul.f32 %v4884, 0.6931472
      %v4886 = vmul.f32 -0.5, %v4667
      %v4887 = vadd.f32 %v4886, 1.0
      %v4888 = vmul.f32 %v4887, %v4667
      %v4889 = vand.u32 2147483647, %v4667
      %vm4890 = vcmp.lt.f32.partialorder %v4889, 0.0004427343
      %v4891 = vsel %vm4890, %v4888, %v4885
      %v4892 = vadd.f32 %v4668, 1.0
      %v4893 = vlog2.pop %v4892
      %v4894 = vmul.f32 %v4893, 0.6931472
      %v4895 = vmul.f32 -0.5, %v4668
      %v4896 = vadd.f32 %v4895, 1.0
      %v4897 = vmul.f32 %v4896, %v4668
      %v4898 = vand.u32 2147483647, %v4668
      %vm4899 = vcmp.lt.f32.partialorder %v4898, 0.0004427343
      %v4900 = vsel %vm4899, %v4897, %v4894
      %v4901 = vadd.f32 %v4669, 1.0
      %v4902 = vlog2.pop %v4901
      %v4903 = vmul.f32 %v4902, 0.6931472
      %v4904 = vmul.f32 -0.5, %v4669
      %v4905 = vadd.f32 %v4904, 1.0
      %v4906 = vmul.f32 %v4905, %v4669
      %v4907 = vand.u32 2147483647, %v4669
      %vm4908 = vcmp.lt.f32.partialorder %v4907, 0.0004427343
      %v4909 = vsel %vm4908, %v4906, %v4903
      %v4910 = vadd.f32 %v4670, 1.0
      %v4911 = vlog2.pop %v4910
      %v4912 = vmul.f32 %v4911, 0.6931472
      %v4913 = vmul.f32 -0.5, %v4670
      %v4914 = vadd.f32 %v4913, 1.0
      %v4915 = vmul.f32 %v4914, %v4670
      %v4916 = vand.u32 2147483647, %v4670
      %vm4917 = vcmp.lt.f32.partialorder %v4916, 0.0004427343
      %v4918 = vsel %vm4917, %v4915, %v4912
      %v4919 = vadd.f32 %v4671, 1.0
      %v4920 = vlog2.pop %v4919
      %v4921 = vmul.f32 %v4920, 0.6931472
      %v4922 = vmul.f32 -0.5, %v4671
      %v4923 = vadd.f32 %v4922, 1.0
      %v4924 = vmul.f32 %v4923, %v4671
      %v4925 = vand.u32 2147483647, %v4671
      %vm4926 = vcmp.lt.f32.partialorder %v4925, 0.0004427343
      %v4927 = vsel %vm4926, %v4924, %v4921
      %v4928 = vadd.f32 %v4672, 1.0
      %v4929 = vlog2.pop %v4928
      %v4930 = vmul.f32 %v4929, 0.6931472
      %v4931 = vmul.f32 -0.5, %v4672
      %v4932 = vadd.f32 %v4931, 1.0
      %v4933 = vmul.f32 %v4932, %v4672
      %v4934 = vand.u32 2147483647, %v4672
      %vm4935 = vcmp.lt.f32.partialorder %v4934, 0.0004427343
      %v4936 = vsel %vm4935, %v4933, %v4930
      %v4937 = vadd.f32 %v4673, 1.0
      %v4938 = vlog2.pop %v4937
      %v4939 = vmul.f32 %v4938, 0.6931472
      %v4940 = vmul.f32 -0.5, %v4673
      %v4941 = vadd.f32 %v4940, 1.0
      %v4942 = vmul.f32 %v4941, %v4673
      %v4943 = vand.u32 2147483647, %v4673
      %vm4944 = vcmp.lt.f32.partialorder %v4943, 0.0004427343
      %v4945 = vsel %vm4944, %v4942, %v4939
      %v4946 = vadd.f32 %v4674, 1.0
      %v4947 = vlog2.pop %v4946
      %v4948 = vmul.f32 %v4947, 0.6931472
      %v4949 = vmul.f32 -0.5, %v4674
      %v4950 = vadd.f32 %v4949, 1.0
      %v4951 = vmul.f32 %v4950, %v4674
      %v4952 = vand.u32 2147483647, %v4674
      %vm4953 = vcmp.lt.f32.partialorder %v4952, 0.0004427343
      %v4954 = vsel %vm4953, %v4951, %v4948
      %v4955 = vadd.f32 %v4675, 1.0
      %v4956 = vlog2.pop %v4955
      %v4957 = vmul.f32 %v4956, 0.6931472
      %v4958 = vmul.f32 -0.5, %v4675
      %v4959 = vadd.f32 %v4958, 1.0
      %v4960 = vmul.f32 %v4959, %v4675
      %v4961 = vand.u32 2147483647, %v4675
      %vm4962 = vcmp.lt.f32.partialorder %v4961, 0.0004427343
      %v4963 = vsel %vm4962, %v4960, %v4957
      %v4964 = vsub.f32 %v4364, %v4684
      %v4965 = vsub.f32 %v4373, %v4693
      %v4966 = vsub.f32 %v4382, %v4702
      %v4967 = vsub.f32 %v4391, %v4711
      %v4968 = vsub.f32 %v4400, %v4720
      %v4969 = vsub.f32 %v4409, %v4729
      %v4970 = vsub.f32 %v4418, %v4738
      %v4971 = vsub.f32 %v4427, %v4747
      %v4972 = vsub.f32 %v4436, %v4756
      %v4973 = vsub.f32 %v4445, %v4765
      %v4974 = vsub.f32 %v4454, %v4774
      %v4975 = vsub.f32 %v4463, %v4783
      %v4976 = vsub.f32 %v4472, %v4792
      %v4977 = vsub.f32 %v4481, %v4801
      %v4978 = vsub.f32 %v4490, %v4810
      %v4979 = vsub.f32 %v4499, %v4819
      %v4980 = vsub.f32 %v4508, %v4828
      %v4981 = vsub.f32 %v4517, %v4837
      %v4982 = vsub.f32 %v4526, %v4846
      %v4983 = vsub.f32 %v4535, %v4855
      %v4984 = vsub.f32 %v4544, %v4864
      %v4985 = vsub.f32 %v4553, %v4873
      %v4986 = vsub.f32 %v4562, %v4882
      %v4987 = vsub.f32 %v4571, %v4891
      %v4988 = vsub.f32 %v4580, %v4900
      %v4989 = vsub.f32 %v4589, %v4909
      %v4990 = vsub.f32 %v4598, %v4918
      %v4991 = vsub.f32 %v4607, %v4927
      %v4992 = vsub.f32 %v4616, %v4936
      %v4993 = vsub.f32 %v4625, %v4945
      %v4994 = vsub.f32 %v4634, %v4954
      %v4995 = vsub.f32 %v4643, %v4963
      %v4996 = vmul.f32 %v4964, 0.5
      %v4997 = vmul.f32 %v4965, 0.5
      %v4998 = vmul.f32 %v4966, 0.5
      %v4999 = vmul.f32 %v4967, 0.5
      %v5000 = vmul.f32 %v4968, 0.5
      %v5001 = vmul.f32 %v4969, 0.5
      %v5002 = vmul.f32 %v4970, 0.5
      %v5003 = vmul.f32 %v4971, 0.5
      %v5004 = vmul.f32 %v4972, 0.5
      %v5005 = vmul.f32 %v4973, 0.5
      %v5006 = vmul.f32 %v4974, 0.5
      %v5007 = vmul.f32 %v4975, 0.5
      %v5008 = vmul.f32 %v4976, 0.5
      %v5009 = vmul.f32 %v4977, 0.5
      %v5010 = vmul.f32 %v4978, 0.5
      %v5011 = vmul.f32 %v4979, 0.5
      %v5012 = vmul.f32 %v4980, 0.5
      %v5013 = vmul.f32 %v4981, 0.5
      %v5014 = vmul.f32 %v4982, 0.5
      %v5015 = vmul.f32 %v4983, 0.5
      %v5016 = vmul.f32 %v4984, 0.5
      %v5017 = vmul.f32 %v4985, 0.5
      %v5018 = vmul.f32 %v4986, 0.5
      %v5019 = vmul.f32 %v4987, 0.5
      %v5020 = vmul.f32 %v4988, 0.5
      %v5021 = vmul.f32 %v4989, 0.5
      %v5022 = vmul.f32 %v4990, 0.5
      %v5023 = vmul.f32 %v4991, 0.5
      %v5024 = vmul.f32 %v4992, 0.5
      %v5025 = vmul.f32 %v4993, 0.5
      %v5026 = vmul.f32 %v4994, 0.5
      %v5027 = vmul.f32 %v4995, 0.5
      %v5028 = vrcp.pop %v4260
      %v5029 = vmul.f32 %v4996, %v5028
      %v5030 = vrcp.pop %v4261
      %v5031 = vmul.f32 %v4997, %v5030
      %v5032 = vrcp.pop %v4262
      %v5033 = vmul.f32 %v4998, %v5032
      %v5034 = vrcp.pop %v4263
      %v5035 = vmul.f32 %v4999, %v5034
      %v5036 = vrcp.pop %v4264
      %v5037 = vmul.f32 %v5000, %v5036
      %v5038 = vrcp.pop %v4265
      %v5039 = vmul.f32 %v5001, %v5038
      %v5040 = vrcp.pop %v4266
      %v5041 = vmul.f32 %v5002, %v5040
      %v5042 = vrcp.pop %v4267
      %v5043 = vmul.f32 %v5003, %v5042
      %v5044 = vrcp.pop %v4268
      %v5045 = vmul.f32 %v5004, %v5044
      %v5046 = vrcp.pop %v4269
      %v5047 = vmul.f32 %v5005, %v5046
      %v5048 = vrcp.pop %v4270
      %v5049 = vmul.f32 %v5006, %v5048
      %v5050 = vrcp.pop %v4271
      %v5051 = vmul.f32 %v5007, %v5050
      %v5052 = vrcp.pop %v4272
      %v5053 = vmul.f32 %v5008, %v5052
      %v5054 = vrcp.pop %v4273
      %v5055 = vmul.f32 %v5009, %v5054
      %v5056 = vrcp.pop %v4274
      %v5057 = vmul.f32 %v5010, %v5056
      %v5058 = vrcp.pop %v4275
      %v5059 = vmul.f32 %v5011, %v5058
      %v5060 = vrcp.pop %v4276
      %v5061 = vmul.f32 %v5012, %v5060
      %v5062 = vrcp.pop %v4277
      %v5063 = vmul.f32 %v5013, %v5062
      %v5064 = vrcp.pop %v4278
      %v5065 = vmul.f32 %v5014, %v5064
      %v5066 = vrcp.pop %v4279
      %v5067 = vmul.f32 %v5015, %v5066
      %v5068 = vrcp.pop %v4280
      %v5069 = vmul.f32 %v5016, %v5068
      %v5070 = vrcp.pop %v4281
      %v5071 = vmul.f32 %v5017, %v5070
      %v5072 = vrcp.pop %v4282
      %v5073 = vmul.f32 %v5018, %v5072
      %v5074 = vrcp.pop %v4283
      %v5075 = vmul.f32 %v5019, %v5074
      %v5076 = vrcp.pop %v4284
      %v5077 = vmul.f32 %v5020, %v5076
      %v5078 = vrcp.pop %v4285
      %v5079 = vmul.f32 %v5021, %v5078
      %v5080 = vrcp.pop %v4286
      %v5081 = vmul.f32 %v5022, %v5080
      %v5082 = vrcp.pop %v4287
      %v5083 = vmul.f32 %v5023, %v5082
      %v5084 = vrcp.pop %v4288
      %v5085 = vmul.f32 %v5024, %v5084
      %v5086 = vrcp.pop %v4289
      %v5087 = vmul.f32 %v5025, %v5086
      %v5088 = vrcp.pop %v4290
      %v5089 = vmul.f32 %v5026, %v5088
      %v5090 = vrcp.pop %v4291
      %v5091 = vmul.f32 %v5027, %v5090
      %v5092 = vmul.f32 %v5029, %v4228
      %v5093 = vmul.f32 %v5031, %v4229
      %v5094 = vmul.f32 %v5033, %v4230
      %v5095 = vmul.f32 %v5035, %v4231
      %v5096 = vmul.f32 %v5037, %v4232
      %v5097 = vmul.f32 %v5039, %v4233
      %v5098 = vmul.f32 %v5041, %v4234
      %v5099 = vmul.f32 %v5043, %v4235
      %v5100 = vmul.f32 %v5045, %v4236
      %v5101 = vmul.f32 %v5047, %v4237
      %v5102 = vmul.f32 %v5049, %v4238
      %v5103 = vmul.f32 %v5051, %v4239
      %v5104 = vmul.f32 %v5053, %v4240
      %v5105 = vmul.f32 %v5055, %v4241
      %v5106 = vmul.f32 %v5057, %v4242
      %v5107 = vmul.f32 %v5059, %v4243
      %v5108 = vmul.f32 %v5061, %v4244
      %v5109 = vmul.f32 %v5063, %v4245
      %v5110 = vmul.f32 %v5065, %v4246
      %v5111 = vmul.f32 %v5067, %v4247
      %v5112 = vmul.f32 %v5069, %v4248
      %v5113 = vmul.f32 %v5071, %v4249
      %v5114 = vmul.f32 %v5073, %v4250
      %v5115 = vmul.f32 %v5075, %v4251
      %v5116 = vmul.f32 %v5077, %v4252
      %v5117 = vmul.f32 %v5079, %v4253
      %v5118 = vmul.f32 %v5081, %v4254
      %v5119 = vmul.f32 %v5083, %v4255
      %v5120 = vmul.f32 %v5085, %v4256
      %v5121 = vmul.f32 %v5087, %v4257
      %v5122 = vmul.f32 %v5089, %v4258
      %v5123 = vmul.f32 %v5091, %v4259
      %v5124 = vpack.c.bf16 %v5093, %v5092
      %v5125 = vpack.c.bf16 %v5095, %v5094
      %v5126 = vpack.c.bf16 %v5097, %v5096
      %v5127 = vpack.c.bf16 %v5099, %v5098
      %v5128 = vpack.c.bf16 %v5101, %v5100
      %v5129 = vpack.c.bf16 %v5103, %v5102
      %v5130 = vpack.c.bf16 %v5105, %v5104
      %v5131 = vpack.c.bf16 %v5107, %v5106
      %v5132 = vpack.c.bf16 %v5109, %v5108
      %v5133 = vpack.c.bf16 %v5111, %v5110
      %v5134 = vpack.c.bf16 %v5113, %v5112
      %v5135 = vpack.c.bf16 %v5115, %v5114
      %v5136 = vpack.c.bf16 %v5117, %v5116
      %v5137 = vpack.c.bf16 %v5119, %v5118
      %v5138 = vpack.c.bf16 %v5121, %v5120
      %v5139 = vpack.c.bf16 %v5123, %v5122
      %v5156 = vunpack.c.l.b16 %v5124
      %v5157 = vunpack.c.h.b16 %v5124
      %v5158 = vunpack.c.l.b16 %v5125
      %v5159 = vunpack.c.h.b16 %v5125
      %v5160 = vunpack.c.l.b16 %v5126
      %v5161 = vunpack.c.h.b16 %v5126
      %v5162 = vunpack.c.l.b16 %v5127
      %v5163 = vunpack.c.h.b16 %v5127
      %v5164 = vunpack.c.l.b16 %v5128
      %v5165 = vunpack.c.h.b16 %v5128
      %v5166 = vunpack.c.l.b16 %v5129
      %v5167 = vunpack.c.h.b16 %v5129
      %v5168 = vunpack.c.l.b16 %v5130
      %v5169 = vunpack.c.h.b16 %v5130
      %v5170 = vunpack.c.l.b16 %v5131
      %v5171 = vunpack.c.h.b16 %v5131
      %v5172 = vunpack.c.l.b16 %v5132
      %v5173 = vunpack.c.h.b16 %v5132
      %v5174 = vunpack.c.l.b16 %v5133
      %v5175 = vunpack.c.h.b16 %v5133
      %v5176 = vunpack.c.l.b16 %v5134
      %v5177 = vunpack.c.h.b16 %v5134
      %v5178 = vunpack.c.l.b16 %v5135
      %v5179 = vunpack.c.h.b16 %v5135
      %v5180 = vunpack.c.l.b16 %v5136
      %v5181 = vunpack.c.h.b16 %v5136
      %v5182 = vunpack.c.l.b16 %v5137
      %v5183 = vunpack.c.h.b16 %v5137
      %v5184 = vunpack.c.l.b16 %v5138
      %v5185 = vunpack.c.h.b16 %v5138
      %v5186 = vunpack.c.l.b16 %v5139
      %v5187 = vunpack.c.h.b16 %v5139
      %v5188 = vpack.c.b16 %v5156, %v5156
      %v5189 = vpack.c.b16 %v5157, %v5157
      %v5190 = vpack.c.b16 %v5158, %v5158
      %v5191 = vpack.c.b16 %v5159, %v5159
      %v5192 = vpack.c.b16 %v5160, %v5160
      %v5193 = vpack.c.b16 %v5161, %v5161
      %v5194 = vpack.c.b16 %v5162, %v5162
      %v5195 = vpack.c.b16 %v5163, %v5163
      %v5196 = vpack.c.b16 %v5164, %v5164
      %v5197 = vpack.c.b16 %v5165, %v5165
      %v5198 = vpack.c.b16 %v5166, %v5166
      %v5199 = vpack.c.b16 %v5167, %v5167
      %v5200 = vpack.c.b16 %v5168, %v5168
      %v5201 = vpack.c.b16 %v5169, %v5169
      %v5202 = vpack.c.b16 %v5170, %v5170
      %v5203 = vpack.c.b16 %v5171, %v5171
      %v5204 = vpack.c.b16 %v5172, %v5172
      %v5205 = vpack.c.b16 %v5173, %v5173
      %v5206 = vpack.c.b16 %v5174, %v5174
      %v5207 = vpack.c.b16 %v5175, %v5175
      %v5208 = vpack.c.b16 %v5176, %v5176
      %v5209 = vpack.c.b16 %v5177, %v5177
      %v5210 = vpack.c.b16 %v5178, %v5178
      %v5211 = vpack.c.b16 %v5179, %v5179
      %v5212 = vpack.c.b16 %v5180, %v5180
      %v5213 = vpack.c.b16 %v5181, %v5181
      %v5214 = vpack.c.b16 %v5182, %v5182
      %v5215 = vpack.c.b16 %v5183, %v5183
      %v5216 = vpack.c.b16 %v5184, %v5184
      %v5217 = vpack.c.b16 %v5185, %v5185
      %v5218 = vpack.c.b16 %v5186, %v5186
      %v5219 = vpack.c.b16 %v5187, %v5187
      %vm5252 = vcmask 257024
      %5253 = vst.msk [vmem:[%s172] sm:$0xf] %vm5252, %v5188
      %5254 = vst.msk [vmem:[%s172 + $0x4] sm:$0xf] %vm5252, %v5189
      %5255 = vst.msk [vmem:[%s172 + $0x8] sm:$0xf] %vm5252, %v5190
      %5256 = vst.msk [vmem:[%s172 + $0xc] sm:$0xf] %vm5252, %v5191
      %5257 = vst.msk [vmem:[%s172 + $0x10] sm:$0xf] %vm5252, %v5192
      %5258 = vst.msk [vmem:[%s172 + $0x14] sm:$0xf] %vm5252, %v5193
      %5259 = vst.msk [vmem:[%s172 + $0x18] sm:$0xf] %vm5252, %v5194
      %5260 = vst.msk [vmem:[%s172 + $0x1c] sm:$0xf] %vm5252, %v5195
      %5261 = vst.msk [vmem:[%s172 + $0x20] sm:$0xf] %vm5252, %v5196
      %5262 = vst.msk [vmem:[%s172 + $0x24] sm:$0xf] %vm5252, %v5197
      %5263 = vst.msk [vmem:[%s172 + $0x28] sm:$0xf] %vm5252, %v5198
      %5264 = vst.msk [vmem:[%s172 + $0x2c] sm:$0xf] %vm5252, %v5199
      %5265 = vst.msk [vmem:[%s172 + $0x30] sm:$0xf] %vm5252, %v5200
      %5266 = vst.msk [vmem:[%s172 + $0x34] sm:$0xf] %vm5252, %v5201
      %5267 = vst.msk [vmem:[%s172 + $0x38] sm:$0xf] %vm5252, %v5202
      %5268 = vst.msk [vmem:[%s172 + $0x3c] sm:$0xf] %vm5252, %v5203
      %5269 = vst.msk [vmem:[%s172 + $0x40] sm:$0xf] %vm5252, %v5204
      %5270 = vst.msk [vmem:[%s172 + $0x44] sm:$0xf] %vm5252, %v5205
      %5271 = vst.msk [vmem:[%s172 + $0x48] sm:$0xf] %vm5252, %v5206
      %5272 = vst.msk [vmem:[%s172 + $0x4c] sm:$0xf] %vm5252, %v5207
      %5273 = vst.msk [vmem:[%s172 + $0x50] sm:$0xf] %vm5252, %v5208
      %5274 = vst.msk [vmem:[%s172 + $0x54] sm:$0xf] %vm5252, %v5209
      %5275 = vst.msk [vmem:[%s172 + $0x58] sm:$0xf] %vm5252, %v5210
      %5276 = vst.msk [vmem:[%s172 + $0x5c] sm:$0xf] %vm5252, %v5211
      %5277 = vst.msk [vmem:[%s172 + $0x60] sm:$0xf] %vm5252, %v5212
      %5278 = vst.msk [vmem:[%s172 + $0x64] sm:$0xf] %vm5252, %v5213
      %5279 = vst.msk [vmem:[%s172 + $0x68] sm:$0xf] %vm5252, %v5214
      %5280 = vst.msk [vmem:[%s172 + $0x6c] sm:$0xf] %vm5252, %v5215
      %5281 = vst.msk [vmem:[%s172 + $0x70] sm:$0xf] %vm5252, %v5216
      %5282 = vst.msk [vmem:[%s172 + $0x74] sm:$0xf] %vm5252, %v5217
      %5283 = vst.msk [vmem:[%s172 + $0x78] sm:$0xf] %vm5252, %v5218
      %5284 = vst.msk [vmem:[%s172 + $0x7c] sm:$0xf] %vm5252, %v5219
      %s5285 = smul.u32 32, %s14
      %p5286 = scmp.lt.s32.totalorder %s5285, 63
      %s5287 = scalar_select %p5286, %s5285, 63
      %s5288 = smul.addr %s5287, 4
      %s5289 = scalar_lea.vmem %s3, %s5288
      // Predicated region
      $region33: #{tpu_custom_call.1} parent=31 // pred_check
        %p5290 = pneg %p100
      $region34: #{tpu_custom_call.1} parent=31 // pred_check_branch
        %5292 = sbr.rel (%p5290) target = $region36
      $region35: #{tpu_custom_call.1} parent=31 // pred_region
        %s5293 = smul.u32 32, %s14
      $region36: #{tpu_custom_call.1} parent=31 // pred_fallthru
        _
    $region32: #{tpu_custom_call.1} parent=5 // pred_fallthru
      _
    %p5294 = scmp.le.s32.totalorder 2, %s9
    // Predicated region
    $region37: #{tpu_custom_call.1} parent=5 // pred_check
      %p5295 = pneg %p5294
    $region38: #{tpu_custom_call.1} parent=5 // pred_check_branch
      %5297 = sbr.rel (%p5295) target = $region40
    $region39: #{tpu_custom_call.1} parent=5 // pred_region
      %s5298 = ssub.s32 %s9, 2
      // Predicated region
      $region41: #{tpu_custom_call.1} parent=39 // pred_check
        %p5299 = pneg %p106
      $region42: #{tpu_custom_call.1} parent=39 // pred_check_branch
        %5301 = sbr.rel (%p5299) target = $region44
      $region43: #{tpu_custom_call.1} parent=39 // pred_region
        %s5302 = smul.u32 32, %s15
        %p5303 = scmp.lt.s32.totalorder %s5302, 63
        %s5304 = scalar_select %p5303, %s5302, 63
        %s5305 = smul.addr %s5304, 4
        %s5306 = scalar_lea.vmem %s3, %s5305
      $region44: #{tpu_custom_call.1} parent=39 // pred_fallthru
        _
    $region40: #{tpu_custom_call.1} parent=5 // pred_fallthru
      _
  $region6: #{tpu_custom_call.1} parent=0 // loop_footer
    %s13 = sadd.s32 1, %s9
  $region7: #{tpu_custom_call.1} parent=0 // loop_footer_branch
    %8 = sbr.rel target = $region3
  $region8: #{tpu_custom_call.1} parent=0 // loop_exit
    _

</llo_original>
